<compile_context>
chip_gen: v7x
topology: tpu7x:2x2x1
jax: 0.10.0
libtpu: 0.0.40
codegen_flags: <defaults>
</compile_context>

<pallas_src>
import jax
import jax.numpy as jnp
from jax.experimental import pallas as pl
from jax.experimental.pallas import tpu as pltpu


# ----------------------------------------------------------------------------- kernel helpers
def _ho_transform(h_bf16, w_ref, b, s, o):
    """HighOrderAggregator._f_feat_trans with act='relu', bias='norm'.

    bf16 matmul operands / f32 MXU accumulation; layernorm math in f32.
    One-pass variance (E[f^2] - mean^2) -> single pair of cross-lane reductions.
    """
    f = jnp.dot(h_bf16, w_ref[...], preferred_element_type=jnp.float32) + b
    f = jnp.maximum(f, 0.0)
    inv_d = 1.0 / f.shape[1]
    mean = jnp.sum(f, axis=1, keepdims=True) * inv_d
    meansq = jnp.sum(f * f, axis=1, keepdims=True) * inv_d
    var = jnp.maximum(meansq - mean * mean, 0.0) + 1e-9
    return (f - mean) * s * jax.lax.rsqrt(var) + o


def _gnn_layer_kernel(adj_ref, xk_ref, xi_ref, w0_ref, w1_ref, vec_ref,
                      out_ref, acc_ref):
    """One HighOrderAggregator layer (order=1, aggr='concat'): out = [T0(x) | T1(A @ x)]."""
    k = pl.program_id(1)

    @pl.when(k == 0)
    def _():
        acc_ref[...] = jnp.zeros_like(acc_ref)

    # Accumulate the (TILE_M, TILE_K) x (TILE_K, F) partial product of A @ x in f32.
    acc_ref[...] += jnp.dot(adj_ref[...], xk_ref[...],
                            preferred_element_type=jnp.float32)

    @pl.when(k == pl.num_programs(1) - 1)
    def _():
        vec = vec_ref[...]                                # (8, D): b0,s0,o0,b1,s1,o1,pad,pad
        z0 = _ho_transform(xi_ref[...], w0_ref, vec[0:1], vec[1:2], vec[2:3])
        z1 = _ho_transform(acc_ref[...].astype(jnp.bfloat16),
                           w1_ref, vec[3:4], vec[4:5], vec[5:6])
        out_ref[...] = jnp.concatenate([z0, z1], axis=1).astype(out_ref.dtype)


def _gnn_final_kernel(adj_ref, xk_ref, xi_ref, w0_ref, w1_ref, vec_ref,
                      wc_ref, bc_ref, out_ref, acc_ref):
    """Last GNN layer fused with F.normalize(p=2, dim=1) + order-0 classifier."""
    k = pl.program_id(1)

    @pl.when(k == 0)
    def _():
        acc_ref[...] = jnp.zeros_like(acc_ref)

    acc_ref[...] += jnp.dot(adj_ref[...], xk_ref[...],
                            preferred_element_type=jnp.float32)

    @pl.when(k == pl.num_programs(1) - 1)
    def _():
        vec = vec_ref[...]
        z0 = _ho_transform(xi_ref[...], w0_ref, vec[0:1], vec[1:2], vec[2:3])
        z1 = _ho_transform(acc_ref[...].astype(jnp.bfloat16),
                           w1_ref, vec[3:4], vec[4:5], vec[5:6])
        emb = jnp.concatenate([z0, z1], axis=1)                              # f32
        # F.normalize: multiply by rsqrt (EUP slot) instead of sqrt + divide.
        inv = jax.lax.rsqrt(
            jnp.maximum(jnp.sum(emb * emb, axis=1, keepdims=True), 1e-24))
        emb = (emb * inv).astype(jnp.bfloat16)
        # classifier: HighOrderAggregator(order=0, act='I', bias='bias'), lane-dense output.
        out_ref[...] = (jnp.dot(emb, wc_ref[...], preferred_element_type=jnp.float32)
                        + bc_ref[...])


# ----------------------------------------------------------------------------- layer launcher
def _layer_call(adj, x, w0, w1, vec, *, tile_m, tile_k, wc=None, bc=None):
    """Run one row-tiled GNN layer. If wc/bc given, fuse L2-normalize + classifier."""
    n, f = x.shape
    d = w0.shape[1]
    final = wc is not None
    assert n % tile_m == 0 and n % tile_k == 0

    in_specs = [
        pl.BlockSpec((tile_m, tile_k), lambda i, k: (i, k)),   # adj row/col tile (streamed)
        pl.BlockSpec((tile_k, f), lambda i, k: (k, 0)),        # x rows for A @ x (streamed)
        pl.BlockSpec((tile_m, f), lambda i, k: (i, 0)),        # x rows for self-transform (resident)
        pl.BlockSpec((f, d), lambda i, k: (0, 0)),             # W order-0
        pl.BlockSpec((f, d), lambda i, k: (0, 0)),             # W order-1
        pl.BlockSpec(vec.shape, lambda i, k: (0, 0)),          # packed bias/scale/offset
    ]
    args = [adj, x, x, w0, w1, vec]

    if final:
        kernel = _gnn_final_kernel
        out_w, out_dtype = wc.shape[1], jnp.float32
        in_specs += [pl.BlockSpec(wc.shape, lambda i, k: (0, 0)),
                     pl.BlockSpec(bc.shape, lambda i, k: (0, 0))]
        args += [wc, bc]
    else:
        kernel = _gnn_layer_kernel
        out_w, out_dtype = 2 * d, jnp.bfloat16

    # Advisory cost estimate for the XLA scheduler.
    flops = 2 * n * n * f + 4 * n * f * d + (2 * n * (2 * d) * out_w if final else 0)
    bytes_accessed = (adj.size * 2 + 2 * x.size * 2 + (w0.size + w1.size) * 2
                      + vec.size * 4 + n * out_w * (4 if final else 2)
                      + ((wc.size * 2 + bc.size * 4) if final else 0))
    cost = pl.CostEstimate(flops=int(flops),
                           transcendentals=int((3 if final else 2) * n),
                           bytes_accessed=int(bytes_accessed))

    # VMEM budget: double-buffered streamed tiles + resident weights + f32 accumulator.
    # Cap at 48 MiB so the same tiling compiles on v7x (64 MiB physical per TC).
    out_elt = 4 if final else 2
    vmem_need = (2 * (tile_m * tile_k * 2 + tile_k * f * 2 + tile_m * f * 2
                      + (w0.size + w1.size) * 2 + vec.size * 4
                      + tile_m * out_w * out_elt
                      + ((wc.size * 2 + bc.size * 4) if final else 0))
                 + tile_m * f * 4)
    vmem_limit = int(min(48 << 20, max(2 * vmem_need, 16 << 20)))

    return pl.pallas_call(
        kernel,
        out_shape=jax.ShapeDtypeStruct((n, out_w), out_dtype),
        grid_spec=pltpu.PrefetchScalarGridSpec(
            num_scalar_prefetch=0,
            grid=(n // tile_m, n // tile_k),
            in_specs=in_specs,
            out_specs=pl.BlockSpec((tile_m, out_w), lambda i, k: (i, 0)),
            scratch_shapes=[pltpu.VMEM((tile_m, f), jnp.float32)],
        ),
        compiler_params=pltpu.CompilerParams(
            dimension_semantics=("parallel", "arbitrary"),
            vmem_limit_bytes=vmem_limit,
        ),
        cost_estimate=cost,
    )(*args)


# ----------------------------------------------------------------------------- forward wrapper
def ungraphsaint_forward(node_subgraph, adj_subgraph, feat_full, params):
    # Row gather of the subgraph features + bf16 cast for the MXU (glue, stays in plain JAX).
    x0 = feat_full[node_subgraph].astype(jnp.bfloat16)
    adj = adj_subgraph.astype(jnp.bfloat16)
    n = x0.shape[0]
    d_hid = params["w00"].shape[1]
    out_dim = params["wc"].shape[1]

    # 256-wide tiles feed v6e/v7x's 256x256 MXUs; fall back to 128 (v5e-matched) / full.
    def pick_tile(m):
        for t in (256, 128):
            if m % t == 0:
                return t
        return m
    tile = pick_tile(n)

    def bf16(a):
        return a.astype(jnp.bfloat16)

    def pack_vec(*rows):                                   # (1, D) x 6 -> (8, D) single DMA
        v = jnp.concatenate(rows, axis=0).astype(jnp.float32)
        return jnp.pad(v, ((0, 8 - v.shape[0]), (0, 0)))

    vec0 = pack_vec(params["b00"], params["s00"], params["o00"],
                    params["b01"], params["s01"], params["o01"])
    vec1 = pack_vec(params["b10"], params["s10"], params["o10"],
                    params["b11"], params["s11"], params["o11"])

    # Lane-dense classifier: pad out_dim up to a multiple of 128, slice back afterwards.
    out_pad = ((out_dim + 127) // 128) * 128
    wc_pad = jnp.zeros((2 * d_hid, out_pad), jnp.bfloat16).at[:, :out_dim].set(
        bf16(params["wc"]))
    bc_pad = jnp.zeros((1, out_pad), jnp.float32).at[:, :out_dim].set(params["bc"])

    # layer 0: HighOrderAggregator(order=1, relu, norm, concat)
    x1 = _layer_call(adj, x0, bf16(params["w00"]), bf16(params["w01"]), vec0,
                     tile_m=tile, tile_k=tile)
    # layer 1 + F.normalize + classifier, fused.
    pred_pad = _layer_call(adj, x1, bf16(params["w10"]), bf16(params["w11"]), vec1,
                           tile_m=tile, tile_k=tile, wc=wc_pad, bc=bc_pad)
    return pred_pad[:, :out_dim]


# ----------------------------------------------------------------------------- pure-JAX reference
def ungraphsaint_reference(node_subgraph, adj_subgraph, feat_full, params):
    """Pure-JAX f32 reference (torch-equivalent math) for correctness checking."""
    x = feat_full[node_subgraph]
    adj = adj_subgraph

    def transform(h, w, b, s, o):
        f = jnp.maximum(jnp.dot(h, w, preferred_element_type=jnp.float32) + b, 0.0)
        mean = jnp.mean(f, axis=1, keepdims=True)
        var = jnp.mean((f - mean) ** 2, axis=1, keepdims=True) + 1e-9   # unbiased=False
        return (f - mean) * s * jax.lax.rsqrt(var) + o

    # layer 0
    h1 = jnp.dot(adj, x, preferred_element_type=jnp.float32)
    x = jnp.concatenate(
        [transform(x,  params["w00"], params["b00"], params["s00"], params["o00"]),
         transform(h1, params["w01"], params["b01"], params["s01"], params["o01"])], axis=1)
    # layer 1
    h1 = jnp.dot(adj, x, preferred_element_type=jnp.float32)
    emb = jnp.concatenate(
        [transform(x,  params["w10"], params["b10"], params["s10"], params["o10"]),
         transform(h1, params["w11"], params["b11"], params["s11"], params["o11"])], axis=1)
    nrm = jnp.sqrt(jnp.sum(emb * emb, axis=1, keepdims=True))
    emb = emb / jnp.maximum(nrm, 1e-12)
    return jnp.dot(emb, params["wc"], preferred_element_type=jnp.float32) + params["bc"]


# ----------------------------------------------------------------------------- parameters
def make_params(key, f_in, d_hid, d_out):
    """Deterministic synthetic parameters matching the module's shapes.

    dims_feat = [f_in, 2*d_hid, 2*d_hid]  (concat aggr, order=1)
    dims_weight = [(f_in, d_hid), (2*d_hid, d_hid)], classifier (2*d_hid, d_out)
    """
    ks = iter(jax.random.split(key, 32))

    def lin(din, dout):
        bound = (6.0 / (din + dout)) ** 0.5          # xavier_uniform-ish
        return jax.random.uniform(next(ks), (din, dout), jnp.float32, -bound, bound)

    def vec(dout, base=0.0):
        return base + 0.01 * jax.random.normal(next(ks), (1, dout), jnp.float32)

    p = {}
    # conv layer 0 (two "orders": o=0 and o=1)
    p["w00"], p["b00"], p["s00"], p["o00"] = lin(f_in, d_hid), vec(d_hid), vec(d_hid, 1.0), vec(d_hid)
    p["w01"], p["b01"], p["s01"], p["o01"] = lin(f_in, d_hid), vec(d_hid), vec(d_hid, 1.0), vec(d_hid)
    # conv layer 1 (input is the concat of the two order-outputs of layer 0)
    p["w10"], p["b10"], p["s10"], p["o10"] = lin(2 * d_hid, d_hid), vec(d_hid), vec(d_hid, 1.0), vec(d_hid)
    p["w11"], p["b11"], p["s11"], p["o11"] = lin(2 * d_hid, d_hid), vec(d_hid), vec(d_hid, 1.0), vec(d_hid)
    # classifier
    p["wc"], p["bc"] = lin(2 * d_hid, d_out), vec(d_out)
    return p


if __name__ == "__main__":
    key = jax.random.PRNGKey(0)
    N_FULL, N_SUB = 1024, 512
    F_IN, D_HID, D_OUT = 128, 128, 64

    k_feat, k_perm, k_adj, k_par = jax.random.split(key, 4)

    feat_full = jax.random.normal(k_feat, (N_FULL, F_IN), jnp.float32)
    node_subgraph = jax.random.permutation(k_perm, N_FULL)[:N_SUB]

    # dense row-normalized symmetric adjacency with self-loops
    a = (jax.random.uniform(k_adj, (N_SUB, N_SUB)) < 0.05).astype(jnp.float32)
    a = jnp.minimum(a + a.T, 1.0) + jnp.eye(N_SUB, dtype=jnp.float32)
    adj_subgraph = a / jnp.sum(a, axis=1, keepdims=True)

    params = make_params(k_par, F_IN, D_HID, D_OUT)

    pred = ungraphsaint_forward(node_subgraph, adj_subgraph, feat_full, params)
    pred = jax.block_until_ready(pred)

    ref = jax.block_until_ready(
        ungraphsaint_reference(node_subgraph, adj_subgraph, feat_full, params))

    assert pred.shape == (N_SUB, D_OUT), pred.shape
    assert bool(jnp.all(jnp.isfinite(pred)))
    assert bool(jnp.allclose(pred, ref, rtol=5e-2, atol=5e-2)), \
        float(jnp.max(jnp.abs(pred - ref)))

    print("KERNEL_OK")
</pallas_src>

<mosaic_0001>
module attributes {stable_mosaic.version = 11 : i64} {
  func.func @_gnn_layer_kernel(%arg0: i32, %arg1: i32, %arg2: memref<256x256xbf16, #tpu.memory_space<vmem>>, %arg3: memref<256x128xbf16, #tpu.memory_space<vmem>>, %arg4: memref<256x128xbf16, #tpu.memory_space<vmem>>, %arg5: memref<128x128xbf16, #tpu.memory_space<vmem>>, %arg6: memref<128x128xbf16, #tpu.memory_space<vmem>>, %arg7: memref<8x128xf32, #tpu.memory_space<vmem>>, %arg8: memref<256x256xbf16, #tpu.memory_space<vmem>>, %arg9: memref<256x128xf32, #tpu.memory_space<vmem>>) attributes {dimension_semantics = [#tpu.dimension_semantics<parallel>, #tpu.dimension_semantics<arbitrary>], iteration_bounds = array<i64: 2, 2>, scalar_prefetch = 0 : i64, scratch_operands = 1 : i64, tpu.core_type = #tpu.core_type<tc>, window_params = [{transform_indices = @transform_0, window_bounds = array<i64: 256, 256>}, {transform_indices = @transform_1, window_bounds = array<i64: 256, 128>}, {transform_indices = @transform_2, window_bounds = array<i64: 256, 128>}, {pipeline_mode = #tpu.pipeline_mode<synchronous>, transform_indices = @transform_3, window_bounds = array<i64: 128, 128>}, {pipeline_mode = #tpu.pipeline_mode<synchronous>, transform_indices = @transform_4, window_bounds = array<i64: 128, 128>}, {pipeline_mode = #tpu.pipeline_mode<synchronous>, transform_indices = @transform_5, window_bounds = array<i64: 8, 128>}, {transform_indices = @transform_6, window_bounds = array<i64: 256, 256>}]} {
    %c0_i32 = arith.constant 0 : i32
    %0 = arith.cmpi eq, %arg1, %c0_i32 : i32
    %1 = arith.extui %0 : i1 to i32
    %c0_i32_0 = arith.constant 0 : i32
    %2 = arith.cmpi ne, %1, %c0_i32_0 : i32
    scf.if %2 {
      %cst_9 = arith.constant 0.000000e+00 : f32
      %12 = vector.broadcast %cst_9 : f32 to vector<256x128xf32>
      %c0_10 = arith.constant 0 : index
      %c0_11 = arith.constant 0 : index
      %13 = vector.load %arg9[%c0_10, %c0_11] : memref<256x128xf32, #tpu.memory_space<vmem>>, vector<256x128xf32>
      tpu.vector_store %arg9[%c0_10, %c0_11], %12 {strides = array<i32>} : memref<256x128xf32, #tpu.memory_space<vmem>>, vector<256x128xf32>,
    } else {
    }
    %c0 = arith.constant 0 : index
    %c0_1 = arith.constant 0 : index
    %3 = vector.load %arg9[%c0, %c0_1] : memref<256x128xf32, #tpu.memory_space<vmem>>, vector<256x128xf32>
    %c0_2 = arith.constant 0 : index
    %c0_3 = arith.constant 0 : index
    %4 = vector.load %arg2[%c0_2, %c0_3] : memref<256x256xbf16, #tpu.memory_space<vmem>>, vector<256x256xbf16>
    %c0_4 = arith.constant 0 : index
    %c0_5 = arith.constant 0 : index
    %5 = vector.load %arg3[%c0_4, %c0_5] : memref<256x128xbf16, #tpu.memory_space<vmem>>, vector<256x128xbf16>
    %cst = arith.constant dense<0.000000e+00> : vector<256x128xf32>
    %6 = tpu.matmul %4, %5, %cst {dimension_numbers = #tpu.dot_dimension_numbers<[1], [0], [0], [1], [0, 0, 1, 1], [], []>} : vector<256x256xbf16>, vector<256x128xbf16>, vector<256x128xf32> -> vector<256x128xf32>
    %7 = arith.addf %3, %6 : vector<256x128xf32>
    %c0_6 = arith.constant 0 : index
    %c0_7 = arith.constant 0 : index
    %8 = vector.load %arg9[%c0_6, %c0_7] : memref<256x128xf32, #tpu.memory_space<vmem>>, vector<256x128xf32>
    tpu.vector_store %arg9[%c0_6, %c0_7], %7 {strides = array<i32>} : memref<256x128xf32, #tpu.memory_space<vmem>>, vector<256x128xf32>,
    %c1_i32 = arith.constant 1 : i32
    %9 = arith.cmpi eq, %arg1, %c1_i32 : i32
    %10 = arith.extui %9 : i1 to i32
    %c0_i32_8 = arith.constant 0 : i32
    %11 = arith.cmpi ne, %10, %c0_i32_8 : i32
    scf.if %11 {
      %c0_9 = arith.constant 0 : index
      %c0_10 = arith.constant 0 : index
      %12 = vector.load %arg7[%c0_9, %c0_10] : memref<8x128xf32, #tpu.memory_space<vmem>>, vector<8x128xf32>
      %c0_11 = arith.constant 0 : index
      %c0_12 = arith.constant 0 : index
      %13 = vector.load %arg4[%c0_11, %c0_12] : memref<256x128xbf16, #tpu.memory_space<vmem>>, vector<256x128xbf16>
      %14 = vector.extract_strided_slice %12 {offsets = [0, 0], sizes = [1, 128], strides = [1, 1]} : vector<8x128xf32> to vector<1x128xf32>
      %15 = vector.extract_strided_slice %12 {offsets = [1, 0], sizes = [1, 128], strides = [1, 1]} : vector<8x128xf32> to vector<1x128xf32>
      %16 = vector.extract_strided_slice %12 {offsets = [2, 0], sizes = [1, 128], strides = [1, 1]} : vector<8x128xf32> to vector<1x128xf32>
      %c0_13 = arith.constant 0 : index
      %c0_14 = arith.constant 0 : index
      %17 = vector.load %arg5[%c0_13, %c0_14] : memref<128x128xbf16, #tpu.memory_space<vmem>>, vector<128x128xbf16>
      %cst_15 = arith.constant dense<0.000000e+00> : vector<256x128xf32>
      %18 = tpu.matmul %13, %17, %cst_15 {dimension_numbers = #tpu.dot_dimension_numbers<[1], [0], [0], [1], [0, 0, 1, 1], [], []>} : vector<256x128xbf16>, vector<128x128xbf16>, vector<256x128xf32> -> vector<256x128xf32>
      %19 = vector.broadcast %14 : vector<1x128xf32> to vector<256x128xf32>
      %20 = arith.addf %18, %19 : vector<256x128xf32>
      %cst_16 = arith.constant 0.000000e+00 : f32
      %21 = vector.broadcast %cst_16 : f32 to vector<256x128xf32>
      %22 = arith.maximumf %20, %21 : vector<256x128xf32>
      %cst_17 = arith.constant dense<0.000000e+00> : vector<256xf32>
      %23 = vector.multi_reduction <add>, %22, %cst_17 [1] : vector<256x128xf32> to vector<256xf32>
      %24 = vector.shape_cast %23 : vector<256xf32> to vector<256x1xf32>
      %cst_18 = arith.constant 7.812500e-03 : f32
      %25 = vector.broadcast %cst_18 : f32 to vector<256x1xf32>
      %26 = arith.mulf %24, %25 : vector<256x1xf32>
      %27 = arith.mulf %22, %22 : vector<256x128xf32>
      %cst_19 = arith.constant dense<0.000000e+00> : vector<256xf32>
      %28 = vector.multi_reduction <add>, %27, %cst_19 [1] : vector<256x128xf32> to vector<256xf32>
      %29 = vector.shape_cast %28 : vector<256xf32> to vector<256x1xf32>
      %cst_20 = arith.constant 7.812500e-03 : f32
      %30 = vector.broadcast %cst_20 : f32 to vector<256x1xf32>
      %31 = arith.mulf %29, %30 : vector<256x1xf32>
      %32 = arith.mulf %26, %26 : vector<256x1xf32>
      %33 = arith.subf %31, %32 : vector<256x1xf32>
      %cst_21 = arith.constant 0.000000e+00 : f32
      %34 = vector.broadcast %cst_21 : f32 to vector<256x1xf32>
      %35 = arith.maximumf %33, %34 : vector<256x1xf32>
      %cst_22 = arith.constant 9.99999971E-10 : f32
      %36 = vector.broadcast %cst_22 : f32 to vector<256x1xf32>
      %37 = arith.addf %35, %36 : vector<256x1xf32>
      %38 = vector.broadcast %26 : vector<256x1xf32> to vector<256x128xf32>
      %39 = arith.subf %22, %38 : vector<256x128xf32>
      %40 = vector.broadcast %15 : vector<1x128xf32> to vector<256x128xf32>
      %41 = arith.mulf %39, %40 : vector<256x128xf32>
      %42 = math.rsqrt %37 : vector<256x1xf32>
      %43 = vector.broadcast %42 : vector<256x1xf32> to vector<256x128xf32>
      %44 = arith.mulf %41, %43 : vector<256x128xf32>
      %45 = vector.broadcast %16 : vector<1x128xf32> to vector<256x128xf32>
      %46 = arith.addf %44, %45 : vector<256x128xf32>
      %c0_23 = arith.constant 0 : index
      %c0_24 = arith.constant 0 : index
      %47 = vector.load %arg9[%c0_23, %c0_24] : memref<256x128xf32, #tpu.memory_space<vmem>>, vector<256x128xf32>
      %48 = arith.truncf %47 : vector<256x128xf32> to vector<256x128xbf16>
      %49 = vector.extract_strided_slice %12 {offsets = [3, 0], sizes = [1, 128], strides = [1, 1]} : vector<8x128xf32> to vector<1x128xf32>
      %50 = vector.extract_strided_slice %12 {offsets = [4, 0], sizes = [1, 128], strides = [1, 1]} : vector<8x128xf32> to vector<1x128xf32>
      %51 = vector.extract_strided_slice %12 {offsets = [5, 0], sizes = [1, 128], strides = [1, 1]} : vector<8x128xf32> to vector<1x128xf32>
      %c0_25 = arith.constant 0 : index
      %c0_26 = arith.constant 0 : index
      %52 = vector.load %arg6[%c0_25, %c0_26] : memref<128x128xbf16, #tpu.memory_space<vmem>>, vector<128x128xbf16>
      %cst_27 = arith.constant dense<0.000000e+00> : vector<256x128xf32>
      %53 = tpu.matmul %48, %52, %cst_27 {dimension_numbers = #tpu.dot_dimension_numbers<[1], [0], [0], [1], [0, 0, 1, 1], [], []>} : vector<256x128xbf16>, vector<128x128xbf16>, vector<256x128xf32> -> vector<256x128xf32>
      %54 = vector.broadcast %49 : vector<1x128xf32> to vector<256x128xf32>
      %55 = arith.addf %53, %54 : vector<256x128xf32>
      %cst_28 = arith.constant 0.000000e+00 : f32
      %56 = vector.broadcast %cst_28 : f32 to vector<256x128xf32>
      %57 = arith.maximumf %55, %56 : vector<256x128xf32>
      %cst_29 = arith.constant dense<0.000000e+00> : vector<256xf32>
      %58 = vector.multi_reduction <add>, %57, %cst_29 [1] : vector<256x128xf32> to vector<256xf32>
      %59 = vector.shape_cast %58 : vector<256xf32> to vector<256x1xf32>
      %cst_30 = arith.constant 7.812500e-03 : f32
      %60 = vector.broadcast %cst_30 : f32 to vector<256x1xf32>
      %61 = arith.mulf %59, %60 : vector<256x1xf32>
      %62 = arith.mulf %57, %57 : vector<256x128xf32>
      %cst_31 = arith.constant dense<0.000000e+00> : vector<256xf32>
      %63 = vector.multi_reduction <add>, %62, %cst_31 [1] : vector<256x128xf32> to vector<256xf32>
      %64 = vector.shape_cast %63 : vector<256xf32> to vector<256x1xf32>
      %cst_32 = arith.constant 7.812500e-03 : f32
      %65 = vector.broadcast %cst_32 : f32 to vector<256x1xf32>
      %66 = arith.mulf %64, %65 : vector<256x1xf32>
      %67 = arith.mulf %61, %61 : vector<256x1xf32>
      %68 = arith.subf %66, %67 : vector<256x1xf32>
      %cst_33 = arith.constant 0.000000e+00 : f32
      %69 = vector.broadcast %cst_33 : f32 to vector<256x1xf32>
      %70 = arith.maximumf %68, %69 : vector<256x1xf32>
      %cst_34 = arith.constant 9.99999971E-10 : f32
      %71 = vector.broadcast %cst_34 : f32 to vector<256x1xf32>
      %72 = arith.addf %70, %71 : vector<256x1xf32>
      %73 = vector.broadcast %61 : vector<256x1xf32> to vector<256x128xf32>
      %74 = arith.subf %57, %73 : vector<256x128xf32>
      %75 = vector.broadcast %50 : vector<1x128xf32> to vector<256x128xf32>
      %76 = arith.mulf %74, %75 : vector<256x128xf32>
      %77 = math.rsqrt %72 : vector<256x1xf32>
      %78 = vector.broadcast %77 : vector<256x1xf32> to vector<256x128xf32>
      %79 = arith.mulf %76, %78 : vector<256x128xf32>
      %80 = vector.broadcast %51 : vector<1x128xf32> to vector<256x128xf32>
      %81 = arith.addf %79, %80 : vector<256x128xf32>
      %82 = tpu.concatenate %46, %81 in 1 : vector<256x128xf32>, vector<256x128xf32> -> vector<256x256xf32>
      %83 = arith.truncf %82 : vector<256x256xf32> to vector<256x256xbf16>
      %c0_35 = arith.constant 0 : index
      %c0_36 = arith.constant 0 : index
      %84 = vector.load %arg8[%c0_35, %c0_36] : memref<256x256xbf16, #tpu.memory_space<vmem>>, vector<256x256xbf16>
      tpu.vector_store %arg8[%c0_35, %c0_36], %83 {strides = array<i32>} : memref<256x256xbf16, #tpu.memory_space<vmem>>, vector<256x256xbf16>,
    } else {
    }
    return
  }
  func.func @transform_0(%arg0: i32, %arg1: i32) -> (i32, i32) {
    %c0_i32 = arith.constant 0 : i32
    return %arg0, %arg1 : i32, i32
  }
  func.func @transform_1(%arg0: i32, %arg1: i32) -> (i32, i32) {
    %c0_i32 = arith.constant 0 : i32
    %c0_i32_0 = arith.constant 0 : i32
    return %arg1, %c0_i32 : i32, i32
  }
  func.func @transform_2(%arg0: i32, %arg1: i32) -> (i32, i32) {
    %c0_i32 = arith.constant 0 : i32
    %c0_i32_0 = arith.constant 0 : i32
    return %arg0, %c0_i32 : i32, i32
  }
  func.func @transform_3(%arg0: i32, %arg1: i32) -> (i32, i32) {
    %c0_i32 = arith.constant 0 : i32
    %c0_i32_0 = arith.constant 0 : i32
    %c0_i32_1 = arith.constant 0 : i32
    return %c0_i32, %c0_i32_0 : i32, i32
  }
  func.func @transform_4(%arg0: i32, %arg1: i32) -> (i32, i32) {
    %c0_i32 = arith.constant 0 : i32
    %c0_i32_0 = arith.constant 0 : i32
    %c0_i32_1 = arith.constant 0 : i32
    return %c0_i32, %c0_i32_0 : i32, i32
  }
  func.func @transform_5(%arg0: i32, %arg1: i32) -> (i32, i32) {
    %c0_i32 = arith.constant 0 : i32
    %c0_i32_0 = arith.constant 0 : i32
    %c0_i32_1 = arith.constant 0 : i32
    return %c0_i32, %c0_i32_0 : i32, i32
  }
  func.func @transform_6(%arg0: i32, %arg1: i32) -> (i32, i32) {
    %c0_i32 = arith.constant 0 : i32
    %c0_i32_0 = arith.constant 0 : i32
    return %arg0, %c0_i32 : i32, i32
  }
}

</mosaic_0001>

<llo_original>
// kernel: tpu_custom_call.1
$region0: #{tpu_custom_call.1}
  #allocation0 [shape = 'u32[]', space=smem, size = 0x4, offset = 0x4, fixed_abs, tag = 'smem constant byte address 0x4 - core index']
  #allocation1 [shape = 'u32[144,128]{1,0:T(1,128)}', space=vmem, size = 0x12000, scoped, tag = 'internal scratch']
  #allocation2 [shape = 'f32[256,128]{1,0:T(8,128)}', space=vmem, size = 0x20000, scoped, tag = 'scratch operand']
  %s0 = inlined_call_operand.hbm [shape: bf16[512,512], index: 0, kind: input, shape index: {}]
  %s1 = inlined_call_operand.hbm [shape: bf16[512,128], index: 1, kind: input, shape index: {}]
  %s2 = inlined_call_operand.hbm [shape: bf16[512,128], index: 2, kind: input, shape index: {}]
  %s3 = inlined_call_operand.hbm [shape: bf16[128,128], index: 3, kind: input, shape index: {}]
  %s4 = inlined_call_operand.hbm [shape: bf16[128,128], index: 4, kind: input, shape index: {}]
  %s5 = inlined_call_operand.vmem [shape: f32[8,128], index: 5, kind: input, shape index: {}]
  %s6 = inlined_call_operand.hbm [shape: bf16[512,256], index: 6, kind: output, shape index: {}]
  %s7 = sld [smem:[#allocation0]]
  $region85: #{tpu_custom_call.1} parent=0
    _
  %s9 = ssub.s32 1, %s7
  %s10 = scalar_select 0, %s9, %s7
  $region1: #{tpu_custom_call.1} parent=0
    #allocation3 [shape = 'u8[262144]{0}', space=vmem, size = 0x40000, scoped, tag = 'input window, operand 0']
    #allocation4 [shape = 's32[2]{0}', space=sflag, size = 0x8, scoped, tag = 'scoped memory for tpu_custom_call.1']
    #allocation5 [shape = 's32[2]{0}', space=sflag, size = 0x8, scoped, tag = 'scoped memory for tpu_custom_call.1']
    #allocation6 [shape = 'u8[131072]{0}', space=vmem, size = 0x20000, scoped, tag = 'input window, operand 1']
    #allocation7 [shape = 's32[2]{0}', space=sflag, size = 0x8, scoped, tag = 'scoped memory for tpu_custom_call.1']
    #allocation8 [shape = 'u8[131072]{0}', space=vmem, size = 0x20000, scoped, tag = 'input window, operand 2']
    #allocation9 [shape = 'u8[32768]{0}', space=vmem, size = 0x8000, scoped, tag = 'input window, operand 3, single buffered']
    #allocation10 [shape = 's32[1]{0}', space=sflag, size = 0x4, scoped, tag = 'scoped memory for tpu_custom_call.1']
    #allocation11 [shape = 'u8[32768]{0}', space=vmem, size = 0x8000, scoped, tag = 'input window, operand 4, single buffered']
    #allocation12 [shape = 'u8[262144]{0}', space=vmem, size = 0x40000, scoped, tag = 'output window, operand 0']
    %11 = vsyncpa [#allocation4], 0
    %s12 = scalar_lea.sflag [#allocation4], 1
    %13 = vsyncpa %s12, 0
    %14 = vsyncpa [#allocation7], 0
    %s15 = scalar_lea.sflag [#allocation7], 1
    %16 = vsyncpa %s15, 0
    %17 = vsyncpa [#allocation10], 0
    %18 = vsyncpa [#allocation5], 0
    %s19 = scalar_lea.sflag [#allocation5], 1
    %20 = vsyncpa %s19, 0
    loop: start=0, step=1, limit=6
    $region2: #{tpu_custom_call.1} parent=1 // loop_pre_header
      _
    $region3: #{tpu_custom_call.1} parent=1 // loop_header
      %s22 = sphi 0, %s26
      %p23 = scmp.ge.s32.totalorder %s22, 6
      %s29 = sphi 0, %s41
      %s30 = sphi 0, %s37
      %s31 = sphi 0, %s29
      %s32 = sphi 0, %s30
      %s33 = sphi 0, %s31
      %s34 = sphi 0, %s32
      %s46 = sphi 0, %s48
      %s49 = sphi 0, %s46
      %s50 = sphi 0, %s49
      %s66 = sphi 0, %s50
      %s72 = sphi 0, %s74
      %s75 = sphi 0, %s72
      %s76 = sphi 0, %s75
      %s92 = sphi 0, %s76
      %s98 = sphi 0, %s100
      %s101 = sphi 0, %s98
      %s102 = sphi 0, %s101
      %s118 = sphi 0, %s102
      %s122 = sphi 0, %s122
      %s124 = sphi 0, %s122
      %s125 = sphi 0, %s124
      %s139 = sphi 0, %s125
      %s143 = sphi 0, %s143
      %s145 = sphi 0, %s143
      %s146 = sphi 0, %s145
      %s160 = sphi 0, %s146
      %s164 = sphi 0, %s164
      %s166 = sphi 0, %s164
      %s167 = sphi 0, %s166
      %s181 = sphi 0, %s167
      %s187 = sphi 0, %s189
      %s190 = sphi 0, %s187
      %s191 = sphi 0, %s190
      %s207 = sphi 0, %s191
    $region4: #{tpu_custom_call.1} parent=1 // loop_header_branch
      %25 = sbr.rel (%p23) target = $region8
    $region5: #{tpu_custom_call.1} parent=1 // loop_body
      %s27 = ssub.s32 %s22, 1
      %s28 = ssub.s32 %s22, 2
      %s35 = sadd.s32 1, %s30
      %p36 = scmp.ge.s32.totalorder %s35, 2
      %s37 = scalar_select %p36, 0, %s35
      %s38 = sadd.s32 1, %s29
      %s39 = scalar_select %p36, %s38, %s29
      %p40 = scmp.ge.s32.totalorder %s39, 2
      %s41 = scalar_select %p40, 0, %s39
      %s42 = ssub.s32 %s29, %s41
      %s43 = ssub.s32 %s30, %s37
      %s44 = sor.u32 %s42, %s43
      %p45 = scmp.eq.s32.totalorder %s44, 0
      %s47 = sadd.s32 %s46, 1
      %s48 = scalar_select %p45, %s46, %s47
      %p51 = pneg %p45
      %p52 = scmp.eq.s32.totalorder %s22, 3
      %p53 = por %p51, %p52
      %p54 = scmp.ne.s32.totalorder %s46, %s49
      %p55 = scmp.eq.s32.totalorder %s22, 0
      %p56 = por %p54, %p55
      %p57 = scmp.ne.s32.totalorder %s46, %s49
      %p58 = scmp.eq.s32.totalorder %s27, 3
      %p59 = por %p57, %p58
      %p60 = scmp.ne.s32.totalorder %s49, %s50
      %p61 = scmp.eq.s32.totalorder %s27, 0
      %p62 = por %p60, %p61
      %p63 = scmp.ne.s32.totalorder %s49, %s50
      %p64 = scmp.eq.s32.totalorder %s28, 3
      %p65 = por %p63, %p64
      %p67 = scmp.ne.s32.totalorder %s50, %s66
      %p68 = scmp.eq.s32.totalorder %s28, 0
      %p69 = por %p67, %p68
      %s70 = ssub.s32 %s30, %s37
      %p71 = scmp.eq.s32.totalorder %s70, 0
      %s73 = sadd.s32 %s72, 1
      %s74 = scalar_select %p71, %s72, %s73
      %p77 = pneg %p71
      %p78 = scmp.eq.s32.totalorder %s22, 3
      %p79 = por %p77, %p78
      %p80 = scmp.ne.s32.totalorder %s72, %s75
      %p81 = scmp.eq.s32.totalorder %s22, 0
      %p82 = por %p80, %p81
      %p83 = scmp.ne.s32.totalorder %s72, %s75
      %p84 = scmp.eq.s32.totalorder %s27, 3
      %p85 = por %p83, %p84
      %p86 = scmp.ne.s32.totalorder %s75, %s76
      %p87 = scmp.eq.s32.totalorder %s27, 0
      %p88 = por %p86, %p87
      %p89 = scmp.ne.s32.totalorder %s75, %s76
      %p90 = scmp.eq.s32.totalorder %s28, 3
      %p91 = por %p89, %p90
      %p93 = scmp.ne.s32.totalorder %s76, %s92
      %p94 = scmp.eq.s32.totalorder %s28, 0
      %p95 = por %p93, %p94
      %s96 = ssub.s32 %s29, %s41
      %p97 = scmp.eq.s32.totalorder %s96, 0
      %s99 = sadd.s32 %s98, 1
      %s100 = scalar_select %p97, %s98, %s99
      %p103 = pneg %p97
      %p104 = scmp.eq.s32.totalorder %s22, 3
      %p105 = por %p103, %p104
      %p106 = scmp.ne.s32.totalorder %s98, %s101
      %p107 = scmp.eq.s32.totalorder %s22, 0
      %p108 = por %p106, %p107
      %p109 = scmp.ne.s32.totalorder %s98, %s101
      %p110 = scmp.eq.s32.totalorder %s27, 3
      %p111 = por %p109, %p110
      %p112 = scmp.ne.s32.totalorder %s101, %s102
      %p113 = scmp.eq.s32.totalorder %s27, 0
      %p114 = por %p112, %p113
      %p115 = scmp.ne.s32.totalorder %s101, %s102
      %p116 = scmp.eq.s32.totalorder %s28, 3
      %p117 = por %p115, %p116
      %p119 = scmp.ne.s32.totalorder %s102, %s118
      %p120 = scmp.eq.s32.totalorder %s28, 0
      %p121 = por %p119, %p120
      %s123 = sadd.s32 %s122, 1
      %p126 = scmp.eq.s32.totalorder %s22, 3
      %p127 = scmp.ne.s32.totalorder %s122, %s124
      %p128 = scmp.eq.s32.totalorder %s22, 0
      %p129 = por %p127, %p128
      %p130 = scmp.ne.s32.totalorder %s122, %s124
      %p131 = scmp.eq.s32.totalorder %s27, 3
      %p132 = por %p130, %p131
      %p133 = scmp.ne.s32.totalorder %s124, %s125
      %p134 = scmp.eq.s32.totalorder %s27, 0
      %p135 = por %p133, %p134
      %p136 = scmp.ne.s32.totalorder %s124, %s125
      %p137 = scmp.eq.s32.totalorder %s28, 3
      %p138 = por %p136, %p137
      %p140 = scmp.ne.s32.totalorder %s125, %s139
      %p141 = scmp.eq.s32.totalorder %s28, 0
      %p142 = por %p140, %p141
      %s144 = sadd.s32 %s143, 1
      %p147 = scmp.eq.s32.totalorder %s22, 3
      %p148 = scmp.ne.s32.totalorder %s143, %s145
      %p149 = scmp.eq.s32.totalorder %s22, 0
      %p150 = por %p148, %p149
      %p151 = scmp.ne.s32.totalorder %s143, %s145
      %p152 = scmp.eq.s32.totalorder %s27, 3
      %p153 = por %p151, %p152
      %p154 = scmp.ne.s32.totalorder %s145, %s146
      %p155 = scmp.eq.s32.totalorder %s27, 0
      %p156 = por %p154, %p155
      %p157 = scmp.ne.s32.totalorder %s145, %s146
      %p158 = scmp.eq.s32.totalorder %s28, 3
      %p159 = por %p157, %p158
      %p161 = scmp.ne.s32.totalorder %s146, %s160
      %p162 = scmp.eq.s32.totalorder %s28, 0
      %p163 = por %p161, %p162
      %s165 = sadd.s32 %s164, 1
      %p168 = scmp.eq.s32.totalorder %s22, 3
      %p169 = scmp.ne.s32.totalorder %s164, %s166
      %p170 = scmp.eq.s32.totalorder %s22, 0
      %p171 = por %p169, %p170
      %p172 = scmp.ne.s32.totalorder %s164, %s166
      %p173 = scmp.eq.s32.totalorder %s27, 3
      %p174 = por %p172, %p173
      %p175 = scmp.ne.s32.totalorder %s166, %s167
      %p176 = scmp.eq.s32.totalorder %s27, 0
      %p177 = por %p175, %p176
      %p178 = scmp.ne.s32.totalorder %s166, %s167
      %p179 = scmp.eq.s32.totalorder %s28, 3
      %p180 = por %p178, %p179
      %p182 = scmp.ne.s32.totalorder %s167, %s181
      %p183 = scmp.eq.s32.totalorder %s28, 0
      %p184 = por %p182, %p183
      %s185 = ssub.s32 %s29, %s41
      %p186 = scmp.eq.s32.totalorder %s185, 0
      %s188 = sadd.s32 %s187, 1
      %s189 = scalar_select %p186, %s187, %s188
      %p192 = pneg %p186
      %p193 = scmp.eq.s32.totalorder %s22, 3
      %p194 = por %p192, %p193
      %p195 = scmp.ne.s32.totalorder %s187, %s190
      %p196 = scmp.eq.s32.totalorder %s22, 0
      %p197 = por %p195, %p196
      %p198 = scmp.ne.s32.totalorder %s187, %s190
      %p199 = scmp.eq.s32.totalorder %s27, 3
      %p200 = por %p198, %p199
      %p201 = scmp.ne.s32.totalorder %s190, %s191
      %p202 = scmp.eq.s32.totalorder %s27, 0
      %p203 = por %p201, %p202
      %p204 = scmp.ne.s32.totalorder %s190, %s191
      %p205 = scmp.eq.s32.totalorder %s28, 3
      %p206 = por %p204, %p205
      %p208 = scmp.ne.s32.totalorder %s191, %s207
      %p209 = scmp.eq.s32.totalorder %s28, 0
      %p210 = por %p208, %p209
      %p211 = scmp.le.s32.totalorder 1, %s22
      %p212 = scmp.lt.s32.totalorder %s22, 5
      %p213 = pnand %p211, %p212
      %p214 = pneg %p213
      // Predicated region
      $region9: #{tpu_custom_call.1} parent=5 // pred_check
        _
      $region10: #{tpu_custom_call.1} parent=5 // pred_check_branch
        %216 = sbr.rel (%p213) target = $region12
      $region11: #{tpu_custom_call.1} parent=5 // pred_region
        %s217 = ssub.s32 %s22, 1
        // Predicated region
        $region13: #{tpu_custom_call.1} parent=11 // pred_check
          %p218 = pneg %p135
        $region14: #{tpu_custom_call.1} parent=11 // pred_check_branch
          %220 = sbr.rel (%p218) target = $region16
        $region15: #{tpu_custom_call.1} parent=11 // pred_region
          %s222 = ssub.s32 1024, 1024
          %223 = vsyncadd [#allocation10], %s222
          %s224 = sshll.u32 [#allocation9], 4
          %s225 = int_to_ptr.vmem [resolvable:$true] %s224
          %230 = dma.hbm_to_vmem [thread:$0]  %s3, 1024, %s225, [#allocation10], 64, 64, 4
        $region16: #{tpu_custom_call.1} parent=11 // pred_fallthru
          _
        // Predicated region
        $region17: #{tpu_custom_call.1} parent=11 // pred_check
          %p231 = pneg %p156
        $region18: #{tpu_custom_call.1} parent=11 // pred_check_branch
          %233 = sbr.rel (%p231) target = $region20
        $region19: #{tpu_custom_call.1} parent=11 // pred_region
          %s235 = ssub.s32 1024, 1024
          %236 = vsyncadd [#allocation10], %s235
          %s237 = sshll.u32 [#allocation11], 4
          %s238 = int_to_ptr.vmem [resolvable:$true] %s237
          %243 = dma.hbm_to_vmem [thread:$0]  %s4, 1024, %s238, [#allocation10], 64, 64, 4
        $region20: #{tpu_custom_call.1} parent=11 // pred_fallthru
          _
        // Predicated region
        $region21: #{tpu_custom_call.1} parent=11 // pred_check
          %p244 = pneg %p177
        $region22: #{tpu_custom_call.1} parent=11 // pred_check_branch
          %246 = sbr.rel (%p244) target = $region24
        $region23: #{tpu_custom_call.1} parent=11 // pred_region
          _
        $region24: #{tpu_custom_call.1} parent=11 // pred_fallthru
          _
      $region12: #{tpu_custom_call.1} parent=5 // pred_fallthru
        _
      %p247 = scmp.lt.s32.totalorder %s22, 4
      // Predicated region
      $region25: #{tpu_custom_call.1} parent=5 // pred_check
        %p248 = pneg %p247
      $region26: #{tpu_custom_call.1} parent=5 // pred_check_branch
        %250 = sbr.rel (%p248) target = $region28
      $region27: #{tpu_custom_call.1} parent=5 // pred_region
        // Predicated region
        $region29: #{tpu_custom_call.1} parent=27 // pred_check
          %p251 = pneg %p56
        $region30: #{tpu_custom_call.1} parent=27 // pred_check_branch
          %253 = sbr.rel (%p251) target = $region32
        $region31: #{tpu_custom_call.1} parent=27 // pred_region
          %s254 = sand.u32 %s46, 1
          %s255 = scalar_lea.sflag [#allocation4], %s254
          %s256 = sand.u32 %s46, 1
          %s257 = smul.addr %s256, 256
          %s258 = scalar_lea.vmem [#allocation3], %s257
          %s259 = smul.u32 32, %s29
          %s260 = smul.u32 2, %s30
          %s262 = ssub.s32 4096, 4096
          %263 = vsyncadd %s255, %s262
          %s264 = smul.addr %s259, 4
          %s265 = sadd.s32 %s260, %s264
          %s266 = smul.addr %s265, 64
          %s267 = scalar_lea.hbm %s0, %s266
          %s268 = sshll.u32 %s258, 4
          %s269 = int_to_ptr.vmem [resolvable:$true] %s268
          %274 = dma.hbm_to_vmem [thread:$0]  %s267, 4096, %s269, %s255, 256, 128, 8
        $region32: #{tpu_custom_call.1} parent=27 // pred_fallthru
          _
        // Predicated region
        $region33: #{tpu_custom_call.1} parent=27 // pred_check
          %p275 = pneg %p82
        $region34: #{tpu_custom_call.1} parent=27 // pred_check_branch
          %277 = sbr.rel (%p275) target = $region36
        $region35: #{tpu_custom_call.1} parent=27 // pred_region
          %s278 = sand.u32 %s22, 1
          %s279 = scalar_lea.sflag [#allocation7], %s278
          %s280 = sand.u32 %s72, 1
          %s281 = smul.addr %s280, 128
          %s282 = scalar_lea.vmem [#allocation6], %s281
          %s283 = smul.u32 32, %s30
          %s285 = ssub.s32 2048, 2048
          %286 = vsyncadd %s279, %s285
          %s287 = smul.addr %s283, 64
          %s288 = scalar_lea.hbm %s1, %s287
          %s289 = sshll.u32 %s282, 4
          %s290 = int_to_ptr.vmem [resolvable:$true] %s289
          %295 = dma.hbm_to_vmem [thread:$0]  %s288, 2048, %s290, %s279, 64, 64, 4
        $region36: #{tpu_custom_call.1} parent=27 // pred_fallthru
          _
        // Predicated region
        $region37: #{tpu_custom_call.1} parent=27 // pred_check
          %p296 = pneg %p108
        $region38: #{tpu_custom_call.1} parent=27 // pred_check_branch
          %298 = sbr.rel (%p296) target = $region40
        $region39: #{tpu_custom_call.1} parent=27 // pred_region
          %s299 = sand.u32 %s22, 1
          %s300 = scalar_lea.sflag [#allocation7], %s299
          %s301 = sand.u32 %s98, 1
          %s302 = smul.addr %s301, 128
          %s303 = scalar_lea.vmem [#allocation8], %s302
          %s304 = smul.u32 32, %s29
          %s306 = ssub.s32 2048, 2048
          %307 = vsyncadd %s300, %s306
          %s308 = smul.addr %s304, 64
          %s309 = scalar_lea.hbm %s2, %s308
          %s310 = sshll.u32 %s303, 4
          %s311 = int_to_ptr.vmem [resolvable:$true] %s310
          %316 = dma.hbm_to_vmem [thread:$0]  %s309, 2048, %s311, %s300, 64, 64, 4
        $region40: #{tpu_custom_call.1} parent=27 // pred_fallthru
          _
      $region28: #{tpu_custom_call.1} parent=5 // pred_fallthru
        _
      %p317 = scmp.le.s32.totalorder 1, %s22
      %p318 = scmp.lt.s32.totalorder %s22, 5
      %p319 = pnand %p317, %p318
      %p320 = pneg %p319
      // Predicated region
      $region41: #{tpu_custom_call.1} parent=5 // pred_check
        _
      $region42: #{tpu_custom_call.1} parent=5 // pred_check_branch
        %322 = sbr.rel (%p319) target = $region44
      $region43: #{tpu_custom_call.1} parent=5 // pred_region
        %s323 = ssub.s32 %s22, 1
        %s324 = sand.u32 %s49, 1
        %s325 = scalar_lea.sflag [#allocation4], %s324
        %s326 = sand.u32 %s49, 1
        %s327 = smul.addr %s326, 256
        %s328 = scalar_lea.vmem [#allocation3], %s327
        // Predicated region
        $region45: #{tpu_custom_call.1} parent=43 // pred_check
          %p329 = pneg %p62
        $region46: #{tpu_custom_call.1} parent=43 // pred_check_branch
          %331 = sbr.rel (%p329) target = $region48
        $region47: #{tpu_custom_call.1} parent=43 // pred_region
          %332 = dma.done %s325, 4096
        $region48: #{tpu_custom_call.1} parent=43 // pred_fallthru
          _
        %s333 = sand.u32 %s27, 1
        %s334 = scalar_lea.sflag [#allocation7], %s333
        %s335 = sand.u32 %s75, 1
        %s336 = smul.addr %s335, 128
        %s337 = scalar_lea.vmem [#allocation6], %s336
        // Predicated region
        $region49: #{tpu_custom_call.1} parent=43 // pred_check
          %p338 = pneg %p88
        $region50: #{tpu_custom_call.1} parent=43 // pred_check_branch
          %340 = sbr.rel (%p338) target = $region52
        $region51: #{tpu_custom_call.1} parent=43 // pred_region
          %341 = dma.done %s334, 2048
        $region52: #{tpu_custom_call.1} parent=43 // pred_fallthru
          _
        %s342 = sand.u32 %s27, 1
        %s343 = scalar_lea.sflag [#allocation7], %s342
        %s344 = sand.u32 %s101, 1
        %s345 = smul.addr %s344, 128
        %s346 = scalar_lea.vmem [#allocation8], %s345
        // Predicated region
        $region53: #{tpu_custom_call.1} parent=43 // pred_check
          %p347 = pneg %p114
        $region54: #{tpu_custom_call.1} parent=43 // pred_check_branch
          %349 = sbr.rel (%p347) target = $region56
        $region55: #{tpu_custom_call.1} parent=43 // pred_region
          %350 = dma.done %s343, 2048
        $region56: #{tpu_custom_call.1} parent=43 // pred_fallthru
          _
        // Predicated region
        $region57: #{tpu_custom_call.1} parent=43 // pred_check
          %p351 = pneg %p135
        $region58: #{tpu_custom_call.1} parent=43 // pred_check_branch
          %353 = sbr.rel (%p351) target = $region60
        $region59: #{tpu_custom_call.1} parent=43 // pred_region
          %354 = dma.done [#allocation10], 1024
        $region60: #{tpu_custom_call.1} parent=43 // pred_fallthru
          _
        // Predicated region
        $region61: #{tpu_custom_call.1} parent=43 // pred_check
          %p355 = pneg %p156
        $region62: #{tpu_custom_call.1} parent=43 // pred_check_branch
          %357 = sbr.rel (%p355) target = $region64
        $region63: #{tpu_custom_call.1} parent=43 // pred_region
          %358 = dma.done [#allocation10], 1024
        $region64: #{tpu_custom_call.1} parent=43 // pred_fallthru
          _
        %s359 = sand.u32 %s49, 1
        %s360 = scalar_lea.sflag [#allocation4], %s359
        %s361 = sand.u32 %s49, 1
        %s362 = smul.addr %s361, 256
        %s363 = scalar_lea.vmem [#allocation3], %s362
        %p364 = pneg %p62
        %p365 = pneg %p59
        %s366 = sand.u32 %s27, 1
        %s367 = scalar_lea.sflag [#allocation7], %s366
        %s368 = sand.u32 %s75, 1
        %s369 = smul.addr %s368, 128
        %s370 = scalar_lea.vmem [#allocation6], %s369
        %p371 = pneg %p88
        %p372 = pneg %p85
        %s373 = sand.u32 %s27, 1
        %s374 = scalar_lea.sflag [#allocation7], %s373
        %s375 = sand.u32 %s101, 1
        %s376 = smul.addr %s375, 128
        %s377 = scalar_lea.vmem [#allocation8], %s376
        %p378 = pneg %p114
        %p379 = pneg %p111
        %p380 = pneg %p135
        %p381 = pneg %p132
        %p382 = pneg %p156
        %p383 = pneg %p153
        %p384 = pneg %p177
        %p385 = pneg %p174
        %p386 = pneg %p203
        %p387 = pneg %p200
        %s388 = sand.u32 %s190, 1
        %s389 = scalar_lea.sflag [#allocation5], %s388
        %s390 = sand.u32 %s190, 1
        %s391 = smul.addr %s390, 256
        %s392 = scalar_lea.vmem [#allocation12], %s391
        %s393 = smul.u32 32, %s31
        %s394 = smul.u32 2, %s32
        %s395 = smul.u32 32, %s32
        %s396 = smul.u32 32, %s31
        %s397 = smul.u32 32, %s31
        %p399 = scmp.eq.s32.totalorder %s32, 0
        // Predicated region
        $region65: #{tpu_custom_call.1} parent=43 // pred_check
          %p400 = pneg %p399
        $region66: #{tpu_custom_call.1} parent=43 // pred_check_branch
          %402 = sbr.rel (%p400) target = $region68
        $region67: #{tpu_custom_call.1} parent=43 // pred_region
          %403 = vst [vmem:[#allocation2] sm:$0xff] 0.0
          %404 = vst [vmem:[#allocation2 + $0x8] sm:$0xff] 0.0
          %405 = vst [vmem:[#allocation2 + $0x10] sm:$0xff] 0.0
          %406 = vst [vmem:[#allocation2 + $0x18] sm:$0xff] 0.0
          %407 = vst [vmem:[#allocation2 + $0x20] sm:$0xff] 0.0
          %408 = vst [vmem:[#allocation2 + $0x28] sm:$0xff] 0.0
          %409 = vst [vmem:[#allocation2 + $0x30] sm:$0xff] 0.0
          %410 = vst [vmem:[#allocation2 + $0x38] sm:$0xff] 0.0
          %411 = vst [vmem:[#allocation2 + $0x40] sm:$0xff] 0.0
          %412 = vst [vmem:[#allocation2 + $0x48] sm:$0xff] 0.0
          %413 = vst [vmem:[#allocation2 + $0x50] sm:$0xff] 0.0
          %414 = vst [vmem:[#allocation2 + $0x58] sm:$0xff] 0.0
          %415 = vst [vmem:[#allocation2 + $0x60] sm:$0xff] 0.0
          %416 = vst [vmem:[#allocation2 + $0x68] sm:$0xff] 0.0
          %417 = vst [vmem:[#allocation2 + $0x70] sm:$0xff] 0.0
          %418 = vst [vmem:[#allocation2 + $0x78] sm:$0xff] 0.0
          %419 = vst [vmem:[#allocation2 + $0x80] sm:$0xff] 0.0
          %420 = vst [vmem:[#allocation2 + $0x88] sm:$0xff] 0.0
          %421 = vst [vmem:[#allocation2 + $0x90] sm:$0xff] 0.0
          %422 = vst [vmem:[#allocation2 + $0x98] sm:$0xff] 0.0
          %423 = vst [vmem:[#allocation2 + $0xa0] sm:$0xff] 0.0
          %424 = vst [vmem:[#allocation2 + $0xa8] sm:$0xff] 0.0
          %425 = vst [vmem:[#allocation2 + $0xb0] sm:$0xff] 0.0
          %426 = vst [vmem:[#allocation2 + $0xb8] sm:$0xff] 0.0
          %427 = vst [vmem:[#allocation2 + $0xc0] sm:$0xff] 0.0
          %428 = vst [vmem:[#allocation2 + $0xc8] sm:$0xff] 0.0
          %429 = vst [vmem:[#allocation2 + $0xd0] sm:$0xff] 0.0
          %430 = vst [vmem:[#allocation2 + $0xd8] sm:$0xff] 0.0
          %431 = vst [vmem:[#allocation2 + $0xe0] sm:$0xff] 0.0
          %432 = vst [vmem:[#allocation2 + $0xe8] sm:$0xff] 0.0
          %433 = vst [vmem:[#allocation2 + $0xf0] sm:$0xff] 0.0
          %434 = vst [vmem:[#allocation2 + $0xf8] sm:$0xff] 0.0
        $region68: #{tpu_custom_call.1} parent=43 // pred_fallthru
          _
        %v435 = vld [vmem:[#allocation2] sm:$0xff]
        %v436 = vld [vmem:[#allocation2 + $0x8] sm:$0xff]
        %v437 = vld [vmem:[#allocation2 + $0x10] sm:$0xff]
        %v438 = vld [vmem:[#allocation2 + $0x18] sm:$0xff]
        %v439 = vld [vmem:[#allocation2 + $0x20] sm:$0xff]
        %v440 = vld [vmem:[#allocation2 + $0x28] sm:$0xff]
        %v441 = vld [vmem:[#allocation2 + $0x30] sm:$0xff]
        %v442 = vld [vmem:[#allocation2 + $0x38] sm:$0xff]
        %v443 = vld [vmem:[#allocation2 + $0x40] sm:$0xff]
        %v444 = vld [vmem:[#allocation2 + $0x48] sm:$0xff]
        %v445 = vld [vmem:[#allocation2 + $0x50] sm:$0xff]
        %v446 = vld [vmem:[#allocation2 + $0x58] sm:$0xff]
        %v447 = vld [vmem:[#allocation2 + $0x60] sm:$0xff]
        %v448 = vld [vmem:[#allocation2 + $0x68] sm:$0xff]
        %v449 = vld [vmem:[#allocation2 + $0x70] sm:$0xff]
        %v450 = vld [vmem:[#allocation2 + $0x78] sm:$0xff]
        %v451 = vld [vmem:[#allocation2 + $0x80] sm:$0xff]
        %v452 = vld [vmem:[#allocation2 + $0x88] sm:$0xff]
        %v453 = vld [vmem:[#allocation2 + $0x90] sm:$0xff]
        %v454 = vld [vmem:[#allocation2 + $0x98] sm:$0xff]
        %v455 = vld [vmem:[#allocation2 + $0xa0] sm:$0xff]
        %v456 = vld [vmem:[#allocation2 + $0xa8] sm:$0xff]
        %v457 = vld [vmem:[#allocation2 + $0xb0] sm:$0xff]
        %v458 = vld [vmem:[#allocation2 + $0xb8] sm:$0xff]
        %v459 = vld [vmem:[#allocation2 + $0xc0] sm:$0xff]
        %v460 = vld [vmem:[#allocation2 + $0xc8] sm:$0xff]
        %v461 = vld [vmem:[#allocation2 + $0xd0] sm:$0xff]
        %v462 = vld [vmem:[#allocation2 + $0xd8] sm:$0xff]
        %v463 = vld [vmem:[#allocation2 + $0xe0] sm:$0xff]
        %v464 = vld [vmem:[#allocation2 + $0xe8] sm:$0xff]
        %v465 = vld [vmem:[#allocation2 + $0xf0] sm:$0xff]
        %v466 = vld [vmem:[#allocation2 + $0xf8] sm:$0xff]
        %v467 = vld [vmem:[%s328] sm:$0xff]
        %v468 = vld [vmem:[%s328 + $0x8] sm:$0xff]
        %v469 = vld [vmem:[%s328 + $0x10] sm:$0xff]
        %v470 = vld [vmem:[%s328 + $0x18] sm:$0xff]
        %v471 = vld [vmem:[%s328 + $0x20] sm:$0xff]
        %v472 = vld [vmem:[%s328 + $0x28] sm:$0xff]
        %v473 = vld [vmem:[%s328 + $0x30] sm:$0xff]
        %v474 = vld [vmem:[%s328 + $0x38] sm:$0xff]
        %v475 = vld [vmem:[%s328 + $0x40] sm:$0xff]
        %v476 = vld [vmem:[%s328 + $0x48] sm:$0xff]
        %v477 = vld [vmem:[%s328 + $0x50] sm:$0xff]
        %v478 = vld [vmem:[%s328 + $0x58] sm:$0xff]
        %v479 = vld [vmem:[%s328 + $0x60] sm:$0xff]
        %v480 = vld [vmem:[%s328 + $0x68] sm:$0xff]
        %v481 = vld [vmem:[%s328 + $0x70] sm:$0xff]
        %v482 = vld [vmem:[%s328 + $0x78] sm:$0xff]
        %v483 = vld [vmem:[%s328 + $0x80] sm:$0xff]
        %v484 = vld [vmem:[%s328 + $0x88] sm:$0xff]
        %v485 = vld [vmem:[%s328 + $0x90] sm:$0xff]
        %v486 = vld [vmem:[%s328 + $0x98] sm:$0xff]
        %v487 = vld [vmem:[%s328 + $0xa0] sm:$0xff]
        %v488 = vld [vmem:[%s328 + $0xa8] sm:$0xff]
        %v489 = vld [vmem:[%s328 + $0xb0] sm:$0xff]
        %v490 = vld [vmem:[%s328 + $0xb8] sm:$0xff]
        %v491 = vld [vmem:[%s328 + $0xc0] sm:$0xff]
        %v492 = vld [vmem:[%s328 + $0xc8] sm:$0xff]
        %v493 = vld [vmem:[%s328 + $0xd0] sm:$0xff]
        %v494 = vld [vmem:[%s328 + $0xd8] sm:$0xff]
        %v495 = vld [vmem:[%s328 + $0xe0] sm:$0xff]
        %v496 = vld [vmem:[%s328 + $0xe8] sm:$0xff]
        %v497 = vld [vmem:[%s328 + $0xf0] sm:$0xff]
        %v498 = vld [vmem:[%s328 + $0xf8] sm:$0xff]
        %v499 = vld [vmem:[%s337] sm:$0xf]
        %v500 = vld [vmem:[%s337 + $0x4] sm:$0xf]
        %v501 = vld [vmem:[%s337 + $0x8] sm:$0xf]
        %v502 = vld [vmem:[%s337 + $0xc] sm:$0xf]
        %v503 = vld [vmem:[%s337 + $0x10] sm:$0xf]
        %v504 = vld [vmem:[%s337 + $0x14] sm:$0xf]
        %v505 = vld [vmem:[%s337 + $0x18] sm:$0xf]
        %v506 = vld [vmem:[%s337 + $0x1c] sm:$0xf]
        %v507 = vld [vmem:[%s337 + $0x20] sm:$0xf]
        %v508 = vld [vmem:[%s337 + $0x24] sm:$0xf]
        %v509 = vld [vmem:[%s337 + $0x28] sm:$0xf]
        %v510 = vld [vmem:[%s337 + $0x2c] sm:$0xf]
        %v511 = vld [vmem:[%s337 + $0x30] sm:$0xf]
        %v512 = vld [vmem:[%s337 + $0x34] sm:$0xf]
        %v513 = vld [vmem:[%s337 + $0x38] sm:$0xf]
        %v514 = vld [vmem:[%s337 + $0x3c] sm:$0xf]
        %v515 = vld [vmem:[%s337 + $0x40] sm:$0xf]
        %v516 = vld [vmem:[%s337 + $0x44] sm:$0xf]
        %v517 = vld [vmem:[%s337 + $0x48] sm:$0xf]
        %v518 = vld [vmem:[%s337 + $0x4c] sm:$0xf]
        %v519 = vld [vmem:[%s337 + $0x50] sm:$0xf]
        %v520 = vld [vmem:[%s337 + $0x54] sm:$0xf]
        %v521 = vld [vmem:[%s337 + $0x58] sm:$0xf]
        %v522 = vld [vmem:[%s337 + $0x5c] sm:$0xf]
        %v523 = vld [vmem:[%s337 + $0x60] sm:$0xf]
        %v524 = vld [vmem:[%s337 + $0x64] sm:$0xf]
        %v525 = vld [vmem:[%s337 + $0x68] sm:$0xf]
        %v526 = vld [vmem:[%s337 + $0x6c] sm:$0xf]
        %v527 = vld [vmem:[%s337 + $0x70] sm:$0xf]
        %v528 = vld [vmem:[%s337 + $0x74] sm:$0xf]
        %v529 = vld [vmem:[%s337 + $0x78] sm:$0xf]
        %v530 = vld [vmem:[%s337 + $0x7c] sm:$0xf]
        %v563 = vunpack.c.l.b16 %v467
        %v564 = vunpack.c.h.b16 %v467
        %v565 = vunpack.c.l.b16 %v468
        %v566 = vunpack.c.h.b16 %v468
        %v567 = vunpack.c.l.b16 %v469
        %v568 = vunpack.c.h.b16 %v469
        %v569 = vunpack.c.l.b16 %v470
        %v570 = vunpack.c.h.b16 %v470
        %v571 = vunpack.c.l.b16 %v471
        %v572 = vunpack.c.h.b16 %v471
        %v573 = vunpack.c.l.b16 %v472
        %v574 = vunpack.c.h.b16 %v472
        %v575 = vunpack.c.l.b16 %v473
        %v576 = vunpack.c.h.b16 %v473
        %v577 = vunpack.c.l.b16 %v474
        %v578 = vunpack.c.h.b16 %v474
        %v579 = vunpack.c.l.b16 %v475
        %v580 = vunpack.c.h.b16 %v475
        %v581 = vunpack.c.l.b16 %v476
        %v582 = vunpack.c.h.b16 %v476
        %v583 = vunpack.c.l.b16 %v477
        %v584 = vunpack.c.h.b16 %v477
        %v585 = vunpack.c.l.b16 %v478
        %v586 = vunpack.c.h.b16 %v478
        %v587 = vunpack.c.l.b16 %v479
        %v588 = vunpack.c.h.b16 %v479
        %v589 = vunpack.c.l.b16 %v480
        %v590 = vunpack.c.h.b16 %v480
        %v591 = vunpack.c.l.b16 %v481
        %v592 = vunpack.c.h.b16 %v481
        %v593 = vunpack.c.l.b16 %v482
        %v594 = vunpack.c.h.b16 %v482
        %v595 = vunpack.c.l.b16 %v483
        %v596 = vunpack.c.h.b16 %v483
        %v597 = vunpack.c.l.b16 %v484
        %v598 = vunpack.c.h.b16 %v484
        %v599 = vunpack.c.l.b16 %v485
        %v600 = vunpack.c.h.b16 %v485
        %v601 = vunpack.c.l.b16 %v486
        %v602 = vunpack.c.h.b16 %v486
        %v603 = vunpack.c.l.b16 %v487
        %v604 = vunpack.c.h.b16 %v487
        %v605 = vunpack.c.l.b16 %v488
        %v606 = vunpack.c.h.b16 %v488
        %v607 = vunpack.c.l.b16 %v489
        %v608 = vunpack.c.h.b16 %v489
        %v609 = vunpack.c.l.b16 %v490
        %v610 = vunpack.c.h.b16 %v490
        %v611 = vunpack.c.l.b16 %v491
        %v612 = vunpack.c.h.b16 %v491
        %v613 = vunpack.c.l.b16 %v492
        %v614 = vunpack.c.h.b16 %v492
        %v615 = vunpack.c.l.b16 %v493
        %v616 = vunpack.c.h.b16 %v493
        %v617 = vunpack.c.l.b16 %v494
        %v618 = vunpack.c.h.b16 %v494
        %v619 = vunpack.c.l.b16 %v495
        %v620 = vunpack.c.h.b16 %v495
        %v621 = vunpack.c.l.b16 %v496
        %v622 = vunpack.c.h.b16 %v496
        %v623 = vunpack.c.l.b16 %v497
        %v624 = vunpack.c.h.b16 %v497
        %v625 = vunpack.c.l.b16 %v498
        %v626 = vunpack.c.h.b16 %v498
        %v627 = vpack.c.b16 %v565, %v563
        %v628 = vpack.c.b16 %v566, %v564
        %v629 = vpack.c.b16 %v569, %v567
        %v630 = vpack.c.b16 %v570, %v568
        %v631 = vpack.c.b16 %v573, %v571
        %v632 = vpack.c.b16 %v574, %v572
        %v633 = vpack.c.b16 %v577, %v575
        %v634 = vpack.c.b16 %v578, %v576
        %v635 = vpack.c.b16 %v581, %v579
        %v636 = vpack.c.b16 %v582, %v580
        %v637 = vpack.c.b16 %v585, %v583
        %v638 = vpack.c.b16 %v586, %v584
        %v639 = vpack.c.b16 %v589, %v587
        %v640 = vpack.c.b16 %v590, %v588
        %v641 = vpack.c.b16 %v593, %v591
        %v642 = vpack.c.b16 %v594, %v592
        %v643 = vpack.c.b16 %v597, %v595
        %v644 = vpack.c.b16 %v598, %v596
        %v645 = vpack.c.b16 %v601, %v599
        %v646 = vpack.c.b16 %v602, %v600
        %v647 = vpack.c.b16 %v605, %v603
        %v648 = vpack.c.b16 %v606, %v604
        %v649 = vpack.c.b16 %v609, %v607
        %v650 = vpack.c.b16 %v610, %v608
        %v651 = vpack.c.b16 %v613, %v611
        %v652 = vpack.c.b16 %v614, %v612
        %v653 = vpack.c.b16 %v617, %v615
        %v654 = vpack.c.b16 %v618, %v616
        %v655 = vpack.c.b16 %v621, %v619
        %v656 = vpack.c.b16 %v622, %v620
        %v657 = vpack.c.b16 %v625, %v623
        %v658 = vpack.c.b16 %v626, %v624
        %v723 = vunpack.c.l.b16 %v499
        %v724 = vunpack.c.l.b16 %v500
        %v725 = vunpack.c.l.b16 %v501
        %v726 = vunpack.c.l.b16 %v502
        %v727 = vunpack.c.l.b16 %v503
        %v728 = vunpack.c.l.b16 %v504
        %v729 = vunpack.c.l.b16 %v505
        %v730 = vunpack.c.l.b16 %v506
        %v731 = vunpack.c.l.b16 %v507
        %v732 = vunpack.c.l.b16 %v508
        %v733 = vunpack.c.l.b16 %v509
        %v734 = vunpack.c.l.b16 %v510
        %v735 = vunpack.c.l.b16 %v511
        %v736 = vunpack.c.l.b16 %v512
        %v737 = vunpack.c.l.b16 %v513
        %v738 = vunpack.c.l.b16 %v514
        %v739 = vunpack.c.l.b16 %v515
        %v740 = vunpack.c.l.b16 %v516
        %v741 = vunpack.c.l.b16 %v517
        %v742 = vunpack.c.l.b16 %v518
        %v743 = vunpack.c.l.b16 %v519
        %v744 = vunpack.c.l.b16 %v520
        %v745 = vunpack.c.l.b16 %v521
        %v746 = vunpack.c.l.b16 %v522
        %v747 = vunpack.c.l.b16 %v523
        %v748 = vunpack.c.l.b16 %v524
        %v749 = vunpack.c.l.b16 %v525
        %v750 = vunpack.c.l.b16 %v526
        %v751 = vunpack.c.l.b16 %v527
        %v752 = vunpack.c.l.b16 %v528
        %v753 = vunpack.c.l.b16 %v529
        %v754 = vunpack.c.l.b16 %v530
        %v755 = vpack.c.b16 %v724, %v723
        %v756 = vpack.c.b16 %v726, %v725
        %v757 = vpack.c.b16 %v728, %v727
        %v758 = vpack.c.b16 %v730, %v729
        %v759 = vpack.c.b16 %v732, %v731
        %v760 = vpack.c.b16 %v734, %v733
        %v761 = vpack.c.b16 %v736, %v735
        %v762 = vpack.c.b16 %v738, %v737
        %v763 = vpack.c.b16 %v740, %v739
        %v764 = vpack.c.b16 %v742, %v741
        %v765 = vpack.c.b16 %v744, %v743
        %v766 = vpack.c.b16 %v746, %v745
        %v767 = vpack.c.b16 %v748, %v747
        %v768 = vpack.c.b16 %v750, %v749
        %v769 = vpack.c.b16 %v752, %v751
        %v770 = vpack.c.b16 %v754, %v753
        %787 = vmatprep.subr.bf16.mxu0 0
        %788 = vmatpush1.bf16.msra.mxu0 %v755
        %789 = vmatprep.subr.bf16.mxu0 0
        %790 = vmatpush1.bf16.msra.mxu0 %v756
        %791 = vmatprep.subr.bf16.mxu0 0
        %792 = vmatpush1.bf16.msra.mxu0 %v757
        %793 = vmatprep.subr.bf16.mxu0 0
        %794 = vmatpush1.bf16.msra.mxu0 %v758
        %795 = vmatprep.subr.bf16.mxu0 0
        %796 = vmatpush1.bf16.msra.mxu0 %v759
        %797 = vmatprep.subr.bf16.mxu0 0
        %798 = vmatpush1.bf16.msra.mxu0 %v760
        %799 = vmatprep.subr.bf16.mxu0 0
        %800 = vmatpush1.bf16.msra.mxu0 %v761
        %801 = vmatprep.subr.bf16.mxu0 0
        %802 = vmatpush1.bf16.msra.mxu0 %v762
        %803 = vmatprep.subr.bf16.mxu0 0
        %804 = vmatpush1.bf16.msra.mxu0 %v763
        %805 = vmatprep.subr.bf16.mxu0 0
        %806 = vmatpush1.bf16.msra.mxu0 %v764
        %807 = vmatprep.subr.bf16.mxu0 0
        %808 = vmatpush1.bf16.msra.mxu0 %v765
        %809 = vmatprep.subr.bf16.mxu0 0
        %810 = vmatpush1.bf16.msra.mxu0 %v766
        %811 = vmatprep.subr.bf16.mxu0 0
        %812 = vmatpush1.bf16.msra.mxu0 %v767
        %813 = vmatprep.subr.bf16.mxu0 0
        %814 = vmatpush1.bf16.msra.mxu0 %v768
        %815 = vmatprep.subr.bf16.mxu0 0
        %816 = vmatpush1.bf16.msra.mxu0 %v769
        %817 = vmatprep.subr.bf16.mxu0 0
        %818 = vmatpush1.bf16.msra.mxu0 %v770
        %819 = vmatprep.mubr.bf16.mxu0 %v628
        %820 = vmatmul.mubr.bf16.gmra.mrb[0].mxu0 %v627
        %v821 = vpop.f32.mrb[0].mxu0
        %v822 = vadd.f32 0.0, %v821
        %v823 = vpop.f32.mrb[0].mxu0
        %v824 = vpop.f32.mrb[0].mxu0
        %v825 = vadd.f32 0.0, %v824
        %v826 = vpop.f32.mrb[0].mxu0
        %827 = vmatprep.mubr.bf16.mxu0 %v630
        %828 = vmatmul.mubr.bf16.gmra.mrb[0].mxu0 %v629
        %v829 = vpop.f32.mrb[0].mxu0
        %v830 = vadd.f32 0.0, %v829
        %v831 = vpop.f32.mrb[0].mxu0
        %v832 = vpop.f32.mrb[0].mxu0
        %v833 = vadd.f32 0.0, %v832
        %v834 = vpop.f32.mrb[0].mxu0
        %835 = vmatprep.mubr.bf16.mxu0 %v632
        %836 = vmatmul.mubr.bf16.gmra.mrb[0].mxu0 %v631
        %v837 = vpop.f32.mrb[0].mxu0
        %v838 = vadd.f32 0.0, %v837
        %v839 = vpop.f32.mrb[0].mxu0
        %v840 = vpop.f32.mrb[0].mxu0
        %v841 = vadd.f32 0.0, %v840
        %v842 = vpop.f32.mrb[0].mxu0
        %843 = vmatprep.mubr.bf16.mxu0 %v634
        %844 = vmatmul.mubr.bf16.gmra.mrb[0].mxu0 %v633
        %v845 = vpop.f32.mrb[0].mxu0
        %v846 = vadd.f32 0.0, %v845
        %v847 = vpop.f32.mrb[0].mxu0
        %v848 = vpop.f32.mrb[0].mxu0
        %v849 = vadd.f32 0.0, %v848
        %v850 = vpop.f32.mrb[0].mxu0
        %851 = vmatprep.mubr.bf16.mxu0 %v636
        %852 = vmatmul.mubr.bf16.gmra.mrb[0].mxu0 %v635
        %v853 = vpop.f32.mrb[0].mxu0
        %v854 = vadd.f32 0.0, %v853
        %v855 = vpop.f32.mrb[0].mxu0
        %v856 = vpop.f32.mrb[0].mxu0
        %v857 = vadd.f32 0.0, %v856
        %v858 = vpop.f32.mrb[0].mxu0
        %859 = vmatprep.mubr.bf16.mxu0 %v638
        %860 = vmatmul.mubr.bf16.gmra.mrb[0].mxu0 %v637
        %v861 = vpop.f32.mrb[0].mxu0
        %v862 = vadd.f32 0.0, %v861
        %v863 = vpop.f32.mrb[0].mxu0
        %v864 = vpop.f32.mrb[0].mxu0
        %v865 = vadd.f32 0.0, %v864
        %v866 = vpop.f32.mrb[0].mxu0
        %867 = vmatprep.mubr.bf16.mxu0 %v640
        %868 = vmatmul.mubr.bf16.gmra.mrb[0].mxu0 %v639
        %v869 = vpop.f32.mrb[0].mxu0
        %v870 = vadd.f32 0.0, %v869
        %v871 = vpop.f32.mrb[0].mxu0
        %v872 = vpop.f32.mrb[0].mxu0
        %v873 = vadd.f32 0.0, %v872
        %v874 = vpop.f32.mrb[0].mxu0
        %875 = vmatprep.mubr.bf16.mxu0 %v642
        %876 = vmatmul.mubr.bf16.gmra.mrb[0].mxu0 %v641
        %v877 = vpop.f32.mrb[0].mxu0
        %v878 = vadd.f32 0.0, %v877
        %v879 = vpop.f32.mrb[0].mxu0
        %v880 = vpop.f32.mrb[0].mxu0
        %v881 = vadd.f32 0.0, %v880
        %v882 = vpop.f32.mrb[0].mxu0
        %883 = vmatprep.mubr.bf16.mxu0 %v644
        %884 = vmatmul.mubr.bf16.gmra.mrb[0].mxu0 %v643
        %v885 = vpop.f32.mrb[0].mxu0
        %v886 = vadd.f32 0.0, %v885
        %v887 = vpop.f32.mrb[0].mxu0
        %v888 = vpop.f32.mrb[0].mxu0
        %v889 = vadd.f32 0.0, %v888
        %v890 = vpop.f32.mrb[0].mxu0
        %891 = vmatprep.mubr.bf16.mxu0 %v646
        %892 = vmatmul.mubr.bf16.gmra.mrb[0].mxu0 %v645
        %v893 = vpop.f32.mrb[0].mxu0
        %v894 = vadd.f32 0.0, %v893
        %v895 = vpop.f32.mrb[0].mxu0
        %v896 = vpop.f32.mrb[0].mxu0
        %v897 = vadd.f32 0.0, %v896
        %v898 = vpop.f32.mrb[0].mxu0
        %899 = vmatprep.mubr.bf16.mxu0 %v648
        %900 = vmatmul.mubr.bf16.gmra.mrb[0].mxu0 %v647
        %v901 = vpop.f32.mrb[0].mxu0
        %v902 = vadd.f32 0.0, %v901
        %v903 = vpop.f32.mrb[0].mxu0
        %v904 = vpop.f32.mrb[0].mxu0
        %v905 = vadd.f32 0.0, %v904
        %v906 = vpop.f32.mrb[0].mxu0
        %907 = vmatprep.mubr.bf16.mxu0 %v650
        %908 = vmatmul.mubr.bf16.gmra.mrb[0].mxu0 %v649
        %v909 = vpop.f32.mrb[0].mxu0
        %v910 = vadd.f32 0.0, %v909
        %v911 = vpop.f32.mrb[0].mxu0
        %v912 = vpop.f32.mrb[0].mxu0
        %v913 = vadd.f32 0.0, %v912
        %v914 = vpop.f32.mrb[0].mxu0
        %915 = vmatprep.mubr.bf16.mxu0 %v652
        %916 = vmatmul.mubr.bf16.gmra.mrb[0].mxu0 %v651
        %v917 = vpop.f32.mrb[0].mxu0
        %v918 = vadd.f32 0.0, %v917
        %v919 = vpop.f32.mrb[0].mxu0
        %v920 = vpop.f32.mrb[0].mxu0
        %v921 = vadd.f32 0.0, %v920
        %v922 = vpop.f32.mrb[0].mxu0
        %923 = vmatprep.mubr.bf16.mxu0 %v654
        %924 = vmatmul.mubr.bf16.gmra.mrb[0].mxu0 %v653
        %v925 = vpop.f32.mrb[0].mxu0
        %v926 = vadd.f32 0.0, %v925
        %v927 = vpop.f32.mrb[0].mxu0
        %v928 = vpop.f32.mrb[0].mxu0
        %v929 = vadd.f32 0.0, %v928
        %v930 = vpop.f32.mrb[0].mxu0
        %931 = vmatprep.mubr.bf16.mxu0 %v656
        %932 = vmatmul.mubr.bf16.gmra.mrb[0].mxu0 %v655
        %v933 = vpop.f32.mrb[0].mxu0
        %v934 = vadd.f32 0.0, %v933
        %v935 = vpop.f32.mrb[0].mxu0
        %v936 = vpop.f32.mrb[0].mxu0
        %v937 = vadd.f32 0.0, %v936
        %v938 = vpop.f32.mrb[0].mxu0
        %939 = vmatprep.mubr.bf16.mxu0 %v658
        %940 = vmatmul.mubr.bf16.gmra.mrb[0].mxu0 %v657
        %v941 = vpop.f32.mrb[0].mxu0
        %v942 = vadd.f32 0.0, %v941
        %v943 = vpop.f32.mrb[0].mxu0
        %v944 = vpop.f32.mrb[0].mxu0
        %v945 = vadd.f32 0.0, %v944
        %v946 = vpop.f32.mrb[0].mxu0
        %947 = vdwg.mxu0
        %v948 = vadd.f32 %v435, %v822
        %v949 = vadd.f32 %v436, %v825
        %v950 = vadd.f32 %v437, %v830
        %v951 = vadd.f32 %v438, %v833
        %v952 = vadd.f32 %v439, %v838
        %v953 = vadd.f32 %v440, %v841
        %v954 = vadd.f32 %v441, %v846
        %v955 = vadd.f32 %v442, %v849
        %v956 = vadd.f32 %v443, %v854
        %v957 = vadd.f32 %v444, %v857
        %v958 = vadd.f32 %v445, %v862
        %v959 = vadd.f32 %v446, %v865
        %v960 = vadd.f32 %v447, %v870
        %v961 = vadd.f32 %v448, %v873
        %v962 = vadd.f32 %v449, %v878
        %v963 = vadd.f32 %v450, %v881
        %v964 = vadd.f32 %v451, %v886
        %v965 = vadd.f32 %v452, %v889
        %v966 = vadd.f32 %v453, %v894
        %v967 = vadd.f32 %v454, %v897
        %v968 = vadd.f32 %v455, %v902
        %v969 = vadd.f32 %v456, %v905
        %v970 = vadd.f32 %v457, %v910
        %v971 = vadd.f32 %v458, %v913
        %v972 = vadd.f32 %v459, %v918
        %v973 = vadd.f32 %v460, %v921
        %v974 = vadd.f32 %v461, %v926
        %v975 = vadd.f32 %v462, %v929
        %v976 = vadd.f32 %v463, %v934
        %v977 = vadd.f32 %v464, %v937
        %v978 = vadd.f32 %v465, %v942
        %v979 = vadd.f32 %v466, %v945
        %980 = vst [vmem:[#allocation2] sm:$0xff] %v948
        %981 = vst [vmem:[#allocation2 + $0x8] sm:$0xff] %v949
        %982 = vst [vmem:[#allocation2 + $0x10] sm:$0xff] %v950
        %983 = vst [vmem:[#allocation2 + $0x18] sm:$0xff] %v951
        %984 = vst [vmem:[#allocation2 + $0x20] sm:$0xff] %v952
        %985 = vst [vmem:[#allocation2 + $0x28] sm:$0xff] %v953
        %986 = vst [vmem:[#allocation2 + $0x30] sm:$0xff] %v954
        %987 = vst [vmem:[#allocation2 + $0x38] sm:$0xff] %v955
        %988 = vst [vmem:[#allocation2 + $0x40] sm:$0xff] %v956
        %989 = vst [vmem:[#allocation2 + $0x48] sm:$0xff] %v957
        %990 = vst [vmem:[#allocation2 + $0x50] sm:$0xff] %v958
        %991 = vst [vmem:[#allocation2 + $0x58] sm:$0xff] %v959
        %992 = vst [vmem:[#allocation2 + $0x60] sm:$0xff] %v960
        %993 = vst [vmem:[#allocation2 + $0x68] sm:$0xff] %v961
        %994 = vst [vmem:[#allocation2 + $0x70] sm:$0xff] %v962
        %995 = vst [vmem:[#allocation2 + $0x78] sm:$0xff] %v963
        %996 = vst [vmem:[#allocation2 + $0x80] sm:$0xff] %v964
        %997 = vst [vmem:[#allocation2 + $0x88] sm:$0xff] %v965
        %998 = vst [vmem:[#allocation2 + $0x90] sm:$0xff] %v966
        %999 = vst [vmem:[#allocation2 + $0x98] sm:$0xff] %v967
        %1000 = vst [vmem:[#allocation2 + $0xa0] sm:$0xff] %v968
        %1001 = vst [vmem:[#allocation2 + $0xa8] sm:$0xff] %v969
        %1002 = vst [vmem:[#allocation2 + $0xb0] sm:$0xff] %v970
        %1003 = vst [vmem:[#allocation2 + $0xb8] sm:$0xff] %v971
        %1004 = vst [vmem:[#allocation2 + $0xc0] sm:$0xff] %v972
        %1005 = vst [vmem:[#allocation2 + $0xc8] sm:$0xff] %v973
        %1006 = vst [vmem:[#allocation2 + $0xd0] sm:$0xff] %v974
        %1007 = vst [vmem:[#allocation2 + $0xd8] sm:$0xff] %v975
        %1008 = vst [vmem:[#allocation2 + $0xe0] sm:$0xff] %v976
        %1009 = vst [vmem:[#allocation2 + $0xe8] sm:$0xff] %v977
        %1010 = vst [vmem:[#allocation2 + $0xf0] sm:$0xff] %v978
        %1011 = vst [vmem:[#allocation2 + $0xf8] sm:$0xff] %v979
        %p1012 = scmp.eq.s32.totalorder %s32, 1
        // Predicated region
        $region69: #{tpu_custom_call.1} parent=43 // pred_check
          %p1013 = pneg %p1012
        $region70: #{tpu_custom_call.1} parent=43 // pred_check_branch
          %1015 = sbr.rel (%p1013) target = $region72
        $region71: #{tpu_custom_call.1} parent=43 // pred_region
          %v1016 = vld [vmem:[%s5] sm:$0xff]
          %v1017 = vld [vmem:[%s346] sm:$0xf]
          %v1018 = vld [vmem:[%s346 + $0x4] sm:$0xf]
          %v1019 = vld [vmem:[%s346 + $0x8] sm:$0xf]
          %v1020 = vld [vmem:[%s346 + $0xc] sm:$0xf]
          %v1021 = vld [vmem:[%s346 + $0x10] sm:$0xf]
          %v1022 = vld [vmem:[%s346 + $0x14] sm:$0xf]
          %v1023 = vld [vmem:[%s346 + $0x18] sm:$0xf]
          %v1024 = vld [vmem:[%s346 + $0x1c] sm:$0xf]
          %v1025 = vld [vmem:[%s346 + $0x20] sm:$0xf]
          %v1026 = vld [vmem:[%s346 + $0x24] sm:$0xf]
          %v1027 = vld [vmem:[%s346 + $0x28] sm:$0xf]
          %v1028 = vld [vmem:[%s346 + $0x2c] sm:$0xf]
          %v1029 = vld [vmem:[%s346 + $0x30] sm:$0xf]
          %v1030 = vld [vmem:[%s346 + $0x34] sm:$0xf]
          %v1031 = vld [vmem:[%s346 + $0x38] sm:$0xf]
          %v1032 = vld [vmem:[%s346 + $0x3c] sm:$0xf]
          %v1033 = vld [vmem:[%s346 + $0x40] sm:$0xf]
          %v1034 = vld [vmem:[%s346 + $0x44] sm:$0xf]
          %v1035 = vld [vmem:[%s346 + $0x48] sm:$0xf]
          %v1036 = vld [vmem:[%s346 + $0x4c] sm:$0xf]
          %v1037 = vld [vmem:[%s346 + $0x50] sm:$0xf]
          %v1038 = vld [vmem:[%s346 + $0x54] sm:$0xf]
          %v1039 = vld [vmem:[%s346 + $0x58] sm:$0xf]
          %v1040 = vld [vmem:[%s346 + $0x5c] sm:$0xf]
          %v1041 = vld [vmem:[%s346 + $0x60] sm:$0xf]
          %v1042 = vld [vmem:[%s346 + $0x64] sm:$0xf]
          %v1043 = vld [vmem:[%s346 + $0x68] sm:$0xf]
          %v1044 = vld [vmem:[%s346 + $0x6c] sm:$0xf]
          %v1045 = vld [vmem:[%s346 + $0x70] sm:$0xf]
          %v1046 = vld [vmem:[%s346 + $0x74] sm:$0xf]
          %v1047 = vld [vmem:[%s346 + $0x78] sm:$0xf]
          %v1048 = vld [vmem:[%s346 + $0x7c] sm:$0xf]
          %v1049 = vld [vmem:[#allocation9] sm:$0xf]
          %v1050 = vld [vmem:[#allocation9 + $0x4] sm:$0xf]
          %v1051 = vld [vmem:[#allocation9 + $0x8] sm:$0xf]
          %v1052 = vld [vmem:[#allocation9 + $0xc] sm:$0xf]
          %v1053 = vld [vmem:[#allocation9 + $0x10] sm:$0xf]
          %v1054 = vld [vmem:[#allocation9 + $0x14] sm:$0xf]
          %v1055 = vld [vmem:[#allocation9 + $0x18] sm:$0xf]
          %v1056 = vld [vmem:[#allocation9 + $0x1c] sm:$0xf]
          %v1057 = vld [vmem:[#allocation9 + $0x20] sm:$0xf]
          %v1058 = vld [vmem:[#allocation9 + $0x24] sm:$0xf]
          %v1059 = vld [vmem:[#allocation9 + $0x28] sm:$0xf]
          %v1060 = vld [vmem:[#allocation9 + $0x2c] sm:$0xf]
          %v1061 = vld [vmem:[#allocation9 + $0x30] sm:$0xf]
          %v1062 = vld [vmem:[#allocation9 + $0x34] sm:$0xf]
          %v1063 = vld [vmem:[#allocation9 + $0x38] sm:$0xf]
          %v1064 = vld [vmem:[#allocation9 + $0x3c] sm:$0xf]
          %v1065 = vlaneseq
          %v1066 = vshrl.u32 %v1065, 7
          %v1067 = vsub.s32 0, %v1066
          %v1068 = vrot.slane %v1016, %v1067
          %v1101 = vunpack.c.l.b16 %v1017
          %v1102 = vunpack.c.l.b16 %v1018
          %v1103 = vunpack.c.l.b16 %v1019
          %v1104 = vunpack.c.l.b16 %v1020
          %v1105 = vunpack.c.l.b16 %v1021
          %v1106 = vunpack.c.l.b16 %v1022
          %v1107 = vunpack.c.l.b16 %v1023
          %v1108 = vunpack.c.l.b16 %v1024
          %v1109 = vunpack.c.l.b16 %v1025
          %v1110 = vunpack.c.l.b16 %v1026
          %v1111 = vunpack.c.l.b16 %v1027
          %v1112 = vunpack.c.l.b16 %v1028
          %v1113 = vunpack.c.l.b16 %v1029
          %v1114 = vunpack.c.l.b16 %v1030
          %v1115 = vunpack.c.l.b16 %v1031
          %v1116 = vunpack.c.l.b16 %v1032
          %v1117 = vunpack.c.l.b16 %v1033
          %v1118 = vunpack.c.l.b16 %v1034
          %v1119 = vunpack.c.l.b16 %v1035
          %v1120 = vunpack.c.l.b16 %v1036
          %v1121 = vunpack.c.l.b16 %v1037
          %v1122 = vunpack.c.l.b16 %v1038
          %v1123 = vunpack.c.l.b16 %v1039
          %v1124 = vunpack.c.l.b16 %v1040
          %v1125 = vunpack.c.l.b16 %v1041
          %v1126 = vunpack.c.l.b16 %v1042
          %v1127 = vunpack.c.l.b16 %v1043
          %v1128 = vunpack.c.l.b16 %v1044
          %v1129 = vunpack.c.l.b16 %v1045
          %v1130 = vunpack.c.l.b16 %v1046
          %v1131 = vunpack.c.l.b16 %v1047
          %v1132 = vunpack.c.l.b16 %v1048
          %v1133 = vpack.c.b16 %v1102, %v1101
          %v1134 = vpack.c.b16 %v1104, %v1103
          %v1135 = vpack.c.b16 %v1106, %v1105
          %v1136 = vpack.c.b16 %v1108, %v1107
          %v1137 = vpack.c.b16 %v1110, %v1109
          %v1138 = vpack.c.b16 %v1112, %v1111
          %v1139 = vpack.c.b16 %v1114, %v1113
          %v1140 = vpack.c.b16 %v1116, %v1115
          %v1141 = vpack.c.b16 %v1118, %v1117
          %v1142 = vpack.c.b16 %v1120, %v1119
          %v1143 = vpack.c.b16 %v1122, %v1121
          %v1144 = vpack.c.b16 %v1124, %v1123
          %v1145 = vpack.c.b16 %v1126, %v1125
          %v1146 = vpack.c.b16 %v1128, %v1127
          %v1147 = vpack.c.b16 %v1130, %v1129
          %v1148 = vpack.c.b16 %v1132, %v1131
          %v1181 = vunpack.c.l.b16 %v1049
          %v1182 = vunpack.c.l.b16 %v1050
          %v1183 = vunpack.c.l.b16 %v1051
          %v1184 = vunpack.c.l.b16 %v1052
          %v1185 = vunpack.c.l.b16 %v1053
          %v1186 = vunpack.c.l.b16 %v1054
          %v1187 = vunpack.c.l.b16 %v1055
          %v1188 = vunpack.c.l.b16 %v1056
          %v1189 = vunpack.c.l.b16 %v1057
          %v1190 = vunpack.c.l.b16 %v1058
          %v1191 = vunpack.c.l.b16 %v1059
          %v1192 = vunpack.c.l.b16 %v1060
          %v1193 = vunpack.c.l.b16 %v1061
          %v1194 = vunpack.c.l.b16 %v1062
          %v1195 = vunpack.c.l.b16 %v1063
          %v1196 = vunpack.c.l.b16 %v1064
          %v1197 = vpack.c.b16 %v1182, %v1181
          %v1198 = vpack.c.b16 %v1184, %v1183
          %v1199 = vpack.c.b16 %v1186, %v1185
          %v1200 = vpack.c.b16 %v1188, %v1187
          %v1201 = vpack.c.b16 %v1190, %v1189
          %v1202 = vpack.c.b16 %v1192, %v1191
          %v1203 = vpack.c.b16 %v1194, %v1193
          %v1204 = vpack.c.b16 %v1196, %v1195
          %1213 = vmatprep.subr.bf16.mxu0 0
          %1214 = vmatpush1.bf16.msra.mxu0 %v1197
          %1215 = vmatprep.subr.bf16.mxu0 0
          %1216 = vmatpush1.bf16.msra.mxu0 %v1198
          %1217 = vmatprep.subr.bf16.mxu0 0
          %1218 = vmatpush1.bf16.msra.mxu0 %v1199
          %1219 = vmatprep.subr.bf16.mxu0 0
          %1220 = vmatpush1.bf16.msra.mxu0 %v1200
          %1221 = vmatprep.subr.bf16.mxu0 0
          %1222 = vmatpush1.bf16.msra.mxu0 %v1201
          %1223 = vmatprep.subr.bf16.mxu0 0
          %1224 = vmatpush1.bf16.msra.mxu0 %v1202
          %1225 = vmatprep.subr.bf16.mxu0 0
          %1226 = vmatpush1.bf16.msra.mxu0 %v1203
          %1227 = vmatprep.subr.bf16.mxu0 0
          %1228 = vmatpush1.bf16.msra.mxu0 %v1204
          %1229 = vmatprep.subr.bf16.mxu0 0
          %1230 = vmatpush1.bf16.msra.mxu0 0
          %1231 = vmatprep.subr.bf16.mxu0 0
          %1232 = vmatpush1.bf16.msra.mxu0 0
          %1233 = vmatprep.subr.bf16.mxu0 0
          %1234 = vmatpush1.bf16.msra.mxu0 0
          %1235 = vmatprep.subr.bf16.mxu0 0
          %1236 = vmatpush1.bf16.msra.mxu0 0
          %1237 = vmatprep.subr.bf16.mxu0 0
          %1238 = vmatpush1.bf16.msra.mxu0 0
          %1239 = vmatprep.subr.bf16.mxu0 0
          %1240 = vmatpush1.bf16.msra.mxu0 0
          %1241 = vmatprep.subr.bf16.mxu0 0
          %1242 = vmatpush1.bf16.msra.mxu0 0
          %1243 = vmatprep.subr.bf16.mxu0 0
          %1244 = vmatpush1.bf16.msra.mxu0 0
          %1245 = vmatprep.mubr.bf16.mxu0 0
          %1246 = vmatmul.mubr.bf16.gmra.mrb[0].mxu0 %v1133
          %v1247 = vpop.f32.mrb[0].mxu0
          %v1248 = vadd.f32 %v1068, %v1247
          %v1249 = vpop.f32.mrb[0].mxu0
          %v1250 = vpop.f32.mrb[0].mxu0
          %v1251 = vadd.f32 %v1068, %v1250
          %v1252 = vpop.f32.mrb[0].mxu0
          %1253 = vmatprep.mubr.bf16.mxu0 0
          %1254 = vmatmul.mubr.bf16.gmra.mrb[0].mxu0 %v1134
          %v1255 = vpop.f32.mrb[0].mxu0
          %v1256 = vadd.f32 %v1068, %v1255
          %v1257 = vpop.f32.mrb[0].mxu0
          %v1258 = vpop.f32.mrb[0].mxu0
          %v1259 = vadd.f32 %v1068, %v1258
          %v1260 = vpop.f32.mrb[0].mxu0
          %1261 = vmatprep.mubr.bf16.mxu0 0
          %1262 = vmatmul.mubr.bf16.gmra.mrb[0].mxu0 %v1135
          %v1263 = vpop.f32.mrb[0].mxu0
          %v1264 = vadd.f32 %v1068, %v1263
          %v1265 = vpop.f32.mrb[0].mxu0
          %v1266 = vpop.f32.mrb[0].mxu0
          %v1267 = vadd.f32 %v1068, %v1266
          %v1268 = vpop.f32.mrb[0].mxu0
          %1269 = vmatprep.mubr.bf16.mxu0 0
          %1270 = vmatmul.mubr.bf16.gmra.mrb[0].mxu0 %v1136
          %v1271 = vpop.f32.mrb[0].mxu0
          %v1272 = vadd.f32 %v1068, %v1271
          %v1273 = vpop.f32.mrb[0].mxu0
          %v1274 = vpop.f32.mrb[0].mxu0
          %v1275 = vadd.f32 %v1068, %v1274
          %v1276 = vpop.f32.mrb[0].mxu0
          %1277 = vmatprep.mubr.bf16.mxu0 0
          %1278 = vmatmul.mubr.bf16.gmra.mrb[0].mxu0 %v1137
          %v1279 = vpop.f32.mrb[0].mxu0
          %v1280 = vadd.f32 %v1068, %v1279
          %v1281 = vpop.f32.mrb[0].mxu0
          %v1282 = vpop.f32.mrb[0].mxu0
          %v1283 = vadd.f32 %v1068, %v1282
          %v1284 = vpop.f32.mrb[0].mxu0
          %1285 = vmatprep.mubr.bf16.mxu0 0
          %1286 = vmatmul.mubr.bf16.gmra.mrb[0].mxu0 %v1138
          %v1287 = vpop.f32.mrb[0].mxu0
          %v1288 = vadd.f32 %v1068, %v1287
          %v1289 = vpop.f32.mrb[0].mxu0
          %v1290 = vpop.f32.mrb[0].mxu0
          %v1291 = vadd.f32 %v1068, %v1290
          %v1292 = vpop.f32.mrb[0].mxu0
          %1293 = vmatprep.mubr.bf16.mxu0 0
          %1294 = vmatmul.mubr.bf16.gmra.mrb[0].mxu0 %v1139
          %v1295 = vpop.f32.mrb[0].mxu0
          %v1296 = vadd.f32 %v1068, %v1295
          %v1297 = vpop.f32.mrb[0].mxu0
          %v1298 = vpop.f32.mrb[0].mxu0
          %v1299 = vadd.f32 %v1068, %v1298
          %v1300 = vpop.f32.mrb[0].mxu0
          %1301 = vmatprep.mubr.bf16.mxu0 0
          %1302 = vmatmul.mubr.bf16.gmra.mrb[0].mxu0 %v1140
          %v1303 = vpop.f32.mrb[0].mxu0
          %v1304 = vadd.f32 %v1068, %v1303
          %v1305 = vpop.f32.mrb[0].mxu0
          %v1306 = vpop.f32.mrb[0].mxu0
          %v1307 = vadd.f32 %v1068, %v1306
          %v1308 = vpop.f32.mrb[0].mxu0
          %1309 = vmatprep.mubr.bf16.mxu0 0
          %1310 = vmatmul.mubr.bf16.gmra.mrb[0].mxu0 %v1141
          %v1311 = vpop.f32.mrb[0].mxu0
          %v1312 = vadd.f32 %v1068, %v1311
          %v1313 = vpop.f32.mrb[0].mxu0
          %v1314 = vpop.f32.mrb[0].mxu0
          %v1315 = vadd.f32 %v1068, %v1314
          %v1316 = vpop.f32.mrb[0].mxu0
          %1317 = vmatprep.mubr.bf16.mxu0 0
          %1318 = vmatmul.mubr.bf16.gmra.mrb[0].mxu0 %v1142
          %v1319 = vpop.f32.mrb[0].mxu0
          %v1320 = vadd.f32 %v1068, %v1319
          %v1321 = vpop.f32.mrb[0].mxu0
          %v1322 = vpop.f32.mrb[0].mxu0
          %v1323 = vadd.f32 %v1068, %v1322
          %v1324 = vpop.f32.mrb[0].mxu0
          %1325 = vmatprep.mubr.bf16.mxu0 0
          %1326 = vmatmul.mubr.bf16.gmra.mrb[0].mxu0 %v1143
          %v1327 = vpop.f32.mrb[0].mxu0
          %v1328 = vadd.f32 %v1068, %v1327
          %v1329 = vpop.f32.mrb[0].mxu0
          %v1330 = vpop.f32.mrb[0].mxu0
          %v1331 = vadd.f32 %v1068, %v1330
          %v1332 = vpop.f32.mrb[0].mxu0
          %1333 = vmatprep.mubr.bf16.mxu0 0
          %1334 = vmatmul.mubr.bf16.gmra.mrb[0].mxu0 %v1144
          %v1335 = vpop.f32.mrb[0].mxu0
          %v1336 = vadd.f32 %v1068, %v1335
          %v1337 = vpop.f32.mrb[0].mxu0
          %v1338 = vpop.f32.mrb[0].mxu0
          %v1339 = vadd.f32 %v1068, %v1338
          %v1340 = vpop.f32.mrb[0].mxu0
          %1341 = vmatprep.mubr.bf16.mxu0 0
          %1342 = vmatmul.mubr.bf16.gmra.mrb[0].mxu0 %v1145
          %v1343 = vpop.f32.mrb[0].mxu0
          %v1344 = vadd.f32 %v1068, %v1343
          %v1345 = vpop.f32.mrb[0].mxu0
          %v1346 = vpop.f32.mrb[0].mxu0
          %v1347 = vadd.f32 %v1068, %v1346
          %v1348 = vpop.f32.mrb[0].mxu0
          %1349 = vmatprep.mubr.bf16.mxu0 0
          %1350 = vmatmul.mubr.bf16.gmra.mrb[0].mxu0 %v1146
          %v1351 = vpop.f32.mrb[0].mxu0
          %v1352 = vadd.f32 %v1068, %v1351
          %v1353 = vpop.f32.mrb[0].mxu0
          %v1354 = vpop.f32.mrb[0].mxu0
          %v1355 = vadd.f32 %v1068, %v1354
          %v1356 = vpop.f32.mrb[0].mxu0
          %1357 = vmatprep.mubr.bf16.mxu0 0
          %1358 = vmatmul.mubr.bf16.gmra.mrb[0].mxu0 %v1147
          %v1359 = vpop.f32.mrb[0].mxu0
          %v1360 = vadd.f32 %v1068, %v1359
          %v1361 = vpop.f32.mrb[0].mxu0
          %v1362 = vpop.f32.mrb[0].mxu0
          %v1363 = vadd.f32 %v1068, %v1362
          %v1364 = vpop.f32.mrb[0].mxu0
          %1365 = vmatprep.mubr.bf16.mxu0 0
          %1366 = vmatmul.mubr.bf16.gmra.mrb[0].mxu0 %v1148
          %v1367 = vpop.f32.mrb[0].mxu0
          %v1368 = vadd.f32 %v1068, %v1367
          %v1369 = vpop.f32.mrb[0].mxu0
          %v1370 = vpop.f32.mrb[0].mxu0
          %v1371 = vadd.f32 %v1068, %v1370
          %v1372 = vpop.f32.mrb[0].mxu0
          %1373 = vdwg.mxu0
          %v1374 = vmax.f32 %v1248, 0.0
          %v1375 = vmax.f32 %v1251, 0.0
          %v1376 = vmax.f32 %v1256, 0.0
          %v1377 = vmax.f32 %v1259, 0.0
          %v1378 = vmax.f32 %v1264, 0.0
          %v1379 = vmax.f32 %v1267, 0.0
          %v1380 = vmax.f32 %v1272, 0.0
          %v1381 = vmax.f32 %v1275, 0.0
          %v1382 = vmax.f32 %v1280, 0.0
          %v1383 = vmax.f32 %v1283, 0.0
          %v1384 = vmax.f32 %v1288, 0.0
          %v1385 = vmax.f32 %v1291, 0.0
          %v1386 = vmax.f32 %v1296, 0.0
          %v1387 = vmax.f32 %v1299, 0.0
          %v1388 = vmax.f32 %v1304, 0.0
          %v1389 = vmax.f32 %v1307, 0.0
          %v1390 = vmax.f32 %v1312, 0.0
          %v1391 = vmax.f32 %v1315, 0.0
          %v1392 = vmax.f32 %v1320, 0.0
          %v1393 = vmax.f32 %v1323, 0.0
          %v1394 = vmax.f32 %v1328, 0.0
          %v1395 = vmax.f32 %v1331, 0.0
          %v1396 = vmax.f32 %v1336, 0.0
          %v1397 = vmax.f32 %v1339, 0.0
          %v1398 = vmax.f32 %v1344, 0.0
          %v1399 = vmax.f32 %v1347, 0.0
          %v1400 = vmax.f32 %v1352, 0.0
          %v1401 = vmax.f32 %v1355, 0.0
          %v1402 = vmax.f32 %v1360, 0.0
          %v1403 = vmax.f32 %v1363, 0.0
          %v1404 = vmax.f32 %v1368, 0.0
          %v1405 = vmax.f32 %v1371, 0.0
          %1406 = vadd.xlane.f32.xlu0 %v1374
          %v1407 = vpop.xlane.xlu0 %1406
          %1408 = vadd.xlane.f32.xlu0 %v1375
          %v1409 = vpop.xlane.xlu0 %1408
          %1410 = vadd.xlane.f32.xlu0 %v1376
          %v1411 = vpop.xlane.xlu0 %1410
          %1412 = vadd.xlane.f32.xlu0 %v1377
          %v1413 = vpop.xlane.xlu0 %1412
          %1414 = vadd.xlane.f32.xlu0 %v1378
          %v1415 = vpop.xlane.xlu0 %1414
          %1416 = vadd.xlane.f32.xlu0 %v1379
          %v1417 = vpop.xlane.xlu0 %1416
          %1418 = vadd.xlane.f32.xlu0 %v1380
          %v1419 = vpop.xlane.xlu0 %1418
          %1420 = vadd.xlane.f32.xlu0 %v1381
          %v1421 = vpop.xlane.xlu0 %1420
          %1422 = vadd.xlane.f32.xlu0 %v1382
          %v1423 = vpop.xlane.xlu0 %1422
          %1424 = vadd.xlane.f32.xlu0 %v1383
          %v1425 = vpop.xlane.xlu0 %1424
          %1426 = vadd.xlane.f32.xlu0 %v1384
          %v1427 = vpop.xlane.xlu0 %1426
          %1428 = vadd.xlane.f32.xlu0 %v1385
          %v1429 = vpop.xlane.xlu0 %1428
          %1430 = vadd.xlane.f32.xlu0 %v1386
          %v1431 = vpop.xlane.xlu0 %1430
          %1432 = vadd.xlane.f32.xlu0 %v1387
          %v1433 = vpop.xlane.xlu0 %1432
          %1434 = vadd.xlane.f32.xlu0 %v1388
          %v1435 = vpop.xlane.xlu0 %1434
          %1436 = vadd.xlane.f32.xlu0 %v1389
          %v1437 = vpop.xlane.xlu0 %1436
          %1438 = vadd.xlane.f32.xlu0 %v1390
          %v1439 = vpop.xlane.xlu0 %1438
          %1440 = vadd.xlane.f32.xlu0 %v1391
          %v1441 = vpop.xlane.xlu0 %1440
          %1442 = vadd.xlane.f32.xlu0 %v1392
          %v1443 = vpop.xlane.xlu0 %1442
          %1444 = vadd.xlane.f32.xlu0 %v1393
          %v1445 = vpop.xlane.xlu0 %1444
          %1446 = vadd.xlane.f32.xlu0 %v1394
          %v1447 = vpop.xlane.xlu0 %1446
          %1448 = vadd.xlane.f32.xlu0 %v1395
          %v1449 = vpop.xlane.xlu0 %1448
          %1450 = vadd.xlane.f32.xlu0 %v1396
          %v1451 = vpop.xlane.xlu0 %1450
          %1452 = vadd.xlane.f32.xlu0 %v1397
          %v1453 = vpop.xlane.xlu0 %1452
          %1454 = vadd.xlane.f32.xlu0 %v1398
          %v1455 = vpop.xlane.xlu0 %1454
          %1456 = vadd.xlane.f32.xlu0 %v1399
          %v1457 = vpop.xlane.xlu0 %1456
          %1458 = vadd.xlane.f32.xlu0 %v1400
          %v1459 = vpop.xlane.xlu0 %1458
          %1460 = vadd.xlane.f32.xlu0 %v1401
          %v1461 = vpop.xlane.xlu0 %1460
          %1462 = vadd.xlane.f32.xlu0 %v1402
          %v1463 = vpop.xlane.xlu0 %1462
          %1464 = vadd.xlane.f32.xlu0 %v1403
          %v1465 = vpop.xlane.xlu0 %1464
          %1466 = vadd.xlane.f32.xlu0 %v1404
          %v1467 = vpop.xlane.xlu0 %1466
          %1468 = vadd.xlane.f32.xlu0 %v1405
          %v1469 = vpop.xlane.xlu0 %1468
          %v1470 = vmul.f32 %v1407, 0.0078125
          %v1471 = vmul.f32 %v1409, 0.0078125
          %v1472 = vmul.f32 %v1411, 0.0078125
          %v1473 = vmul.f32 %v1413, 0.0078125
          %v1474 = vmul.f32 %v1415, 0.0078125
          %v1475 = vmul.f32 %v1417, 0.0078125
          %v1476 = vmul.f32 %v1419, 0.0078125
          %v1477 = vmul.f32 %v1421, 0.0078125
          %v1478 = vmul.f32 %v1423, 0.0078125
          %v1479 = vmul.f32 %v1425, 0.0078125
          %v1480 = vmul.f32 %v1427, 0.0078125
          %v1481 = vmul.f32 %v1429, 0.0078125
          %v1482 = vmul.f32 %v1431, 0.0078125
          %v1483 = vmul.f32 %v1433, 0.0078125
          %v1484 = vmul.f32 %v1435, 0.0078125
          %v1485 = vmul.f32 %v1437, 0.0078125
          %v1486 = vmul.f32 %v1439, 0.0078125
          %v1487 = vmul.f32 %v1441, 0.0078125
          %v1488 = vmul.f32 %v1443, 0.0078125
          %v1489 = vmul.f32 %v1445, 0.0078125
          %v1490 = vmul.f32 %v1447, 0.0078125
          %v1491 = vmul.f32 %v1449, 0.0078125
          %v1492 = vmul.f32 %v1451, 0.0078125
          %v1493 = vmul.f32 %v1453, 0.0078125
          %v1494 = vmul.f32 %v1455, 0.0078125
          %v1495 = vmul.f32 %v1457, 0.0078125
          %v1496 = vmul.f32 %v1459, 0.0078125
          %v1497 = vmul.f32 %v1461, 0.0078125
          %v1498 = vmul.f32 %v1463, 0.0078125
          %v1499 = vmul.f32 %v1465, 0.0078125
          %v1500 = vmul.f32 %v1467, 0.0078125
          %v1501 = vmul.f32 %v1469, 0.0078125
          %v1502 = vmul.f32 %v1374, %v1374
          %v1503 = vmul.f32 %v1375, %v1375
          %v1504 = vmul.f32 %v1376, %v1376
          %v1505 = vmul.f32 %v1377, %v1377
          %v1506 = vmul.f32 %v1378, %v1378
          %v1507 = vmul.f32 %v1379, %v1379
          %v1508 = vmul.f32 %v1380, %v1380
          %v1509 = vmul.f32 %v1381, %v1381
          %v1510 = vmul.f32 %v1382, %v1382
          %v1511 = vmul.f32 %v1383, %v1383
          %v1512 = vmul.f32 %v1384, %v1384
          %v1513 = vmul.f32 %v1385, %v1385
          %v1514 = vmul.f32 %v1386, %v1386
          %v1515 = vmul.f32 %v1387, %v1387
          %v1516 = vmul.f32 %v1388, %v1388
          %v1517 = vmul.f32 %v1389, %v1389
          %v1518 = vmul.f32 %v1390, %v1390
          %v1519 = vmul.f32 %v1391, %v1391
          %v1520 = vmul.f32 %v1392, %v1392
          %v1521 = vmul.f32 %v1393, %v1393
          %v1522 = vmul.f32 %v1394, %v1394
          %v1523 = vmul.f32 %v1395, %v1395
          %v1524 = vmul.f32 %v1396, %v1396
          %v1525 = vmul.f32 %v1397, %v1397
          %v1526 = vmul.f32 %v1398, %v1398
          %v1527 = vmul.f32 %v1399, %v1399
          %v1528 = vmul.f32 %v1400, %v1400
          %v1529 = vmul.f32 %v1401, %v1401
          %v1530 = vmul.f32 %v1402, %v1402
          %v1531 = vmul.f32 %v1403, %v1403
          %v1532 = vmul.f32 %v1404, %v1404
          %v1533 = vmul.f32 %v1405, %v1405
          %1534 = vadd.xlane.f32.xlu0 %v1502
          %v1535 = vpop.xlane.xlu0 %1534
          %1536 = vadd.xlane.f32.xlu0 %v1503
          %v1537 = vpop.xlane.xlu0 %1536
          %1538 = vadd.xlane.f32.xlu0 %v1504
          %v1539 = vpop.xlane.xlu0 %1538
          %1540 = vadd.xlane.f32.xlu0 %v1505
          %v1541 = vpop.xlane.xlu0 %1540
          %1542 = vadd.xlane.f32.xlu0 %v1506
          %v1543 = vpop.xlane.xlu0 %1542
          %1544 = vadd.xlane.f32.xlu0 %v1507
          %v1545 = vpop.xlane.xlu0 %1544
          %1546 = vadd.xlane.f32.xlu0 %v1508
          %v1547 = vpop.xlane.xlu0 %1546
          %1548 = vadd.xlane.f32.xlu0 %v1509
          %v1549 = vpop.xlane.xlu0 %1548
          %1550 = vadd.xlane.f32.xlu0 %v1510
          %v1551 = vpop.xlane.xlu0 %1550
          %1552 = vadd.xlane.f32.xlu0 %v1511
          %v1553 = vpop.xlane.xlu0 %1552
          %1554 = vadd.xlane.f32.xlu0 %v1512
          %v1555 = vpop.xlane.xlu0 %1554
          %1556 = vadd.xlane.f32.xlu0 %v1513
          %v1557 = vpop.xlane.xlu0 %1556
          %1558 = vadd.xlane.f32.xlu0 %v1514
          %v1559 = vpop.xlane.xlu0 %1558
          %1560 = vadd.xlane.f32.xlu0 %v1515
          %v1561 = vpop.xlane.xlu0 %1560
          %1562 = vadd.xlane.f32.xlu0 %v1516
          %v1563 = vpop.xlane.xlu0 %1562
          %1564 = vadd.xlane.f32.xlu0 %v1517
          %v1565 = vpop.xlane.xlu0 %1564
          %1566 = vadd.xlane.f32.xlu0 %v1518
          %v1567 = vpop.xlane.xlu0 %1566
          %1568 = vadd.xlane.f32.xlu0 %v1519
          %v1569 = vpop.xlane.xlu0 %1568
          %1570 = vadd.xlane.f32.xlu0 %v1520
          %v1571 = vpop.xlane.xlu0 %1570
          %1572 = vadd.xlane.f32.xlu0 %v1521
          %v1573 = vpop.xlane.xlu0 %1572
          %1574 = vadd.xlane.f32.xlu0 %v1522
          %v1575 = vpop.xlane.xlu0 %1574
          %1576 = vadd.xlane.f32.xlu0 %v1523
          %v1577 = vpop.xlane.xlu0 %1576
          %1578 = vadd.xlane.f32.xlu0 %v1524
          %v1579 = vpop.xlane.xlu0 %1578
          %1580 = vadd.xlane.f32.xlu0 %v1525
          %v1581 = vpop.xlane.xlu0 %1580
          %1582 = vadd.xlane.f32.xlu0 %v1526
          %v1583 = vpop.xlane.xlu0 %1582
          %1584 = vadd.xlane.f32.xlu0 %v1527
          %v1585 = vpop.xlane.xlu0 %1584
          %1586 = vadd.xlane.f32.xlu0 %v1528
          %v1587 = vpop.xlane.xlu0 %1586
          %1588 = vadd.xlane.f32.xlu0 %v1529
          %v1589 = vpop.xlane.xlu0 %1588
          %1590 = vadd.xlane.f32.xlu0 %v1530
          %v1591 = vpop.xlane.xlu0 %1590
          %1592 = vadd.xlane.f32.xlu0 %v1531
          %v1593 = vpop.xlane.xlu0 %1592
          %1594 = vadd.xlane.f32.xlu0 %v1532
          %v1595 = vpop.xlane.xlu0 %1594
          %1596 = vadd.xlane.f32.xlu0 %v1533
          %v1597 = vpop.xlane.xlu0 %1596
          %v1598 = vmul.f32 %v1535, 0.0078125
          %v1599 = vmul.f32 %v1537, 0.0078125
          %v1600 = vmul.f32 %v1539, 0.0078125
          %v1601 = vmul.f32 %v1541, 0.0078125
          %v1602 = vmul.f32 %v1543, 0.0078125
          %v1603 = vmul.f32 %v1545, 0.0078125
          %v1604 = vmul.f32 %v1547, 0.0078125
          %v1605 = vmul.f32 %v1549, 0.0078125
          %v1606 = vmul.f32 %v1551, 0.0078125
          %v1607 = vmul.f32 %v1553, 0.0078125
          %v1608 = vmul.f32 %v1555, 0.0078125
          %v1609 = vmul.f32 %v1557, 0.0078125
          %v1610 = vmul.f32 %v1559, 0.0078125
          %v1611 = vmul.f32 %v1561, 0.0078125
          %v1612 = vmul.f32 %v1563, 0.0078125
          %v1613 = vmul.f32 %v1565, 0.0078125
          %v1614 = vmul.f32 %v1567, 0.0078125
          %v1615 = vmul.f32 %v1569, 0.0078125
          %v1616 = vmul.f32 %v1571, 0.0078125
          %v1617 = vmul.f32 %v1573, 0.0078125
          %v1618 = vmul.f32 %v1575, 0.0078125
          %v1619 = vmul.f32 %v1577, 0.0078125
          %v1620 = vmul.f32 %v1579, 0.0078125
          %v1621 = vmul.f32 %v1581, 0.0078125
          %v1622 = vmul.f32 %v1583, 0.0078125
          %v1623 = vmul.f32 %v1585, 0.0078125
          %v1624 = vmul.f32 %v1587, 0.0078125
          %v1625 = vmul.f32 %v1589, 0.0078125
          %v1626 = vmul.f32 %v1591, 0.0078125
          %v1627 = vmul.f32 %v1593, 0.0078125
          %v1628 = vmul.f32 %v1595, 0.0078125
          %v1629 = vmul.f32 %v1597, 0.0078125
          %v1630 = vmul.f32 %v1470, %v1470
          %v1631 = vmul.f32 %v1471, %v1471
          %v1632 = vmul.f32 %v1472, %v1472
          %v1633 = vmul.f32 %v1473, %v1473
          %v1634 = vmul.f32 %v1474, %v1474
          %v1635 = vmul.f32 %v1475, %v1475
          %v1636 = vmul.f32 %v1476, %v1476
          %v1637 = vmul.f32 %v1477, %v1477
          %v1638 = vmul.f32 %v1478, %v1478
          %v1639 = vmul.f32 %v1479, %v1479
          %v1640 = vmul.f32 %v1480, %v1480
          %v1641 = vmul.f32 %v1481, %v1481
          %v1642 = vmul.f32 %v1482, %v1482
          %v1643 = vmul.f32 %v1483, %v1483
          %v1644 = vmul.f32 %v1484, %v1484
          %v1645 = vmul.f32 %v1485, %v1485
          %v1646 = vmul.f32 %v1486, %v1486
          %v1647 = vmul.f32 %v1487, %v1487
          %v1648 = vmul.f32 %v1488, %v1488
          %v1649 = vmul.f32 %v1489, %v1489
          %v1650 = vmul.f32 %v1490, %v1490
          %v1651 = vmul.f32 %v1491, %v1491
          %v1652 = vmul.f32 %v1492, %v1492
          %v1653 = vmul.f32 %v1493, %v1493
          %v1654 = vmul.f32 %v1494, %v1494
          %v1655 = vmul.f32 %v1495, %v1495
          %v1656 = vmul.f32 %v1496, %v1496
          %v1657 = vmul.f32 %v1497, %v1497
          %v1658 = vmul.f32 %v1498, %v1498
          %v1659 = vmul.f32 %v1499, %v1499
          %v1660 = vmul.f32 %v1500, %v1500
          %v1661 = vmul.f32 %v1501, %v1501
          %v1662 = vsub.f32 %v1598, %v1630
          %v1663 = vsub.f32 %v1599, %v1631
          %v1664 = vsub.f32 %v1600, %v1632
          %v1665 = vsub.f32 %v1601, %v1633
          %v1666 = vsub.f32 %v1602, %v1634
          %v1667 = vsub.f32 %v1603, %v1635
          %v1668 = vsub.f32 %v1604, %v1636
          %v1669 = vsub.f32 %v1605, %v1637
          %v1670 = vsub.f32 %v1606, %v1638
          %v1671 = vsub.f32 %v1607, %v1639
          %v1672 = vsub.f32 %v1608, %v1640
          %v1673 = vsub.f32 %v1609, %v1641
          %v1674 = vsub.f32 %v1610, %v1642
          %v1675 = vsub.f32 %v1611, %v1643
          %v1676 = vsub.f32 %v1612, %v1644
          %v1677 = vsub.f32 %v1613, %v1645
          %v1678 = vsub.f32 %v1614, %v1646
          %v1679 = vsub.f32 %v1615, %v1647
          %v1680 = vsub.f32 %v1616, %v1648
          %v1681 = vsub.f32 %v1617, %v1649
          %v1682 = vsub.f32 %v1618, %v1650
          %v1683 = vsub.f32 %v1619, %v1651
          %v1684 = vsub.f32 %v1620, %v1652
          %v1685 = vsub.f32 %v1621, %v1653
          %v1686 = vsub.f32 %v1622, %v1654
          %v1687 = vsub.f32 %v1623, %v1655
          %v1688 = vsub.f32 %v1624, %v1656
          %v1689 = vsub.f32 %v1625, %v1657
          %v1690 = vsub.f32 %v1626, %v1658
          %v1691 = vsub.f32 %v1627, %v1659
          %v1692 = vsub.f32 %v1628, %v1660
          %v1693 = vsub.f32 %v1629, %v1661
          %v1694 = vmax.f32 %v1662, 0.0
          %v1695 = vmax.f32 %v1663, 0.0
          %v1696 = vmax.f32 %v1664, 0.0
          %v1697 = vmax.f32 %v1665, 0.0
          %v1698 = vmax.f32 %v1666, 0.0
          %v1699 = vmax.f32 %v1667, 0.0
          %v1700 = vmax.f32 %v1668, 0.0
          %v1701 = vmax.f32 %v1669, 0.0
          %v1702 = vmax.f32 %v1670, 0.0
          %v1703 = vmax.f32 %v1671, 0.0
          %v1704 = vmax.f32 %v1672, 0.0
          %v1705 = vmax.f32 %v1673, 0.0
          %v1706 = vmax.f32 %v1674, 0.0
          %v1707 = vmax.f32 %v1675, 0.0
          %v1708 = vmax.f32 %v1676, 0.0
          %v1709 = vmax.f32 %v1677, 0.0
          %v1710 = vmax.f32 %v1678, 0.0
          %v1711 = vmax.f32 %v1679, 0.0
          %v1712 = vmax.f32 %v1680, 0.0
          %v1713 = vmax.f32 %v1681, 0.0
          %v1714 = vmax.f32 %v1682, 0.0
          %v1715 = vmax.f32 %v1683, 0.0
          %v1716 = vmax.f32 %v1684, 0.0
          %v1717 = vmax.f32 %v1685, 0.0
          %v1718 = vmax.f32 %v1686, 0.0
          %v1719 = vmax.f32 %v1687, 0.0
          %v1720 = vmax.f32 %v1688, 0.0
          %v1721 = vmax.f32 %v1689, 0.0
          %v1722 = vmax.f32 %v1690, 0.0
          %v1723 = vmax.f32 %v1691, 0.0
          %v1724 = vmax.f32 %v1692, 0.0
          %v1725 = vmax.f32 %v1693, 0.0
          %v1726 = vadd.f32 %v1694, 1e-09
          %v1727 = vadd.f32 %v1695, 1e-09
          %v1728 = vadd.f32 %v1696, 1e-09
          %v1729 = vadd.f32 %v1697, 1e-09
          %v1730 = vadd.f32 %v1698, 1e-09
          %v1731 = vadd.f32 %v1699, 1e-09
          %v1732 = vadd.f32 %v1700, 1e-09
          %v1733 = vadd.f32 %v1701, 1e-09
          %v1734 = vadd.f32 %v1702, 1e-09
          %v1735 = vadd.f32 %v1703, 1e-09
          %v1736 = vadd.f32 %v1704, 1e-09
          %v1737 = vadd.f32 %v1705, 1e-09
          %v1738 = vadd.f32 %v1706, 1e-09
          %v1739 = vadd.f32 %v1707, 1e-09
          %v1740 = vadd.f32 %v1708, 1e-09
          %v1741 = vadd.f32 %v1709, 1e-09
          %v1742 = vadd.f32 %v1710, 1e-09
          %v1743 = vadd.f32 %v1711, 1e-09
          %v1744 = vadd.f32 %v1712, 1e-09
          %v1745 = vadd.f32 %v1713, 1e-09
          %v1746 = vadd.f32 %v1714, 1e-09
          %v1747 = vadd.f32 %v1715, 1e-09
          %v1748 = vadd.f32 %v1716, 1e-09
          %v1749 = vadd.f32 %v1717, 1e-09
          %v1750 = vadd.f32 %v1718, 1e-09
          %v1751 = vadd.f32 %v1719, 1e-09
          %v1752 = vadd.f32 %v1720, 1e-09
          %v1753 = vadd.f32 %v1721, 1e-09
          %v1754 = vadd.f32 %v1722, 1e-09
          %v1755 = vadd.f32 %v1723, 1e-09
          %v1756 = vadd.f32 %v1724, 1e-09
          %v1757 = vadd.f32 %v1725, 1e-09
          %v1758 = vsub.f32 %v1374, %v1470
          %v1759 = vsub.f32 %v1375, %v1471
          %v1760 = vsub.f32 %v1376, %v1472
          %v1761 = vsub.f32 %v1377, %v1473
          %v1762 = vsub.f32 %v1378, %v1474
          %v1763 = vsub.f32 %v1379, %v1475
          %v1764 = vsub.f32 %v1380, %v1476
          %v1765 = vsub.f32 %v1381, %v1477
          %v1766 = vsub.f32 %v1382, %v1478
          %v1767 = vsub.f32 %v1383, %v1479
          %v1768 = vsub.f32 %v1384, %v1480
          %v1769 = vsub.f32 %v1385, %v1481
          %v1770 = vsub.f32 %v1386, %v1482
          %v1771 = vsub.f32 %v1387, %v1483
          %v1772 = vsub.f32 %v1388, %v1484
          %v1773 = vsub.f32 %v1389, %v1485
          %v1774 = vsub.f32 %v1390, %v1486
          %v1775 = vsub.f32 %v1391, %v1487
          %v1776 = vsub.f32 %v1392, %v1488
          %v1777 = vsub.f32 %v1393, %v1489
          %v1778 = vsub.f32 %v1394, %v1490
          %v1779 = vsub.f32 %v1395, %v1491
          %v1780 = vsub.f32 %v1396, %v1492
          %v1781 = vsub.f32 %v1397, %v1493
          %v1782 = vsub.f32 %v1398, %v1494
          %v1783 = vsub.f32 %v1399, %v1495
          %v1784 = vsub.f32 %v1400, %v1496
          %v1785 = vsub.f32 %v1401, %v1497
          %v1786 = vsub.f32 %v1402, %v1498
          %v1787 = vsub.f32 %v1403, %v1499
          %v1788 = vsub.f32 %v1404, %v1500
          %v1789 = vsub.f32 %v1405, %v1501
          %v1790 = vlaneseq
          %v1791 = vshrl.u32 %v1790, 7
          %v1792 = vsub.s32 1, %v1791
          %v1793 = vrot.slane %v1016, %v1792
          %v1794 = vmul.f32 %v1758, %v1793
          %v1795 = vmul.f32 %v1759, %v1793
          %v1796 = vmul.f32 %v1760, %v1793
          %v1797 = vmul.f32 %v1761, %v1793
          %v1798 = vmul.f32 %v1762, %v1793
          %v1799 = vmul.f32 %v1763, %v1793
          %v1800 = vmul.f32 %v1764, %v1793
          %v1801 = vmul.f32 %v1765, %v1793
          %v1802 = vmul.f32 %v1766, %v1793
          %v1803 = vmul.f32 %v1767, %v1793
          %v1804 = vmul.f32 %v1768, %v1793
          %v1805 = vmul.f32 %v1769, %v1793
          %v1806 = vmul.f32 %v1770, %v1793
          %v1807 = vmul.f32 %v1771, %v1793
          %v1808 = vmul.f32 %v1772, %v1793
          %v1809 = vmul.f32 %v1773, %v1793
          %v1810 = vmul.f32 %v1774, %v1793
          %v1811 = vmul.f32 %v1775, %v1793
          %v1812 = vmul.f32 %v1776, %v1793
          %v1813 = vmul.f32 %v1777, %v1793
          %v1814 = vmul.f32 %v1778, %v1793
          %v1815 = vmul.f32 %v1779, %v1793
          %v1816 = vmul.f32 %v1780, %v1793
          %v1817 = vmul.f32 %v1781, %v1793
          %v1818 = vmul.f32 %v1782, %v1793
          %v1819 = vmul.f32 %v1783, %v1793
          %v1820 = vmul.f32 %v1784, %v1793
          %v1821 = vmul.f32 %v1785, %v1793
          %v1822 = vmul.f32 %v1786, %v1793
          %v1823 = vmul.f32 %v1787, %v1793
          %v1824 = vmul.f32 %v1788, %v1793
          %v1825 = vmul.f32 %v1789, %v1793
          %v1826 = vrsqrt.pop %v1726
          %v1827 = vrsqrt.pop %v1727
          %v1828 = vrsqrt.pop %v1728
          %v1829 = vrsqrt.pop %v1729
          %v1830 = vrsqrt.pop %v1730
          %v1831 = vrsqrt.pop %v1731
          %v1832 = vrsqrt.pop %v1732
          %v1833 = vrsqrt.pop %v1733
          %v1834 = vrsqrt.pop %v1734
          %v1835 = vrsqrt.pop %v1735
          %v1836 = vrsqrt.pop %v1736
          %v1837 = vrsqrt.pop %v1737
          %v1838 = vrsqrt.pop %v1738
          %v1839 = vrsqrt.pop %v1739
          %v1840 = vrsqrt.pop %v1740
          %v1841 = vrsqrt.pop %v1741
          %v1842 = vrsqrt.pop %v1742
          %v1843 = vrsqrt.pop %v1743
          %v1844 = vrsqrt.pop %v1744
          %v1845 = vrsqrt.pop %v1745
          %v1846 = vrsqrt.pop %v1746
          %v1847 = vrsqrt.pop %v1747
          %v1848 = vrsqrt.pop %v1748
          %v1849 = vrsqrt.pop %v1749
          %v1850 = vrsqrt.pop %v1750
          %v1851 = vrsqrt.pop %v1751
          %v1852 = vrsqrt.pop %v1752
          %v1853 = vrsqrt.pop %v1753
          %v1854 = vrsqrt.pop %v1754
          %v1855 = vrsqrt.pop %v1755
          %v1856 = vrsqrt.pop %v1756
          %v1857 = vrsqrt.pop %v1757
          %v1858 = vmul.f32 %v1794, %v1826
          %v1859 = vmul.f32 %v1795, %v1827
          %v1860 = vmul.f32 %v1796, %v1828
          %v1861 = vmul.f32 %v1797, %v1829
          %v1862 = vmul.f32 %v1798, %v1830
          %v1863 = vmul.f32 %v1799, %v1831
          %v1864 = vmul.f32 %v1800, %v1832
          %v1865 = vmul.f32 %v1801, %v1833
          %v1866 = vmul.f32 %v1802, %v1834
          %v1867 = vmul.f32 %v1803, %v1835
          %v1868 = vmul.f32 %v1804, %v1836
          %v1869 = vmul.f32 %v1805, %v1837
          %v1870 = vmul.f32 %v1806, %v1838
          %v1871 = vmul.f32 %v1807, %v1839
          %v1872 = vmul.f32 %v1808, %v1840
          %v1873 = vmul.f32 %v1809, %v1841
          %v1874 = vmul.f32 %v1810, %v1842
          %v1875 = vmul.f32 %v1811, %v1843
          %v1876 = vmul.f32 %v1812, %v1844
          %v1877 = vmul.f32 %v1813, %v1845
          %v1878 = vmul.f32 %v1814, %v1846
          %v1879 = vmul.f32 %v1815, %v1847
          %v1880 = vmul.f32 %v1816, %v1848
          %v1881 = vmul.f32 %v1817, %v1849
          %v1882 = vmul.f32 %v1818, %v1850
          %v1883 = vmul.f32 %v1819, %v1851
          %v1884 = vmul.f32 %v1820, %v1852
          %v1885 = vmul.f32 %v1821, %v1853
          %v1886 = vmul.f32 %v1822, %v1854
          %v1887 = vmul.f32 %v1823, %v1855
          %v1888 = vmul.f32 %v1824, %v1856
          %v1889 = vmul.f32 %v1825, %v1857
          %v1890 = vlaneseq
          %v1891 = vshrl.u32 %v1890, 7
          %v1892 = vsub.s32 2, %v1891
          %v1893 = vrot.slane %v1016, %v1892
          %v1894 = vadd.f32 %v1858, %v1893
          %v1895 = vadd.f32 %v1859, %v1893
          %v1896 = vadd.f32 %v1860, %v1893
          %v1897 = vadd.f32 %v1861, %v1893
          %v1898 = vadd.f32 %v1862, %v1893
          %v1899 = vadd.f32 %v1863, %v1893
          %v1900 = vadd.f32 %v1864, %v1893
          %v1901 = vadd.f32 %v1865, %v1893
          %v1902 = vadd.f32 %v1866, %v1893
          %v1903 = vadd.f32 %v1867, %v1893
          %v1904 = vadd.f32 %v1868, %v1893
          %v1905 = vadd.f32 %v1869, %v1893
          %v1906 = vadd.f32 %v1870, %v1893
          %v1907 = vadd.f32 %v1871, %v1893
          %v1908 = vadd.f32 %v1872, %v1893
          %v1909 = vadd.f32 %v1873, %v1893
          %v1910 = vadd.f32 %v1874, %v1893
          %v1911 = vadd.f32 %v1875, %v1893
          %v1912 = vadd.f32 %v1876, %v1893
          %v1913 = vadd.f32 %v1877, %v1893
          %v1914 = vadd.f32 %v1878, %v1893
          %v1915 = vadd.f32 %v1879, %v1893
          %v1916 = vadd.f32 %v1880, %v1893
          %v1917 = vadd.f32 %v1881, %v1893
          %v1918 = vadd.f32 %v1882, %v1893
          %v1919 = vadd.f32 %v1883, %v1893
          %v1920 = vadd.f32 %v1884, %v1893
          %v1921 = vadd.f32 %v1885, %v1893
          %v1922 = vadd.f32 %v1886, %v1893
          %v1923 = vadd.f32 %v1887, %v1893
          %v1924 = vadd.f32 %v1888, %v1893
          %v1925 = vadd.f32 %v1889, %v1893
          %v1926 = vld [vmem:[#allocation2] sm:$0xff]
          %v1927 = vld [vmem:[#allocation2 + $0x8] sm:$0xff]
          %v1928 = vld [vmem:[#allocation2 + $0x10] sm:$0xff]
          %v1929 = vld [vmem:[#allocation2 + $0x18] sm:$0xff]
          %v1930 = vld [vmem:[#allocation2 + $0x20] sm:$0xff]
          %v1931 = vld [vmem:[#allocation2 + $0x28] sm:$0xff]
          %v1932 = vld [vmem:[#allocation2 + $0x30] sm:$0xff]
          %v1933 = vld [vmem:[#allocation2 + $0x38] sm:$0xff]
          %v1934 = vld [vmem:[#allocation2 + $0x40] sm:$0xff]
          %v1935 = vld [vmem:[#allocation2 + $0x48] sm:$0xff]
          %v1936 = vld [vmem:[#allocation2 + $0x50] sm:$0xff]
          %v1937 = vld [vmem:[#allocation2 + $0x58] sm:$0xff]
          %v1938 = vld [vmem:[#allocation2 + $0x60] sm:$0xff]
          %v1939 = vld [vmem:[#allocation2 + $0x68] sm:$0xff]
          %v1940 = vld [vmem:[#allocation2 + $0x70] sm:$0xff]
          %v1941 = vld [vmem:[#allocation2 + $0x78] sm:$0xff]
          %v1942 = vld [vmem:[#allocation2 + $0x80] sm:$0xff]
          %v1943 = vld [vmem:[#allocation2 + $0x88] sm:$0xff]
          %v1944 = vld [vmem:[#allocation2 + $0x90] sm:$0xff]
          %v1945 = vld [vmem:[#allocation2 + $0x98] sm:$0xff]
          %v1946 = vld [vmem:[#allocation2 + $0xa0] sm:$0xff]
          %v1947 = vld [vmem:[#allocation2 + $0xa8] sm:$0xff]
          %v1948 = vld [vmem:[#allocation2 + $0xb0] sm:$0xff]
          %v1949 = vld [vmem:[#allocation2 + $0xb8] sm:$0xff]
          %v1950 = vld [vmem:[#allocation2 + $0xc0] sm:$0xff]
          %v1951 = vld [vmem:[#allocation2 + $0xc8] sm:$0xff]
          %v1952 = vld [vmem:[#allocation2 + $0xd0] sm:$0xff]
          %v1953 = vld [vmem:[#allocation2 + $0xd8] sm:$0xff]
          %v1954 = vld [vmem:[#allocation2 + $0xe0] sm:$0xff]
          %v1955 = vld [vmem:[#allocation2 + $0xe8] sm:$0xff]
          %v1956 = vld [vmem:[#allocation2 + $0xf0] sm:$0xff]
          %v1957 = vld [vmem:[#allocation2 + $0xf8] sm:$0xff]
          %v1958 = vpack.c.bf16 %v1927, %v1926
          %v1959 = vpack.c.bf16 %v1929, %v1928
          %v1960 = vpack.c.bf16 %v1931, %v1930
          %v1961 = vpack.c.bf16 %v1933, %v1932
          %v1962 = vpack.c.bf16 %v1935, %v1934
          %v1963 = vpack.c.bf16 %v1937, %v1936
          %v1964 = vpack.c.bf16 %v1939, %v1938
          %v1965 = vpack.c.bf16 %v1941, %v1940
          %v1966 = vpack.c.bf16 %v1943, %v1942
          %v1967 = vpack.c.bf16 %v1945, %v1944
          %v1968 = vpack.c.bf16 %v1947, %v1946
          %v1969 = vpack.c.bf16 %v1949, %v1948
          %v1970 = vpack.c.bf16 %v1951, %v1950
          %v1971 = vpack.c.bf16 %v1953, %v1952
          %v1972 = vpack.c.bf16 %v1955, %v1954
          %v1973 = vpack.c.bf16 %v1957, %v1956
          %v1974 = vld [vmem:[#allocation11] sm:$0xf]
          %v1975 = vld [vmem:[#allocation11 + $0x4] sm:$0xf]
          %v1976 = vld [vmem:[#allocation11 + $0x8] sm:$0xf]
          %v1977 = vld [vmem:[#allocation11 + $0xc] sm:$0xf]
          %v1978 = vld [vmem:[#allocation11 + $0x10] sm:$0xf]
          %v1979 = vld [vmem:[#allocation11 + $0x14] sm:$0xf]
          %v1980 = vld [vmem:[#allocation11 + $0x18] sm:$0xf]
          %v1981 = vld [vmem:[#allocation11 + $0x1c] sm:$0xf]
          %v1982 = vld [vmem:[#allocation11 + $0x20] sm:$0xf]
          %v1983 = vld [vmem:[#allocation11 + $0x24] sm:$0xf]
          %v1984 = vld [vmem:[#allocation11 + $0x28] sm:$0xf]
          %v1985 = vld [vmem:[#allocation11 + $0x2c] sm:$0xf]
          %v1986 = vld [vmem:[#allocation11 + $0x30] sm:$0xf]
          %v1987 = vld [vmem:[#allocation11 + $0x34] sm:$0xf]
          %v1988 = vld [vmem:[#allocation11 + $0x38] sm:$0xf]
          %v1989 = vld [vmem:[#allocation11 + $0x3c] sm:$0xf]
          %v1990 = vlaneseq
          %v1991 = vshrl.u32 %v1990, 7
          %v1992 = vsub.s32 3, %v1991
          %v1993 = vrot.slane %v1016, %v1992
          %v2010 = vunpack.c.l.b16 %v1974
          %v2011 = vunpack.c.l.b16 %v1975
          %v2012 = vunpack.c.l.b16 %v1976
          %v2013 = vunpack.c.l.b16 %v1977
          %v2014 = vunpack.c.l.b16 %v1978
          %v2015 = vunpack.c.l.b16 %v1979
          %v2016 = vunpack.c.l.b16 %v1980
          %v2017 = vunpack.c.l.b16 %v1981
          %v2018 = vunpack.c.l.b16 %v1982
          %v2019 = vunpack.c.l.b16 %v1983
          %v2020 = vunpack.c.l.b16 %v1984
          %v2021 = vunpack.c.l.b16 %v1985
          %v2022 = vunpack.c.l.b16 %v1986
          %v2023 = vunpack.c.l.b16 %v1987
          %v2024 = vunpack.c.l.b16 %v1988
          %v2025 = vunpack.c.l.b16 %v1989
          %v2026 = vpack.c.b16 %v2011, %v2010
          %v2027 = vpack.c.b16 %v2013, %v2012
          %v2028 = vpack.c.b16 %v2015, %v2014
          %v2029 = vpack.c.b16 %v2017, %v2016
          %v2030 = vpack.c.b16 %v2019, %v2018
          %v2031 = vpack.c.b16 %v2021, %v2020
          %v2032 = vpack.c.b16 %v2023, %v2022
          %v2033 = vpack.c.b16 %v2025, %v2024
          %2042 = vmatprep.subr.bf16.mxu0 0
          %2043 = vmatpush1.bf16.msra.mxu0 %v2026
          %2044 = vmatprep.subr.bf16.mxu0 0
          %2045 = vmatpush1.bf16.msra.mxu0 %v2027
          %2046 = vmatprep.subr.bf16.mxu0 0
          %2047 = vmatpush1.bf16.msra.mxu0 %v2028
          %2048 = vmatprep.subr.bf16.mxu0 0
          %2049 = vmatpush1.bf16.msra.mxu0 %v2029
          %2050 = vmatprep.subr.bf16.mxu0 0
          %2051 = vmatpush1.bf16.msra.mxu0 %v2030
          %2052 = vmatprep.subr.bf16.mxu0 0
          %2053 = vmatpush1.bf16.msra.mxu0 %v2031
          %2054 = vmatprep.subr.bf16.mxu0 0
          %2055 = vmatpush1.bf16.msra.mxu0 %v2032
          %2056 = vmatprep.subr.bf16.mxu0 0
          %2057 = vmatpush1.bf16.msra.mxu0 %v2033
          %2058 = vmatprep.subr.bf16.mxu0 0
          %2059 = vmatpush1.bf16.msra.mxu0 0
          %2060 = vmatprep.subr.bf16.mxu0 0
          %2061 = vmatpush1.bf16.msra.mxu0 0
          %2062 = vmatprep.subr.bf16.mxu0 0
          %2063 = vmatpush1.bf16.msra.mxu0 0
          %2064 = vmatprep.subr.bf16.mxu0 0
          %2065 = vmatpush1.bf16.msra.mxu0 0
          %2066 = vmatprep.subr.bf16.mxu0 0
          %2067 = vmatpush1.bf16.msra.mxu0 0
          %2068 = vmatprep.subr.bf16.mxu0 0
          %2069 = vmatpush1.bf16.msra.mxu0 0
          %2070 = vmatprep.subr.bf16.mxu0 0
          %2071 = vmatpush1.bf16.msra.mxu0 0
          %2072 = vmatprep.subr.bf16.mxu0 0
          %2073 = vmatpush1.bf16.msra.mxu0 0
          %2074 = vmatprep.mubr.bf16.mxu0 0
          %2075 = vmatmul.mubr.bf16.gmra.mrb[0].mxu0 %v1958
          %v2076 = vpop.f32.mrb[0].mxu0
          %v2077 = vadd.f32 %v1993, %v2076
          %v2078 = vpop.f32.mrb[0].mxu0
          %v2079 = vpop.f32.mrb[0].mxu0
          %v2080 = vadd.f32 %v1993, %v2079
          %v2081 = vpop.f32.mrb[0].mxu0
          %2082 = vmatprep.mubr.bf16.mxu0 0
          %2083 = vmatmul.mubr.bf16.gmra.mrb[0].mxu0 %v1959
          %v2084 = vpop.f32.mrb[0].mxu0
          %v2085 = vadd.f32 %v1993, %v2084
          %v2086 = vpop.f32.mrb[0].mxu0
          %v2087 = vpop.f32.mrb[0].mxu0
          %v2088 = vadd.f32 %v1993, %v2087
          %v2089 = vpop.f32.mrb[0].mxu0
          %2090 = vmatprep.mubr.bf16.mxu0 0
          %2091 = vmatmul.mubr.bf16.gmra.mrb[0].mxu0 %v1960
          %v2092 = vpop.f32.mrb[0].mxu0
          %v2093 = vadd.f32 %v1993, %v2092
          %v2094 = vpop.f32.mrb[0].mxu0
          %v2095 = vpop.f32.mrb[0].mxu0
          %v2096 = vadd.f32 %v1993, %v2095
          %v2097 = vpop.f32.mrb[0].mxu0
          %2098 = vmatprep.mubr.bf16.mxu0 0
          %2099 = vmatmul.mubr.bf16.gmra.mrb[0].mxu0 %v1961
          %v2100 = vpop.f32.mrb[0].mxu0
          %v2101 = vadd.f32 %v1993, %v2100
          %v2102 = vpop.f32.mrb[0].mxu0
          %v2103 = vpop.f32.mrb[0].mxu0
          %v2104 = vadd.f32 %v1993, %v2103
          %v2105 = vpop.f32.mrb[0].mxu0
          %2106 = vmatprep.mubr.bf16.mxu0 0
          %2107 = vmatmul.mubr.bf16.gmra.mrb[0].mxu0 %v1962
          %v2108 = vpop.f32.mrb[0].mxu0
          %v2109 = vadd.f32 %v1993, %v2108
          %v2110 = vpop.f32.mrb[0].mxu0
          %v2111 = vpop.f32.mrb[0].mxu0
          %v2112 = vadd.f32 %v1993, %v2111
          %v2113 = vpop.f32.mrb[0].mxu0
          %2114 = vmatprep.mubr.bf16.mxu0 0
          %2115 = vmatmul.mubr.bf16.gmra.mrb[0].mxu0 %v1963
          %v2116 = vpop.f32.mrb[0].mxu0
          %v2117 = vadd.f32 %v1993, %v2116
          %v2118 = vpop.f32.mrb[0].mxu0
          %v2119 = vpop.f32.mrb[0].mxu0
          %v2120 = vadd.f32 %v1993, %v2119
          %v2121 = vpop.f32.mrb[0].mxu0
          %2122 = vmatprep.mubr.bf16.mxu0 0
          %2123 = vmatmul.mubr.bf16.gmra.mrb[0].mxu0 %v1964
          %v2124 = vpop.f32.mrb[0].mxu0
          %v2125 = vadd.f32 %v1993, %v2124
          %v2126 = vpop.f32.mrb[0].mxu0
          %v2127 = vpop.f32.mrb[0].mxu0
          %v2128 = vadd.f32 %v1993, %v2127
          %v2129 = vpop.f32.mrb[0].mxu0
          %2130 = vmatprep.mubr.bf16.mxu0 0
          %2131 = vmatmul.mubr.bf16.gmra.mrb[0].mxu0 %v1965
          %v2132 = vpop.f32.mrb[0].mxu0
          %v2133 = vadd.f32 %v1993, %v2132
          %v2134 = vpop.f32.mrb[0].mxu0
          %v2135 = vpop.f32.mrb[0].mxu0
          %v2136 = vadd.f32 %v1993, %v2135
          %v2137 = vpop.f32.mrb[0].mxu0
          %2138 = vmatprep.mubr.bf16.mxu0 0
          %2139 = vmatmul.mubr.bf16.gmra.mrb[0].mxu0 %v1966
          %v2140 = vpop.f32.mrb[0].mxu0
          %v2141 = vadd.f32 %v1993, %v2140
          %v2142 = vpop.f32.mrb[0].mxu0
          %v2143 = vpop.f32.mrb[0].mxu0
          %v2144 = vadd.f32 %v1993, %v2143
          %v2145 = vpop.f32.mrb[0].mxu0
          %2146 = vmatprep.mubr.bf16.mxu0 0
          %2147 = vmatmul.mubr.bf16.gmra.mrb[0].mxu0 %v1967
          %v2148 = vpop.f32.mrb[0].mxu0
          %v2149 = vadd.f32 %v1993, %v2148
          %v2150 = vpop.f32.mrb[0].mxu0
          %v2151 = vpop.f32.mrb[0].mxu0
          %v2152 = vadd.f32 %v1993, %v2151
          %v2153 = vpop.f32.mrb[0].mxu0
          %2154 = vmatprep.mubr.bf16.mxu0 0
          %2155 = vmatmul.mubr.bf16.gmra.mrb[0].mxu0 %v1968
          %v2156 = vpop.f32.mrb[0].mxu0
          %v2157 = vadd.f32 %v1993, %v2156
          %v2158 = vpop.f32.mrb[0].mxu0
          %v2159 = vpop.f32.mrb[0].mxu0
          %v2160 = vadd.f32 %v1993, %v2159
          %v2161 = vpop.f32.mrb[0].mxu0
          %2162 = vmatprep.mubr.bf16.mxu0 0
          %2163 = vmatmul.mubr.bf16.gmra.mrb[0].mxu0 %v1969
          %v2164 = vpop.f32.mrb[0].mxu0
          %v2165 = vadd.f32 %v1993, %v2164
          %v2166 = vpop.f32.mrb[0].mxu0
          %v2167 = vpop.f32.mrb[0].mxu0
          %v2168 = vadd.f32 %v1993, %v2167
          %v2169 = vpop.f32.mrb[0].mxu0
          %2170 = vmatprep.mubr.bf16.mxu0 0
          %2171 = vmatmul.mubr.bf16.gmra.mrb[0].mxu0 %v1970
          %v2172 = vpop.f32.mrb[0].mxu0
          %v2173 = vadd.f32 %v1993, %v2172
          %v2174 = vpop.f32.mrb[0].mxu0
          %v2175 = vpop.f32.mrb[0].mxu0
          %v2176 = vadd.f32 %v1993, %v2175
          %v2177 = vpop.f32.mrb[0].mxu0
          %2178 = vmatprep.mubr.bf16.mxu0 0
          %2179 = vmatmul.mubr.bf16.gmra.mrb[0].mxu0 %v1971
          %v2180 = vpop.f32.mrb[0].mxu0
          %v2181 = vadd.f32 %v1993, %v2180
          %v2182 = vpop.f32.mrb[0].mxu0
          %v2183 = vpop.f32.mrb[0].mxu0
          %v2184 = vadd.f32 %v1993, %v2183
          %v2185 = vpop.f32.mrb[0].mxu0
          %2186 = vmatprep.mubr.bf16.mxu0 0
          %2187 = vmatmul.mubr.bf16.gmra.mrb[0].mxu0 %v1972
          %v2188 = vpop.f32.mrb[0].mxu0
          %v2189 = vadd.f32 %v1993, %v2188
          %v2190 = vpop.f32.mrb[0].mxu0
          %v2191 = vpop.f32.mrb[0].mxu0
          %v2192 = vadd.f32 %v1993, %v2191
          %v2193 = vpop.f32.mrb[0].mxu0
          %2194 = vmatprep.mubr.bf16.mxu0 0
          %2195 = vmatmul.mubr.bf16.gmra.mrb[0].mxu0 %v1973
          %v2196 = vpop.f32.mrb[0].mxu0
          %v2197 = vadd.f32 %v1993, %v2196
          %v2198 = vpop.f32.mrb[0].mxu0
          %v2199 = vpop.f32.mrb[0].mxu0
          %v2200 = vadd.f32 %v1993, %v2199
          %v2201 = vpop.f32.mrb[0].mxu0
          %2202 = vdwg.mxu0
          %v2203 = vmax.f32 %v2077, 0.0
          %v2204 = vmax.f32 %v2080, 0.0
          %v2205 = vmax.f32 %v2085, 0.0
          %v2206 = vmax.f32 %v2088, 0.0
          %v2207 = vmax.f32 %v2093, 0.0
          %v2208 = vmax.f32 %v2096, 0.0
          %v2209 = vmax.f32 %v2101, 0.0
          %v2210 = vmax.f32 %v2104, 0.0
          %v2211 = vmax.f32 %v2109, 0.0
          %v2212 = vmax.f32 %v2112, 0.0
          %v2213 = vmax.f32 %v2117, 0.0
          %v2214 = vmax.f32 %v2120, 0.0
          %v2215 = vmax.f32 %v2125, 0.0
          %v2216 = vmax.f32 %v2128, 0.0
          %v2217 = vmax.f32 %v2133, 0.0
          %v2218 = vmax.f32 %v2136, 0.0
          %v2219 = vmax.f32 %v2141, 0.0
          %v2220 = vmax.f32 %v2144, 0.0
          %v2221 = vmax.f32 %v2149, 0.0
          %v2222 = vmax.f32 %v2152, 0.0
          %v2223 = vmax.f32 %v2157, 0.0
          %v2224 = vmax.f32 %v2160, 0.0
          %v2225 = vmax.f32 %v2165, 0.0
          %v2226 = vmax.f32 %v2168, 0.0
          %v2227 = vmax.f32 %v2173, 0.0
          %v2228 = vmax.f32 %v2176, 0.0
          %v2229 = vmax.f32 %v2181, 0.0
          %v2230 = vmax.f32 %v2184, 0.0
          %v2231 = vmax.f32 %v2189, 0.0
          %v2232 = vmax.f32 %v2192, 0.0
          %v2233 = vmax.f32 %v2197, 0.0
          %v2234 = vmax.f32 %v2200, 0.0
          %2235 = vadd.xlane.f32.xlu0 %v2203
          %v2236 = vpop.xlane.xlu0 %2235
          %2237 = vadd.xlane.f32.xlu0 %v2204
          %v2238 = vpop.xlane.xlu0 %2237
          %2239 = vadd.xlane.f32.xlu0 %v2205
          %v2240 = vpop.xlane.xlu0 %2239
          %2241 = vadd.xlane.f32.xlu0 %v2206
          %v2242 = vpop.xlane.xlu0 %2241
          %2243 = vadd.xlane.f32.xlu0 %v2207
          %v2244 = vpop.xlane.xlu0 %2243
          %2245 = vadd.xlane.f32.xlu0 %v2208
          %v2246 = vpop.xlane.xlu0 %2245
          %2247 = vadd.xlane.f32.xlu0 %v2209
          %v2248 = vpop.xlane.xlu0 %2247
          %2249 = vadd.xlane.f32.xlu0 %v2210
          %v2250 = vpop.xlane.xlu0 %2249
          %2251 = vadd.xlane.f32.xlu0 %v2211
          %v2252 = vpop.xlane.xlu0 %2251
          %2253 = vadd.xlane.f32.xlu0 %v2212
          %v2254 = vpop.xlane.xlu0 %2253
          %2255 = vadd.xlane.f32.xlu0 %v2213
          %v2256 = vpop.xlane.xlu0 %2255
          %2257 = vadd.xlane.f32.xlu0 %v2214
          %v2258 = vpop.xlane.xlu0 %2257
          %2259 = vadd.xlane.f32.xlu0 %v2215
          %v2260 = vpop.xlane.xlu0 %2259
          %2261 = vadd.xlane.f32.xlu0 %v2216
          %v2262 = vpop.xlane.xlu0 %2261
          %2263 = vadd.xlane.f32.xlu0 %v2217
          %v2264 = vpop.xlane.xlu0 %2263
          %2265 = vadd.xlane.f32.xlu0 %v2218
          %v2266 = vpop.xlane.xlu0 %2265
          %2267 = vadd.xlane.f32.xlu0 %v2219
          %v2268 = vpop.xlane.xlu0 %2267
          %2269 = vadd.xlane.f32.xlu0 %v2220
          %v2270 = vpop.xlane.xlu0 %2269
          %2271 = vadd.xlane.f32.xlu0 %v2221
          %v2272 = vpop.xlane.xlu0 %2271
          %2273 = vadd.xlane.f32.xlu0 %v2222
          %v2274 = vpop.xlane.xlu0 %2273
          %2275 = vadd.xlane.f32.xlu0 %v2223
          %v2276 = vpop.xlane.xlu0 %2275
          %2277 = vadd.xlane.f32.xlu0 %v2224
          %v2278 = vpop.xlane.xlu0 %2277
          %2279 = vadd.xlane.f32.xlu0 %v2225
          %v2280 = vpop.xlane.xlu0 %2279
          %2281 = vadd.xlane.f32.xlu0 %v2226
          %v2282 = vpop.xlane.xlu0 %2281
          %2283 = vadd.xlane.f32.xlu0 %v2227
          %v2284 = vpop.xlane.xlu0 %2283
          %2285 = vadd.xlane.f32.xlu0 %v2228
          %v2286 = vpop.xlane.xlu0 %2285
          %2287 = vadd.xlane.f32.xlu0 %v2229
          %v2288 = vpop.xlane.xlu0 %2287
          %2289 = vadd.xlane.f32.xlu0 %v2230
          %v2290 = vpop.xlane.xlu0 %2289
          %2291 = vadd.xlane.f32.xlu0 %v2231
          %v2292 = vpop.xlane.xlu0 %2291
          %2293 = vadd.xlane.f32.xlu0 %v2232
          %v2294 = vpop.xlane.xlu0 %2293
          %2295 = vadd.xlane.f32.xlu0 %v2233
          %v2296 = vpop.xlane.xlu0 %2295
          %2297 = vadd.xlane.f32.xlu0 %v2234
          %v2298 = vpop.xlane.xlu0 %2297
          %v2299 = vmul.f32 %v2236, 0.0078125
          %v2300 = vmul.f32 %v2238, 0.0078125
          %v2301 = vmul.f32 %v2240, 0.0078125
          %v2302 = vmul.f32 %v2242, 0.0078125
          %v2303 = vmul.f32 %v2244, 0.0078125
          %v2304 = vmul.f32 %v2246, 0.0078125
          %v2305 = vmul.f32 %v2248, 0.0078125
          %v2306 = vmul.f32 %v2250, 0.0078125
          %v2307 = vmul.f32 %v2252, 0.0078125
          %v2308 = vmul.f32 %v2254, 0.0078125
          %v2309 = vmul.f32 %v2256, 0.0078125
          %v2310 = vmul.f32 %v2258, 0.0078125
          %v2311 = vmul.f32 %v2260, 0.0078125
          %v2312 = vmul.f32 %v2262, 0.0078125
          %v2313 = vmul.f32 %v2264, 0.0078125
          %v2314 = vmul.f32 %v2266, 0.0078125
          %v2315 = vmul.f32 %v2268, 0.0078125
          %v2316 = vmul.f32 %v2270, 0.0078125
          %v2317 = vmul.f32 %v2272, 0.0078125
          %v2318 = vmul.f32 %v2274, 0.0078125
          %v2319 = vmul.f32 %v2276, 0.0078125
          %v2320 = vmul.f32 %v2278, 0.0078125
          %v2321 = vmul.f32 %v2280, 0.0078125
          %v2322 = vmul.f32 %v2282, 0.0078125
          %v2323 = vmul.f32 %v2284, 0.0078125
          %v2324 = vmul.f32 %v2286, 0.0078125
          %v2325 = vmul.f32 %v2288, 0.0078125
          %v2326 = vmul.f32 %v2290, 0.0078125
          %v2327 = vmul.f32 %v2292, 0.0078125
          %v2328 = vmul.f32 %v2294, 0.0078125
          %v2329 = vmul.f32 %v2296, 0.0078125
          %v2330 = vmul.f32 %v2298, 0.0078125
          %v2331 = vmul.f32 %v2203, %v2203
          %v2332 = vmul.f32 %v2204, %v2204
          %v2333 = vmul.f32 %v2205, %v2205
          %v2334 = vmul.f32 %v2206, %v2206
          %v2335 = vmul.f32 %v2207, %v2207
          %v2336 = vmul.f32 %v2208, %v2208
          %v2337 = vmul.f32 %v2209, %v2209
          %v2338 = vmul.f32 %v2210, %v2210
          %v2339 = vmul.f32 %v2211, %v2211
          %v2340 = vmul.f32 %v2212, %v2212
          %v2341 = vmul.f32 %v2213, %v2213
          %v2342 = vmul.f32 %v2214, %v2214
          %v2343 = vmul.f32 %v2215, %v2215
          %v2344 = vmul.f32 %v2216, %v2216
          %v2345 = vmul.f32 %v2217, %v2217
          %v2346 = vmul.f32 %v2218, %v2218
          %v2347 = vmul.f32 %v2219, %v2219
          %v2348 = vmul.f32 %v2220, %v2220
          %v2349 = vmul.f32 %v2221, %v2221
          %v2350 = vmul.f32 %v2222, %v2222
          %v2351 = vmul.f32 %v2223, %v2223
          %v2352 = vmul.f32 %v2224, %v2224
          %v2353 = vmul.f32 %v2225, %v2225
          %v2354 = vmul.f32 %v2226, %v2226
          %v2355 = vmul.f32 %v2227, %v2227
          %v2356 = vmul.f32 %v2228, %v2228
          %v2357 = vmul.f32 %v2229, %v2229
          %v2358 = vmul.f32 %v2230, %v2230
          %v2359 = vmul.f32 %v2231, %v2231
          %v2360 = vmul.f32 %v2232, %v2232
          %v2361 = vmul.f32 %v2233, %v2233
          %v2362 = vmul.f32 %v2234, %v2234
          %2363 = vadd.xlane.f32.xlu0 %v2331
          %v2364 = vpop.xlane.xlu0 %2363
          %2365 = vadd.xlane.f32.xlu0 %v2332
          %v2366 = vpop.xlane.xlu0 %2365
          %2367 = vadd.xlane.f32.xlu0 %v2333
          %v2368 = vpop.xlane.xlu0 %2367
          %2369 = vadd.xlane.f32.xlu0 %v2334
          %v2370 = vpop.xlane.xlu0 %2369
          %2371 = vadd.xlane.f32.xlu0 %v2335
          %v2372 = vpop.xlane.xlu0 %2371
          %2373 = vadd.xlane.f32.xlu0 %v2336
          %v2374 = vpop.xlane.xlu0 %2373
          %2375 = vadd.xlane.f32.xlu0 %v2337
          %v2376 = vpop.xlane.xlu0 %2375
          %2377 = vadd.xlane.f32.xlu0 %v2338
          %v2378 = vpop.xlane.xlu0 %2377
          %2379 = vadd.xlane.f32.xlu0 %v2339
          %v2380 = vpop.xlane.xlu0 %2379
          %2381 = vadd.xlane.f32.xlu0 %v2340
          %v2382 = vpop.xlane.xlu0 %2381
          %2383 = vadd.xlane.f32.xlu0 %v2341
          %v2384 = vpop.xlane.xlu0 %2383
          %2385 = vadd.xlane.f32.xlu0 %v2342
          %v2386 = vpop.xlane.xlu0 %2385
          %2387 = vadd.xlane.f32.xlu0 %v2343
          %v2388 = vpop.xlane.xlu0 %2387
          %2389 = vadd.xlane.f32.xlu0 %v2344
          %v2390 = vpop.xlane.xlu0 %2389
          %2391 = vadd.xlane.f32.xlu0 %v2345
          %v2392 = vpop.xlane.xlu0 %2391
          %2393 = vadd.xlane.f32.xlu0 %v2346
          %v2394 = vpop.xlane.xlu0 %2393
          %2395 = vadd.xlane.f32.xlu0 %v2347
          %v2396 = vpop.xlane.xlu0 %2395
          %2397 = vadd.xlane.f32.xlu0 %v2348
          %v2398 = vpop.xlane.xlu0 %2397
          %2399 = vadd.xlane.f32.xlu0 %v2349
          %v2400 = vpop.xlane.xlu0 %2399
          %2401 = vadd.xlane.f32.xlu0 %v2350
          %v2402 = vpop.xlane.xlu0 %2401
          %2403 = vadd.xlane.f32.xlu0 %v2351
          %v2404 = vpop.xlane.xlu0 %2403
          %2405 = vadd.xlane.f32.xlu0 %v2352
          %v2406 = vpop.xlane.xlu0 %2405
          %2407 = vadd.xlane.f32.xlu0 %v2353
          %v2408 = vpop.xlane.xlu0 %2407
          %2409 = vadd.xlane.f32.xlu0 %v2354
          %v2410 = vpop.xlane.xlu0 %2409
          %2411 = vadd.xlane.f32.xlu0 %v2355
          %v2412 = vpop.xlane.xlu0 %2411
          %2413 = vadd.xlane.f32.xlu0 %v2356
          %v2414 = vpop.xlane.xlu0 %2413
          %2415 = vadd.xlane.f32.xlu0 %v2357
          %v2416 = vpop.xlane.xlu0 %2415
          %2417 = vadd.xlane.f32.xlu0 %v2358
          %v2418 = vpop.xlane.xlu0 %2417
          %2419 = vadd.xlane.f32.xlu0 %v2359
          %v2420 = vpop.xlane.xlu0 %2419
          %2421 = vadd.xlane.f32.xlu0 %v2360
          %v2422 = vpop.xlane.xlu0 %2421
          %2423 = vadd.xlane.f32.xlu0 %v2361
          %v2424 = vpop.xlane.xlu0 %2423
          %2425 = vadd.xlane.f32.xlu0 %v2362
          %v2426 = vpop.xlane.xlu0 %2425
          %v2427 = vmul.f32 %v2364, 0.0078125
          %v2428 = vmul.f32 %v2366, 0.0078125
          %v2429 = vmul.f32 %v2368, 0.0078125
          %v2430 = vmul.f32 %v2370, 0.0078125
          %v2431 = vmul.f32 %v2372, 0.0078125
          %v2432 = vmul.f32 %v2374, 0.0078125
          %v2433 = vmul.f32 %v2376, 0.0078125
          %v2434 = vmul.f32 %v2378, 0.0078125
          %v2435 = vmul.f32 %v2380, 0.0078125
          %v2436 = vmul.f32 %v2382, 0.0078125
          %v2437 = vmul.f32 %v2384, 0.0078125
          %v2438 = vmul.f32 %v2386, 0.0078125
          %v2439 = vmul.f32 %v2388, 0.0078125
          %v2440 = vmul.f32 %v2390, 0.0078125
          %v2441 = vmul.f32 %v2392, 0.0078125
          %v2442 = vmul.f32 %v2394, 0.0078125
          %v2443 = vmul.f32 %v2396, 0.0078125
          %v2444 = vmul.f32 %v2398, 0.0078125
          %v2445 = vmul.f32 %v2400, 0.0078125
          %v2446 = vmul.f32 %v2402, 0.0078125
          %v2447 = vmul.f32 %v2404, 0.0078125
          %v2448 = vmul.f32 %v2406, 0.0078125
          %v2449 = vmul.f32 %v2408, 0.0078125
          %v2450 = vmul.f32 %v2410, 0.0078125
          %v2451 = vmul.f32 %v2412, 0.0078125
          %v2452 = vmul.f32 %v2414, 0.0078125
          %v2453 = vmul.f32 %v2416, 0.0078125
          %v2454 = vmul.f32 %v2418, 0.0078125
          %v2455 = vmul.f32 %v2420, 0.0078125
          %v2456 = vmul.f32 %v2422, 0.0078125
          %v2457 = vmul.f32 %v2424, 0.0078125
          %v2458 = vmul.f32 %v2426, 0.0078125
          %v2459 = vmul.f32 %v2299, %v2299
          %v2460 = vmul.f32 %v2300, %v2300
          %v2461 = vmul.f32 %v2301, %v2301
          %v2462 = vmul.f32 %v2302, %v2302
          %v2463 = vmul.f32 %v2303, %v2303
          %v2464 = vmul.f32 %v2304, %v2304
          %v2465 = vmul.f32 %v2305, %v2305
          %v2466 = vmul.f32 %v2306, %v2306
          %v2467 = vmul.f32 %v2307, %v2307
          %v2468 = vmul.f32 %v2308, %v2308
          %v2469 = vmul.f32 %v2309, %v2309
          %v2470 = vmul.f32 %v2310, %v2310
          %v2471 = vmul.f32 %v2311, %v2311
          %v2472 = vmul.f32 %v2312, %v2312
          %v2473 = vmul.f32 %v2313, %v2313
          %v2474 = vmul.f32 %v2314, %v2314
          %v2475 = vmul.f32 %v2315, %v2315
          %v2476 = vmul.f32 %v2316, %v2316
          %v2477 = vmul.f32 %v2317, %v2317
          %v2478 = vmul.f32 %v2318, %v2318
          %v2479 = vmul.f32 %v2319, %v2319
          %v2480 = vmul.f32 %v2320, %v2320
          %v2481 = vmul.f32 %v2321, %v2321
          %v2482 = vmul.f32 %v2322, %v2322
          %v2483 = vmul.f32 %v2323, %v2323
          %v2484 = vmul.f32 %v2324, %v2324
          %v2485 = vmul.f32 %v2325, %v2325
          %v2486 = vmul.f32 %v2326, %v2326
          %v2487 = vmul.f32 %v2327, %v2327
          %v2488 = vmul.f32 %v2328, %v2328
          %v2489 = vmul.f32 %v2329, %v2329
          %v2490 = vmul.f32 %v2330, %v2330
          %v2491 = vsub.f32 %v2427, %v2459
          %v2492 = vsub.f32 %v2428, %v2460
          %v2493 = vsub.f32 %v2429, %v2461
          %v2494 = vsub.f32 %v2430, %v2462
          %v2495 = vsub.f32 %v2431, %v2463
          %v2496 = vsub.f32 %v2432, %v2464
          %v2497 = vsub.f32 %v2433, %v2465
          %v2498 = vsub.f32 %v2434, %v2466
          %v2499 = vsub.f32 %v2435, %v2467
          %v2500 = vsub.f32 %v2436, %v2468
          %v2501 = vsub.f32 %v2437, %v2469
          %v2502 = vsub.f32 %v2438, %v2470
          %v2503 = vsub.f32 %v2439, %v2471
          %v2504 = vsub.f32 %v2440, %v2472
          %v2505 = vsub.f32 %v2441, %v2473
          %v2506 = vsub.f32 %v2442, %v2474
          %v2507 = vsub.f32 %v2443, %v2475
          %v2508 = vsub.f32 %v2444, %v2476
          %v2509 = vsub.f32 %v2445, %v2477
          %v2510 = vsub.f32 %v2446, %v2478
          %v2511 = vsub.f32 %v2447, %v2479
          %v2512 = vsub.f32 %v2448, %v2480
          %v2513 = vsub.f32 %v2449, %v2481
          %v2514 = vsub.f32 %v2450, %v2482
          %v2515 = vsub.f32 %v2451, %v2483
          %v2516 = vsub.f32 %v2452, %v2484
          %v2517 = vsub.f32 %v2453, %v2485
          %v2518 = vsub.f32 %v2454, %v2486
          %v2519 = vsub.f32 %v2455, %v2487
          %v2520 = vsub.f32 %v2456, %v2488
          %v2521 = vsub.f32 %v2457, %v2489
          %v2522 = vsub.f32 %v2458, %v2490
          %v2523 = vmax.f32 %v2491, 0.0
          %v2524 = vmax.f32 %v2492, 0.0
          %v2525 = vmax.f32 %v2493, 0.0
          %v2526 = vmax.f32 %v2494, 0.0
          %v2527 = vmax.f32 %v2495, 0.0
          %v2528 = vmax.f32 %v2496, 0.0
          %v2529 = vmax.f32 %v2497, 0.0
          %v2530 = vmax.f32 %v2498, 0.0
          %v2531 = vmax.f32 %v2499, 0.0
          %v2532 = vmax.f32 %v2500, 0.0
          %v2533 = vmax.f32 %v2501, 0.0
          %v2534 = vmax.f32 %v2502, 0.0
          %v2535 = vmax.f32 %v2503, 0.0
          %v2536 = vmax.f32 %v2504, 0.0
          %v2537 = vmax.f32 %v2505, 0.0
          %v2538 = vmax.f32 %v2506, 0.0
          %v2539 = vmax.f32 %v2507, 0.0
          %v2540 = vmax.f32 %v2508, 0.0
          %v2541 = vmax.f32 %v2509, 0.0
          %v2542 = vmax.f32 %v2510, 0.0
          %v2543 = vmax.f32 %v2511, 0.0
          %v2544 = vmax.f32 %v2512, 0.0
          %v2545 = vmax.f32 %v2513, 0.0
          %v2546 = vmax.f32 %v2514, 0.0
          %v2547 = vmax.f32 %v2515, 0.0
          %v2548 = vmax.f32 %v2516, 0.0
          %v2549 = vmax.f32 %v2517, 0.0
          %v2550 = vmax.f32 %v2518, 0.0
          %v2551 = vmax.f32 %v2519, 0.0
          %v2552 = vmax.f32 %v2520, 0.0
          %v2553 = vmax.f32 %v2521, 0.0
          %v2554 = vmax.f32 %v2522, 0.0
          %v2555 = vadd.f32 %v2523, 1e-09
          %v2556 = vadd.f32 %v2524, 1e-09
          %v2557 = vadd.f32 %v2525, 1e-09
          %v2558 = vadd.f32 %v2526, 1e-09
          %v2559 = vadd.f32 %v2527, 1e-09
          %v2560 = vadd.f32 %v2528, 1e-09
          %v2561 = vadd.f32 %v2529, 1e-09
          %v2562 = vadd.f32 %v2530, 1e-09
          %v2563 = vadd.f32 %v2531, 1e-09
          %v2564 = vadd.f32 %v2532, 1e-09
          %v2565 = vadd.f32 %v2533, 1e-09
          %v2566 = vadd.f32 %v2534, 1e-09
          %v2567 = vadd.f32 %v2535, 1e-09
          %v2568 = vadd.f32 %v2536, 1e-09
          %v2569 = vadd.f32 %v2537, 1e-09
          %v2570 = vadd.f32 %v2538, 1e-09
          %v2571 = vadd.f32 %v2539, 1e-09
          %v2572 = vadd.f32 %v2540, 1e-09
          %v2573 = vadd.f32 %v2541, 1e-09
          %v2574 = vadd.f32 %v2542, 1e-09
          %v2575 = vadd.f32 %v2543, 1e-09
          %v2576 = vadd.f32 %v2544, 1e-09
          %v2577 = vadd.f32 %v2545, 1e-09
          %v2578 = vadd.f32 %v2546, 1e-09
          %v2579 = vadd.f32 %v2547, 1e-09
          %v2580 = vadd.f32 %v2548, 1e-09
          %v2581 = vadd.f32 %v2549, 1e-09
          %v2582 = vadd.f32 %v2550, 1e-09
          %v2583 = vadd.f32 %v2551, 1e-09
          %v2584 = vadd.f32 %v2552, 1e-09
          %v2585 = vadd.f32 %v2553, 1e-09
          %v2586 = vadd.f32 %v2554, 1e-09
          %v2587 = vsub.f32 %v2203, %v2299
          %v2588 = vsub.f32 %v2204, %v2300
          %v2589 = vsub.f32 %v2205, %v2301
          %v2590 = vsub.f32 %v2206, %v2302
          %v2591 = vsub.f32 %v2207, %v2303
          %v2592 = vsub.f32 %v2208, %v2304
          %v2593 = vsub.f32 %v2209, %v2305
          %v2594 = vsub.f32 %v2210, %v2306
          %v2595 = vsub.f32 %v2211, %v2307
          %v2596 = vsub.f32 %v2212, %v2308
          %v2597 = vsub.f32 %v2213, %v2309
          %v2598 = vsub.f32 %v2214, %v2310
          %v2599 = vsub.f32 %v2215, %v2311
          %v2600 = vsub.f32 %v2216, %v2312
          %v2601 = vsub.f32 %v2217, %v2313
          %v2602 = vsub.f32 %v2218, %v2314
          %v2603 = vsub.f32 %v2219, %v2315
          %v2604 = vsub.f32 %v2220, %v2316
          %v2605 = vsub.f32 %v2221, %v2317
          %v2606 = vsub.f32 %v2222, %v2318
          %v2607 = vsub.f32 %v2223, %v2319
          %v2608 = vsub.f32 %v2224, %v2320
          %v2609 = vsub.f32 %v2225, %v2321
          %v2610 = vsub.f32 %v2226, %v2322
          %v2611 = vsub.f32 %v2227, %v2323
          %v2612 = vsub.f32 %v2228, %v2324
          %v2613 = vsub.f32 %v2229, %v2325
          %v2614 = vsub.f32 %v2230, %v2326
          %v2615 = vsub.f32 %v2231, %v2327
          %v2616 = vsub.f32 %v2232, %v2328
          %v2617 = vsub.f32 %v2233, %v2329
          %v2618 = vsub.f32 %v2234, %v2330
          %v2619 = vlaneseq
          %v2620 = vshrl.u32 %v2619, 7
          %v2621 = vsub.s32 4, %v2620
          %v2622 = vrot.slane %v1016, %v2621
          %v2623 = vmul.f32 %v2587, %v2622
          %v2624 = vmul.f32 %v2588, %v2622
          %v2625 = vmul.f32 %v2589, %v2622
          %v2626 = vmul.f32 %v2590, %v2622
          %v2627 = vmul.f32 %v2591, %v2622
          %v2628 = vmul.f32 %v2592, %v2622
          %v2629 = vmul.f32 %v2593, %v2622
          %v2630 = vmul.f32 %v2594, %v2622
          %v2631 = vmul.f32 %v2595, %v2622
          %v2632 = vmul.f32 %v2596, %v2622
          %v2633 = vmul.f32 %v2597, %v2622
          %v2634 = vmul.f32 %v2598, %v2622
          %v2635 = vmul.f32 %v2599, %v2622
          %v2636 = vmul.f32 %v2600, %v2622
          %v2637 = vmul.f32 %v2601, %v2622
          %v2638 = vmul.f32 %v2602, %v2622
          %v2639 = vmul.f32 %v2603, %v2622
          %v2640 = vmul.f32 %v2604, %v2622
          %v2641 = vmul.f32 %v2605, %v2622
          %v2642 = vmul.f32 %v2606, %v2622
          %v2643 = vmul.f32 %v2607, %v2622
          %v2644 = vmul.f32 %v2608, %v2622
          %v2645 = vmul.f32 %v2609, %v2622
          %v2646 = vmul.f32 %v2610, %v2622
          %v2647 = vmul.f32 %v2611, %v2622
          %v2648 = vmul.f32 %v2612, %v2622
          %v2649 = vmul.f32 %v2613, %v2622
          %v2650 = vmul.f32 %v2614, %v2622
          %v2651 = vmul.f32 %v2615, %v2622
          %v2652 = vmul.f32 %v2616, %v2622
          %v2653 = vmul.f32 %v2617, %v2622
          %v2654 = vmul.f32 %v2618, %v2622
          %v2655 = vrsqrt.pop %v2555
          %v2656 = vrsqrt.pop %v2556
          %v2657 = vrsqrt.pop %v2557
          %v2658 = vrsqrt.pop %v2558
          %v2659 = vrsqrt.pop %v2559
          %v2660 = vrsqrt.pop %v2560
          %v2661 = vrsqrt.pop %v2561
          %v2662 = vrsqrt.pop %v2562
          %v2663 = vrsqrt.pop %v2563
          %v2664 = vrsqrt.pop %v2564
          %v2665 = vrsqrt.pop %v2565
          %v2666 = vrsqrt.pop %v2566
          %v2667 = vrsqrt.pop %v2567
          %v2668 = vrsqrt.pop %v2568
          %v2669 = vrsqrt.pop %v2569
          %v2670 = vrsqrt.pop %v2570
          %v2671 = vrsqrt.pop %v2571
          %v2672 = vrsqrt.pop %v2572
          %v2673 = vrsqrt.pop %v2573
          %v2674 = vrsqrt.pop %v2574
          %v2675 = vrsqrt.pop %v2575
          %v2676 = vrsqrt.pop %v2576
          %v2677 = vrsqrt.pop %v2577
          %v2678 = vrsqrt.pop %v2578
          %v2679 = vrsqrt.pop %v2579
          %v2680 = vrsqrt.pop %v2580
          %v2681 = vrsqrt.pop %v2581
          %v2682 = vrsqrt.pop %v2582
          %v2683 = vrsqrt.pop %v2583
          %v2684 = vrsqrt.pop %v2584
          %v2685 = vrsqrt.pop %v2585
          %v2686 = vrsqrt.pop %v2586
          %v2687 = vmul.f32 %v2623, %v2655
          %v2688 = vmul.f32 %v2624, %v2656
          %v2689 = vmul.f32 %v2625, %v2657
          %v2690 = vmul.f32 %v2626, %v2658
          %v2691 = vmul.f32 %v2627, %v2659
          %v2692 = vmul.f32 %v2628, %v2660
          %v2693 = vmul.f32 %v2629, %v2661
          %v2694 = vmul.f32 %v2630, %v2662
          %v2695 = vmul.f32 %v2631, %v2663
          %v2696 = vmul.f32 %v2632, %v2664
          %v2697 = vmul.f32 %v2633, %v2665
          %v2698 = vmul.f32 %v2634, %v2666
          %v2699 = vmul.f32 %v2635, %v2667
          %v2700 = vmul.f32 %v2636, %v2668
          %v2701 = vmul.f32 %v2637, %v2669
          %v2702 = vmul.f32 %v2638, %v2670
          %v2703 = vmul.f32 %v2639, %v2671
          %v2704 = vmul.f32 %v2640, %v2672
          %v2705 = vmul.f32 %v2641, %v2673
          %v2706 = vmul.f32 %v2642, %v2674
          %v2707 = vmul.f32 %v2643, %v2675
          %v2708 = vmul.f32 %v2644, %v2676
          %v2709 = vmul.f32 %v2645, %v2677
          %v2710 = vmul.f32 %v2646, %v2678
          %v2711 = vmul.f32 %v2647, %v2679
          %v2712 = vmul.f32 %v2648, %v2680
          %v2713 = vmul.f32 %v2649, %v2681
          %v2714 = vmul.f32 %v2650, %v2682
          %v2715 = vmul.f32 %v2651, %v2683
          %v2716 = vmul.f32 %v2652, %v2684
          %v2717 = vmul.f32 %v2653, %v2685
          %v2718 = vmul.f32 %v2654, %v2686
          %v2719 = vlaneseq
          %v2720 = vshrl.u32 %v2719, 7
          %v2721 = vsub.s32 5, %v2720
          %v2722 = vrot.slane %v1016, %v2721
          %v2723 = vadd.f32 %v2687, %v2722
          %v2724 = vadd.f32 %v2688, %v2722
          %v2725 = vadd.f32 %v2689, %v2722
          %v2726 = vadd.f32 %v2690, %v2722
          %v2727 = vadd.f32 %v2691, %v2722
          %v2728 = vadd.f32 %v2692, %v2722
          %v2729 = vadd.f32 %v2693, %v2722
          %v2730 = vadd.f32 %v2694, %v2722
          %v2731 = vadd.f32 %v2695, %v2722
          %v2732 = vadd.f32 %v2696, %v2722
          %v2733 = vadd.f32 %v2697, %v2722
          %v2734 = vadd.f32 %v2698, %v2722
          %v2735 = vadd.f32 %v2699, %v2722
          %v2736 = vadd.f32 %v2700, %v2722
          %v2737 = vadd.f32 %v2701, %v2722
          %v2738 = vadd.f32 %v2702, %v2722
          %v2739 = vadd.f32 %v2703, %v2722
          %v2740 = vadd.f32 %v2704, %v2722
          %v2741 = vadd.f32 %v2705, %v2722
          %v2742 = vadd.f32 %v2706, %v2722
          %v2743 = vadd.f32 %v2707, %v2722
          %v2744 = vadd.f32 %v2708, %v2722
          %v2745 = vadd.f32 %v2709, %v2722
          %v2746 = vadd.f32 %v2710, %v2722
          %v2747 = vadd.f32 %v2711, %v2722
          %v2748 = vadd.f32 %v2712, %v2722
          %v2749 = vadd.f32 %v2713, %v2722
          %v2750 = vadd.f32 %v2714, %v2722
          %v2751 = vadd.f32 %v2715, %v2722
          %v2752 = vadd.f32 %v2716, %v2722
          %v2753 = vadd.f32 %v2717, %v2722
          %v2754 = vadd.f32 %v2718, %v2722
          %v2755 = vpack.c.bf16 %v1895, %v1894
          %v2756 = vpack.c.bf16 %v2724, %v2723
          %v2757 = vpack.c.bf16 %v1897, %v1896
          %v2758 = vpack.c.bf16 %v2726, %v2725
          %v2759 = vpack.c.bf16 %v1899, %v1898
          %v2760 = vpack.c.bf16 %v2728, %v2727
          %v2761 = vpack.c.bf16 %v1901, %v1900
          %v2762 = vpack.c.bf16 %v2730, %v2729
          %v2763 = vpack.c.bf16 %v1903, %v1902
          %v2764 = vpack.c.bf16 %v2732, %v2731
          %v2765 = vpack.c.bf16 %v1905, %v1904
          %v2766 = vpack.c.bf16 %v2734, %v2733
          %v2767 = vpack.c.bf16 %v1907, %v1906
          %v2768 = vpack.c.bf16 %v2736, %v2735
          %v2769 = vpack.c.bf16 %v1909, %v1908
          %v2770 = vpack.c.bf16 %v2738, %v2737
          %v2771 = vpack.c.bf16 %v1911, %v1910
          %v2772 = vpack.c.bf16 %v2740, %v2739
          %v2773 = vpack.c.bf16 %v1913, %v1912
          %v2774 = vpack.c.bf16 %v2742, %v2741
          %v2775 = vpack.c.bf16 %v1915, %v1914
          %v2776 = vpack.c.bf16 %v2744, %v2743
          %v2777 = vpack.c.bf16 %v1917, %v1916
          %v2778 = vpack.c.bf16 %v2746, %v2745
          %v2779 = vpack.c.bf16 %v1919, %v1918
          %v2780 = vpack.c.bf16 %v2748, %v2747
          %v2781 = vpack.c.bf16 %v1921, %v1920
          %v2782 = vpack.c.bf16 %v2750, %v2749
          %v2783 = vpack.c.bf16 %v1923, %v1922
          %v2784 = vpack.c.bf16 %v2752, %v2751
          %v2785 = vpack.c.bf16 %v1925, %v1924
          %v2786 = vpack.c.bf16 %v2754, %v2753
          %v2819 = vunpack.c.l.b16 %v2755
          %v2820 = vunpack.c.l.b16 %v2756
          %v2821 = vunpack.c.h.b16 %v2755
          %v2822 = vunpack.c.h.b16 %v2756
          %v2823 = vunpack.c.l.b16 %v2757
          %v2824 = vunpack.c.l.b16 %v2758
          %v2825 = vunpack.c.h.b16 %v2757
          %v2826 = vunpack.c.h.b16 %v2758
          %v2827 = vunpack.c.l.b16 %v2759
          %v2828 = vunpack.c.l.b16 %v2760
          %v2829 = vunpack.c.h.b16 %v2759
          %v2830 = vunpack.c.h.b16 %v2760
          %v2831 = vunpack.c.l.b16 %v2761
          %v2832 = vunpack.c.l.b16 %v2762
          %v2833 = vunpack.c.h.b16 %v2761
          %v2834 = vunpack.c.h.b16 %v2762
          %v2835 = vunpack.c.l.b16 %v2763
          %v2836 = vunpack.c.l.b16 %v2764
          %v2837 = vunpack.c.h.b16 %v2763
          %v2838 = vunpack.c.h.b16 %v2764
          %v2839 = vunpack.c.l.b16 %v2765
          %v2840 = vunpack.c.l.b16 %v2766
          %v2841 = vunpack.c.h.b16 %v2765
          %v2842 = vunpack.c.h.b16 %v2766
          %v2843 = vunpack.c.l.b16 %v2767
          %v2844 = vunpack.c.l.b16 %v2768
          %v2845 = vunpack.c.h.b16 %v2767
          %v2846 = vunpack.c.h.b16 %v2768
          %v2847 = vunpack.c.l.b16 %v2769
          %v2848 = vunpack.c.l.b16 %v2770
          %v2849 = vunpack.c.h.b16 %v2769
          %v2850 = vunpack.c.h.b16 %v2770
          %v2851 = vunpack.c.l.b16 %v2771
          %v2852 = vunpack.c.l.b16 %v2772
          %v2853 = vunpack.c.h.b16 %v2771
          %v2854 = vunpack.c.h.b16 %v2772
          %v2855 = vunpack.c.l.b16 %v2773
          %v2856 = vunpack.c.l.b16 %v2774
          %v2857 = vunpack.c.h.b16 %v2773
          %v2858 = vunpack.c.h.b16 %v2774
          %v2859 = vunpack.c.l.b16 %v2775
          %v2860 = vunpack.c.l.b16 %v2776
          %v2861 = vunpack.c.h.b16 %v2775
          %v2862 = vunpack.c.h.b16 %v2776
          %v2863 = vunpack.c.l.b16 %v2777
          %v2864 = vunpack.c.l.b16 %v2778
          %v2865 = vunpack.c.h.b16 %v2777
          %v2866 = vunpack.c.h.b16 %v2778
          %v2867 = vunpack.c.l.b16 %v2779
          %v2868 = vunpack.c.l.b16 %v2780
          %v2869 = vunpack.c.h.b16 %v2779
          %v2870 = vunpack.c.h.b16 %v2780
          %v2871 = vunpack.c.l.b16 %v2781
          %v2872 = vunpack.c.l.b16 %v2782
          %v2873 = vunpack.c.h.b16 %v2781
          %v2874 = vunpack.c.h.b16 %v2782
          %v2875 = vunpack.c.l.b16 %v2783
          %v2876 = vunpack.c.l.b16 %v2784
          %v2877 = vunpack.c.h.b16 %v2783
          %v2878 = vunpack.c.h.b16 %v2784
          %v2879 = vunpack.c.l.b16 %v2785
          %v2880 = vunpack.c.l.b16 %v2786
          %v2881 = vunpack.c.h.b16 %v2785
          %v2882 = vunpack.c.h.b16 %v2786
          %v2883 = vpack.c.b16 %v2820, %v2819
          %v2884 = vpack.c.b16 %v2822, %v2821
          %v2885 = vpack.c.b16 %v2824, %v2823
          %v2886 = vpack.c.b16 %v2826, %v2825
          %v2887 = vpack.c.b16 %v2828, %v2827
          %v2888 = vpack.c.b16 %v2830, %v2829
          %v2889 = vpack.c.b16 %v2832, %v2831
          %v2890 = vpack.c.b16 %v2834, %v2833
          %v2891 = vpack.c.b16 %v2836, %v2835
          %v2892 = vpack.c.b16 %v2838, %v2837
          %v2893 = vpack.c.b16 %v2840, %v2839
          %v2894 = vpack.c.b16 %v2842, %v2841
          %v2895 = vpack.c.b16 %v2844, %v2843
          %v2896 = vpack.c.b16 %v2846, %v2845
          %v2897 = vpack.c.b16 %v2848, %v2847
          %v2898 = vpack.c.b16 %v2850, %v2849
          %v2899 = vpack.c.b16 %v2852, %v2851
          %v2900 = vpack.c.b16 %v2854, %v2853
          %v2901 = vpack.c.b16 %v2856, %v2855
          %v2902 = vpack.c.b16 %v2858, %v2857
          %v2903 = vpack.c.b16 %v2860, %v2859
          %v2904 = vpack.c.b16 %v2862, %v2861
          %v2905 = vpack.c.b16 %v2864, %v2863
          %v2906 = vpack.c.b16 %v2866, %v2865
          %v2907 = vpack.c.b16 %v2868, %v2867
          %v2908 = vpack.c.b16 %v2870, %v2869
          %v2909 = vpack.c.b16 %v2872, %v2871
          %v2910 = vpack.c.b16 %v2874, %v2873
          %v2911 = vpack.c.b16 %v2876, %v2875
          %v2912 = vpack.c.b16 %v2878, %v2877
          %v2913 = vpack.c.b16 %v2880, %v2879
          %v2914 = vpack.c.b16 %v2882, %v2881
          %2947 = vst [vmem:[%s392] sm:$0xff] %v2883
          %2948 = vst [vmem:[%s392 + $0x8] sm:$0xff] %v2884
          %2949 = vst [vmem:[%s392 + $0x10] sm:$0xff] %v2885
          %2950 = vst [vmem:[%s392 + $0x18] sm:$0xff] %v2886
          %2951 = vst [vmem:[%s392 + $0x20] sm:$0xff] %v2887
          %2952 = vst [vmem:[%s392 + $0x28] sm:$0xff] %v2888
          %2953 = vst [vmem:[%s392 + $0x30] sm:$0xff] %v2889
          %2954 = vst [vmem:[%s392 + $0x38] sm:$0xff] %v2890
          %2955 = vst [vmem:[%s392 + $0x40] sm:$0xff] %v2891
          %2956 = vst [vmem:[%s392 + $0x48] sm:$0xff] %v2892
          %2957 = vst [vmem:[%s392 + $0x50] sm:$0xff] %v2893
          %2958 = vst [vmem:[%s392 + $0x58] sm:$0xff] %v2894
          %2959 = vst [vmem:[%s392 + $0x60] sm:$0xff] %v2895
          %2960 = vst [vmem:[%s392 + $0x68] sm:$0xff] %v2896
          %2961 = vst [vmem:[%s392 + $0x70] sm:$0xff] %v2897
          %2962 = vst [vmem:[%s392 + $0x78] sm:$0xff] %v2898
          %2963 = vst [vmem:[%s392 + $0x80] sm:$0xff] %v2899
          %2964 = vst [vmem:[%s392 + $0x88] sm:$0xff] %v2900
          %2965 = vst [vmem:[%s392 + $0x90] sm:$0xff] %v2901
          %2966 = vst [vmem:[%s392 + $0x98] sm:$0xff] %v2902
          %2967 = vst [vmem:[%s392 + $0xa0] sm:$0xff] %v2903
          %2968 = vst [vmem:[%s392 + $0xa8] sm:$0xff] %v2904
          %2969 = vst [vmem:[%s392 + $0xb0] sm:$0xff] %v2905
          %2970 = vst [vmem:[%s392 + $0xb8] sm:$0xff] %v2906
          %2971 = vst [vmem:[%s392 + $0xc0] sm:$0xff] %v2907
          %2972 = vst [vmem:[%s392 + $0xc8] sm:$0xff] %v2908
          %2973 = vst [vmem:[%s392 + $0xd0] sm:$0xff] %v2909
          %2974 = vst [vmem:[%s392 + $0xd8] sm:$0xff] %v2910
          %2975 = vst [vmem:[%s392 + $0xe0] sm:$0xff] %v2911
          %2976 = vst [vmem:[%s392 + $0xe8] sm:$0xff] %v2912
          %2977 = vst [vmem:[%s392 + $0xf0] sm:$0xff] %v2913
          %2978 = vst [vmem:[%s392 + $0xf8] sm:$0xff] %v2914
        $region72: #{tpu_custom_call.1} parent=43 // pred_fallthru
          _
        %s2979 = sand.u32 %s190, 1
        %s2980 = scalar_lea.sflag [#allocation5], %s2979
        %s2981 = sand.u32 %s190, 1
        %s2982 = smul.addr %s2981, 256
        %s2983 = scalar_lea.vmem [#allocation12], %s2982
        // Predicated region
        $region73: #{tpu_custom_call.1} parent=43 // pred_check
          %p2984 = pneg %p200
        $region74: #{tpu_custom_call.1} parent=43 // pred_check_branch
          %2986 = sbr.rel (%p2984) target = $region76
        $region75: #{tpu_custom_call.1} parent=43 // pred_region
          %s2987 = smul.u32 32, %s31
          %s2989 = ssub.s32 4096, 4096
          %2990 = vsyncadd %s2980, %s2989
          %s2991 = smul.addr %s2987, 2
          %s2992 = smul.addr %s2991, 64
          %s2993 = scalar_lea.hbm %s6, %s2992
          %s2994 = sshll.u32 %s2983, 4
          %s2995 = int_to_ptr.vmem [resolvable:$true] %s2994
          %3000 = dma.vmem_to_hbm [thread:$0]  %s2995, 4096, %s2993, %s2980, 128, 128, 8
        $region76: #{tpu_custom_call.1} parent=43 // pred_fallthru
          _
      $region44: #{tpu_custom_call.1} parent=5 // pred_fallthru
        _
      %p3001 = scmp.le.s32.totalorder 2, %s22
      // Predicated region
      $region77: #{tpu_custom_call.1} parent=5 // pred_check
        %p3002 = pneg %p3001
      $region78: #{tpu_custom_call.1} parent=5 // pred_check_branch
        %3004 = sbr.rel (%p3002) target = $region80
      $region79: #{tpu_custom_call.1} parent=5 // pred_region
        %s3005 = ssub.s32 %s22, 2
        // Predicated region
        $region81: #{tpu_custom_call.1} parent=79 // pred_check
          %p3006 = pneg %p206
        $region82: #{tpu_custom_call.1} parent=79 // pred_check_branch
          %3008 = sbr.rel (%p3006) target = $region84
        $region83: #{tpu_custom_call.1} parent=79 // pred_region
          %s3009 = sand.u32 %s191, 1
          %s3010 = scalar_lea.sflag [#allocation5], %s3009
          %s3011 = sand.u32 %s191, 1
          %s3012 = smul.addr %s3011, 256
          %s3013 = scalar_lea.vmem [#allocation12], %s3012
          %3014 = dma.done %s3010, 4096
        $region84: #{tpu_custom_call.1} parent=79 // pred_fallthru
          _
      $region80: #{tpu_custom_call.1} parent=5 // pred_fallthru
        _
    $region6: #{tpu_custom_call.1} parent=1 // loop_footer
      %s26 = sadd.s32 1, %s22
    $region7: #{tpu_custom_call.1} parent=1 // loop_footer_branch
      %21 = sbr.rel target = $region3
    $region8: #{tpu_custom_call.1} parent=1 // loop_exit
      _
    %3015 = vsyncpa [#allocation4], 1
    %s3016 = scalar_lea.sflag [#allocation4], 1
    %3017 = vsyncpa %s3016, 1
    %3018 = vsyncpa [#allocation7], 1
    %s3019 = scalar_lea.sflag [#allocation7], 1
    %3020 = vsyncpa %s3019, 1
    %3021 = vsyncpa [#allocation10], 1
    %3022 = vsyncpa [#allocation5], 1
    %s3023 = scalar_lea.sflag [#allocation5], 1
    %3024 = vsyncpa %s3023, 1

</llo_original>
